<compile_context>
chip_gen: v6e
topology: v6e:2x2x1
jax: 0.10.0
libtpu: 0.0.40
codegen_flags: <defaults>
</compile_context>

<pallas_src>
import functools

import jax
import jax.numpy as jnp
from jax.experimental import pallas as pl
from jax.experimental.pallas import tpu as pltpu

STEM_C = 40          # EfficientNet-B3 stem width
STEM_C_PAD = 128     # lane-dense padded stem width
FEAT = 1536          # B3 feature width (classifier in_features)
HID = 512            # head hidden width
MAX_TM = 4096        # spatial tile cap


def _round_up(x, m):
    return (x + m - 1) // m * m


def _bf16_activation_ok():
    # bf16 VPU/EUP exist on v6e / v7x; v5e (and older) keep the f32 path.
    try:
        kind = jax.devices()[0].device_kind.lower()
    except Exception:
        return False
    return ("v6" in kind) or ("v7" in kind)


# ---------------------------------------------------------------------------
# Fused kernel: stem conv (im2col matmul) + folded-BN bias + SiLU + global
# average pool + projection + classifier head.
# grid = (B, num_m);  the m axis tiles the H'*W' spatial rows of one image.
# ---------------------------------------------------------------------------
def _fused_kernel(p_ref, ws_ref, bias_ref, wp_ref, bp_ref,
                  w1_ref, b1_ref, w2_ref, b2_ref,
                  o_ref, acc_ref, *, hw, tm, need_mask, bf16_act):
    m = pl.program_id(1)
    num_m = pl.num_programs(1)

    @pl.when(m == 0)
    def _init():
        acc_ref[...] = jnp.zeros_like(acc_ref)

    # Stem conv tile: (TM, K) bf16 @ (K, 128) bf16 -> f32.  The BN scale is
    # folded into w_stem at pack time; only the bias add remains here.
    y = jnp.dot(p_ref[0], ws_ref[...], preferred_element_type=jnp.float32)
    y = y + bias_ref[...]

    # SiLU: bf16 on v6e/v7x (bf16 VPU/EUP halves the per-step vector work),
    # f32 on v5e (no bf16 VPU/EUP -> casts would only add cost).
    if bf16_act:
        yb = y.astype(jnp.bfloat16)
        act = yb * jax.nn.sigmoid(yb)
    else:
        act = y * jax.nn.sigmoid(y)

    def _accumulate(vals):
        # Fused global average pooling: running sum stays f32 in VMEM scratch.
        acc_ref[...] += jnp.sum(vals.astype(jnp.float32), axis=0, keepdims=True)

    if need_mask:
        # Zero-padded spatial rows would contribute SiLU(bias); only the last
        # tile can contain them, so pay the mask only there.
        @pl.when(m == num_m - 1)
        def _acc_last():
            row = m * tm + jax.lax.broadcasted_iota(jnp.int32, (tm, 1), 0)
            _accumulate(jnp.where(row < hw, act, 0))

        @pl.when(m != num_m - 1)
        def _acc_mid():
            _accumulate(act)
    else:
        _accumulate(act)

    @pl.when(m == num_m - 1)
    def _head():
        pooled = acc_ref[...] * (1.0 / float(hw))                     # (1, 128) f32
        # Projection to 1536 features + SiLU.
        h = jnp.dot(pooled.astype(jnp.bfloat16), wp_ref[...],
                    preferred_element_type=jnp.float32) + bp_ref[...]
        h = h * jax.nn.sigmoid(h)
        # Dropout(p=0.7) is identity at inference.  Linear(1536, 512) + ReLU.
        h1 = jnp.dot(h.astype(jnp.bfloat16), w1_ref[...],
                     preferred_element_type=jnp.float32) + b1_ref[...]
        h1 = jnp.maximum(h1, 0.0)
        # Dropout(p=0.4) identity.  Linear(512, 1): w2 is packed as a (512, 128)
        # matrix with the real weights in column 0, so the result is a
        # lane-dense (1, 128) row with the logit in lane 0 -- single unmasked
        # store, no broadcast, no N=1 MXU pass.
        out_row = jnp.dot(h1.astype(jnp.bfloat16), w2_ref[...],
                          preferred_element_type=jnp.float32) + b2_ref[...]
        o_ref[...] = out_row.reshape(o_ref.shape)


def fused_stem_gap_head(patches, w_stem, bn_bias, wp, bp, w1, b1, w2, b2,
                        *, hw, tm):
    B, hw_pad, K = patches.shape
    C = w_stem.shape[1]        # 128
    F = wp.shape[1]            # 1536
    H = w1.shape[1]            # 512
    num_m = hw_pad // tm
    need_mask = hw_pad != hw

    # Weights never change across grid steps -> single-buffer them.
    const = dict(pipeline_mode=pl.Buffered(1))

    kernel = functools.partial(_fused_kernel, hw=hw, tm=tm,
                               need_mask=need_mask,
                               bf16_act=_bf16_activation_ok())
    out = pl.pallas_call(
        kernel,
        out_shape=jax.ShapeDtypeStruct((B, 1, 128), jnp.float32),
        grid_spec=pltpu.PrefetchScalarGridSpec(
            num_scalar_prefetch=0,
            grid=(B, num_m),
            in_specs=[
                pl.BlockSpec((1, tm, K), lambda b, m: (b, m, 0)),      # patches tile
                pl.BlockSpec((K, C), lambda b, m: (0, 0), **const),    # w_stem (BN folded)
                pl.BlockSpec((1, C), lambda b, m: (0, 0), **const),    # bn bias
                pl.BlockSpec((C, F), lambda b, m: (0, 0), **const),    # w_proj
                pl.BlockSpec((1, F), lambda b, m: (0, 0), **const),    # b_proj
                pl.BlockSpec((F, H), lambda b, m: (0, 0), **const),    # w1
                pl.BlockSpec((1, H), lambda b, m: (0, 0), **const),    # b1
                pl.BlockSpec((H, 128), lambda b, m: (0, 0), **const),  # w2 (col 0)
                pl.BlockSpec((1, 128), lambda b, m: (0, 0), **const),  # b2 (lane 0)
            ],
            out_specs=pl.BlockSpec((1, 1, 128), lambda b, m: (b, 0, 0)),
            scratch_shapes=[pltpu.VMEM((1, C), jnp.float32)],          # GAP accumulator
        ),
        compiler_params=pltpu.CompilerParams(
            dimension_semantics=("parallel", "arbitrary"),
        ),
    )(patches, w_stem, bn_bias, wp, bp, w1, b1, w2, b2)
    return out[:, 0, :1]                                               # (B, 1)


# ---------------------------------------------------------------------------
# im2col for the 3x3 / stride-2 / pad-1 stem conv (plain JAX, bf16, layout only).
# Output rows ordered (H', W'); K ordered c_in*9 + ky*3 + kx (matches OIHW).
# ---------------------------------------------------------------------------
def im2col_3x3_s2(x_nchw):
    B, C, Hin, Win = x_nchw.shape
    Hout = (Hin - 1) // 2 + 1          # matches PyTorch for odd and even sizes
    Wout = (Win - 1) // 2 + 1
    xp = jnp.pad(x_nchw, ((0, 0), (0, 0), (1, 1), (1, 1)))
    cols = []
    for ky in range(3):
        for kx in range(3):
            cols.append(jax.lax.slice(
                xp,
                (0, 0, ky, kx),
                (B, C, ky + 2 * (Hout - 1) + 1, kx + 2 * (Wout - 1) + 1),
                (1, 1, 2, 2)))                              # (B, C, Hout, Wout)
    p = jnp.stack(cols, axis=2)                             # (B, C, 9, Hout, Wout)
    p = jnp.transpose(p, (0, 3, 4, 1, 2))                   # (B, Hout, Wout, C, 9)
    return p.reshape(B, Hout * Wout, C * 9), (Hout, Wout)


# ---------------------------------------------------------------------------
# Full forward pass
# ---------------------------------------------------------------------------
def deepfake_detector_forward(x_nchw, kparams):
    # TODO(synk): construct the (tm, 27) patch rows inside the kernel from the
    #             raw NCHW input (strided pl.ds loads) to remove this XLA-side
    #             im2col; kept JAX-side but in bf16 with a single fused pad.
    x16 = x_nchw.astype(jnp.bfloat16)            # halve all im2col HBM traffic
    patches, _ = im2col_3x3_s2(x16)              # (B, HW, C_in*9) bf16
    B, HW, K = patches.shape

    tm = MAX_TM if HW >= MAX_TM else _round_up(HW, 8)   # large spatial tile
    hw_pad = _round_up(HW, tm)
    k_pad = _round_up(K, 8)                              # 27 -> 32 (keep K small)
    patches = jnp.pad(patches, ((0, 0), (0, hw_pad - HW), (0, k_pad - K)))

    return fused_stem_gap_head(
        patches,
        kparams["w_stem"], kparams["bn_bias"],
        kparams["w_proj"], kparams["b_proj"],
        kparams["w1"], kparams["b1"], kparams["w2"], kparams["b2"],
        hw=HW, tm=tm)


# ---------------------------------------------------------------------------
# Parameters (random surrogate weights) + kernel-layout packing
# ---------------------------------------------------------------------------
def init_params(key, c_in=3):
    ks = jax.random.split(key, 8)
    k = c_in * 9
    return {
        "w_stem": jax.random.normal(ks[0], (k, STEM_C), jnp.float32) * 0.1,
        "bn_scale": jnp.ones((1, STEM_C), jnp.float32),
        "bn_bias": jnp.zeros((1, STEM_C), jnp.float32),
        "w_proj": jax.random.normal(ks[1], (STEM_C, FEAT), jnp.float32) * (1.0 / STEM_C ** 0.5),
        "b_proj": jax.random.normal(ks[2], (1, FEAT), jnp.float32) * 0.01,
        "w1": jax.random.normal(ks[3], (FEAT, HID), jnp.float32) * (1.0 / FEAT ** 0.5),
        "b1": jax.random.normal(ks[4], (1, HID), jnp.float32) * 0.01,
        "w2": jax.random.normal(ks[5], (1, HID), jnp.float32) * (1.0 / HID ** 0.5),
        "b2": jax.random.normal(ks[6], (1, 1), jnp.float32) * 0.01,
    }


def pack_params(p):
    """Fold BN scale, zero-pad to lane-dense layout, cast matmul weights to bf16."""
    k = p["w_stem"].shape[0]
    k_pad = _round_up(k, 8)
    # Fold the BN scale into the stem weight columns (bias-only add in-kernel).
    w_stem = p["w_stem"] * p["bn_scale"]
    # Pack Linear(512,1) as a (512,128) matrix (weights in column 0) and the
    # bias as a (1,128) row (bias in lane 0) so the head emits a lane-dense row.
    w2_mat = jnp.zeros((HID, 128), jnp.float32).at[:, 0].set(p["w2"][0])
    b2_vec = jnp.zeros((1, 128), jnp.float32).at[0, 0].set(p["b2"][0, 0])
    return {
        "w_stem": jnp.pad(w_stem,
                          ((0, k_pad - k), (0, STEM_C_PAD - STEM_C))).astype(jnp.bfloat16),
        "bn_bias": jnp.pad(p["bn_bias"], ((0, 0), (0, STEM_C_PAD - STEM_C))),
        "w_proj": jnp.pad(p["w_proj"],
                          ((0, STEM_C_PAD - STEM_C), (0, 0))).astype(jnp.bfloat16),
        "b_proj": p["b_proj"],
        "w1": p["w1"].astype(jnp.bfloat16),
        "b1": p["b1"],
        "w2": w2_mat.astype(jnp.bfloat16),
        "b2": b2_vec,
    }


if __name__ == "__main__":
    key = jax.random.PRNGKey(0)
    kx, kp = jax.random.split(key)
    # small NCHW RGB batch consistent with the conv backbone input
    x = jax.random.normal(kx, (2, 3, 32, 32), jnp.float32)
    params = init_params(kp)
    kparams = pack_params(params)

    fwd = jax.jit(deepfake_detector_forward)
    out = fwd(x, kparams)
    out = jax.block_until_ready(out)
    assert out.shape == (2, 1) and out.dtype == jnp.float32
    print("KERNEL_OK")
</pallas_src>

<mosaic_0001>
module attributes {stable_mosaic.version = 11 : i64} {
  func.func @_fused_kernel(%arg0: i32, %arg1: i32, %arg2: memref<1x256x32xbf16, #tpu.memory_space<vmem>>, %arg3: memref<32x128xbf16, #tpu.memory_space<vmem>>, %arg4: memref<1x128xf32, #tpu.memory_space<vmem>>, %arg5: memref<128x1536xbf16, #tpu.memory_space<vmem>>, %arg6: memref<1x1536xf32, #tpu.memory_space<vmem>>, %arg7: memref<1536x512xbf16, #tpu.memory_space<vmem>>, %arg8: memref<1x512xf32, #tpu.memory_space<vmem>>, %arg9: memref<512x128xbf16, #tpu.memory_space<vmem>>, %arg10: memref<1x128xf32, #tpu.memory_space<vmem>>, %arg11: memref<1x1x128xf32, #tpu.memory_space<vmem>>, %arg12: memref<1x128xf32, #tpu.memory_space<vmem>>) attributes {dimension_semantics = [#tpu.dimension_semantics<parallel>, #tpu.dimension_semantics<arbitrary>], iteration_bounds = array<i64: 2, 1>, scalar_prefetch = 0 : i64, scratch_operands = 1 : i64, tpu.core_type = #tpu.core_type<tc>, window_params = [{transform_indices = @transform_0, window_bounds = array<i64: 1, 256, 32>}, {pipeline_mode = #tpu.pipeline_mode<synchronous>, transform_indices = @transform_1, window_bounds = array<i64: 32, 128>}, {pipeline_mode = #tpu.pipeline_mode<synchronous>, transform_indices = @transform_2, window_bounds = array<i64: 1, 128>}, {pipeline_mode = #tpu.pipeline_mode<synchronous>, transform_indices = @transform_3, window_bounds = array<i64: 128, 1536>}, {pipeline_mode = #tpu.pipeline_mode<synchronous>, transform_indices = @transform_4, window_bounds = array<i64: 1, 1536>}, {pipeline_mode = #tpu.pipeline_mode<synchronous>, transform_indices = @transform_5, window_bounds = array<i64: 1536, 512>}, {pipeline_mode = #tpu.pipeline_mode<synchronous>, transform_indices = @transform_6, window_bounds = array<i64: 1, 512>}, {pipeline_mode = #tpu.pipeline_mode<synchronous>, transform_indices = @transform_7, window_bounds = array<i64: 512, 128>}, {pipeline_mode = #tpu.pipeline_mode<synchronous>, transform_indices = @transform_8, window_bounds = array<i64: 1, 128>}, {transform_indices = @transform_9, window_bounds = array<i64: 1, 1, 128>}]} {
    %c0_i32 = arith.constant 0 : i32
    %0 = arith.cmpi eq, %arg1, %c0_i32 : i32
    %1 = arith.extui %0 : i1 to i32
    %c0_i32_0 = arith.constant 0 : i32
    %2 = arith.cmpi ne, %1, %c0_i32_0 : i32
    scf.if %2 {
      %cst_15 = arith.constant 0.000000e+00 : f32
      %24 = vector.broadcast %cst_15 : f32 to vector<1x128xf32>
      %c0_16 = arith.constant 0 : index
      %c0_17 = arith.constant 0 : index
      %25 = vector.load %arg12[%c0_16, %c0_17] : memref<1x128xf32, #tpu.memory_space<vmem>>, vector<1x128xf32>
      tpu.vector_store %arg12[%c0_16, %c0_17], %24 {strides = array<i32>} : memref<1x128xf32, #tpu.memory_space<vmem>>, vector<1x128xf32>,
    } else {
    }
    %c0 = arith.constant 0 : index
    %c0_1 = arith.constant 0 : index
    %c0_2 = arith.constant 0 : index
    %3 = vector.load %arg2[%c0, %c0_1, %c0_2] : memref<1x256x32xbf16, #tpu.memory_space<vmem>>, vector<1x256x32xbf16>
    %4 = vector.shape_cast %3 : vector<1x256x32xbf16> to vector<256x32xbf16>
    %c0_3 = arith.constant 0 : index
    %c0_4 = arith.constant 0 : index
    %5 = vector.load %arg3[%c0_3, %c0_4] : memref<32x128xbf16, #tpu.memory_space<vmem>>, vector<32x128xbf16>
    %cst = arith.constant dense<0.000000e+00> : vector<256x128xf32>
    %6 = tpu.matmul %4, %5, %cst {dimension_numbers = #tpu.dot_dimension_numbers<[1], [0], [0], [1], [0, 0, 1, 1], [], []>} : vector<256x32xbf16>, vector<32x128xbf16>, vector<256x128xf32> -> vector<256x128xf32>
    %c0_5 = arith.constant 0 : index
    %c0_6 = arith.constant 0 : index
    %7 = vector.load %arg4[%c0_5, %c0_6] : memref<1x128xf32, #tpu.memory_space<vmem>>, vector<1x128xf32>
    %8 = vector.broadcast %7 : vector<1x128xf32> to vector<256x128xf32>
    %9 = arith.addf %6, %8 : vector<256x128xf32>
    %10 = arith.negf %9 : vector<256x128xf32>
    %11 = math.exp %10 : vector<256x128xf32>
    %cst_7 = arith.constant 1.000000e+00 : f32
    %12 = vector.broadcast %cst_7 : f32 to vector<256x128xf32>
    %13 = arith.addf %12, %11 : vector<256x128xf32>
    %14 = arith.divf %12, %13 : vector<256x128xf32>
    %15 = arith.mulf %9, %14 : vector<256x128xf32>
    %c0_8 = arith.constant 0 : index
    %c0_9 = arith.constant 0 : index
    %16 = vector.load %arg12[%c0_8, %c0_9] : memref<1x128xf32, #tpu.memory_space<vmem>>, vector<1x128xf32>
    %cst_10 = arith.constant dense<0.000000e+00> : vector<128xf32>
    %17 = vector.multi_reduction <add>, %15, %cst_10 [0] : vector<256x128xf32> to vector<128xf32>
    %18 = vector.shape_cast %17 : vector<128xf32> to vector<1x128xf32>
    %19 = arith.addf %16, %18 : vector<1x128xf32>
    %c0_11 = arith.constant 0 : index
    %c0_12 = arith.constant 0 : index
    %20 = vector.load %arg12[%c0_11, %c0_12] : memref<1x128xf32, #tpu.memory_space<vmem>>, vector<1x128xf32>
    tpu.vector_store %arg12[%c0_11, %c0_12], %19 {strides = array<i32>} : memref<1x128xf32, #tpu.memory_space<vmem>>, vector<1x128xf32>,
    %c0_i32_13 = arith.constant 0 : i32
    %21 = arith.cmpi eq, %arg1, %c0_i32_13 : i32
    %22 = arith.extui %21 : i1 to i32
    %c0_i32_14 = arith.constant 0 : i32
    %23 = arith.cmpi ne, %22, %c0_i32_14 : i32
    scf.if %23 {
      %c0_15 = arith.constant 0 : index
      %c0_16 = arith.constant 0 : index
      %24 = vector.load %arg12[%c0_15, %c0_16] : memref<1x128xf32, #tpu.memory_space<vmem>>, vector<1x128xf32>
      %cst_17 = arith.constant 3.906250e-03 : f32
      %25 = vector.broadcast %cst_17 : f32 to vector<1x128xf32>
      %26 = arith.mulf %24, %25 : vector<1x128xf32>
      %27 = arith.truncf %26 : vector<1x128xf32> to vector<1x128xbf16>
      %c0_18 = arith.constant 0 : index
      %c0_19 = arith.constant 0 : index
      %28 = vector.load %arg5[%c0_18, %c0_19] : memref<128x1536xbf16, #tpu.memory_space<vmem>>, vector<128x1536xbf16>
      %cst_20 = arith.constant dense<0.000000e+00> : vector<1x1536xf32>
      %29 = tpu.matmul %27, %28, %cst_20 {dimension_numbers = #tpu.dot_dimension_numbers<[1], [0], [0], [1], [0, 0, 1, 1], [], []>} : vector<1x128xbf16>, vector<128x1536xbf16>, vector<1x1536xf32> -> vector<1x1536xf32>
      %c0_21 = arith.constant 0 : index
      %c0_22 = arith.constant 0 : index
      %30 = vector.load %arg6[%c0_21, %c0_22] : memref<1x1536xf32, #tpu.memory_space<vmem>>, vector<1x1536xf32>
      %31 = arith.addf %29, %30 : vector<1x1536xf32>
      %32 = arith.negf %31 : vector<1x1536xf32>
      %33 = math.exp %32 : vector<1x1536xf32>
      %cst_23 = arith.constant 1.000000e+00 : f32
      %34 = vector.broadcast %cst_23 : f32 to vector<1x1536xf32>
      %35 = arith.addf %34, %33 : vector<1x1536xf32>
      %36 = arith.divf %34, %35 : vector<1x1536xf32>
      %37 = arith.mulf %31, %36 : vector<1x1536xf32>
      %38 = arith.truncf %37 : vector<1x1536xf32> to vector<1x1536xbf16>
      %c0_24 = arith.constant 0 : index
      %c0_25 = arith.constant 0 : index
      %39 = vector.load %arg7[%c0_24, %c0_25] : memref<1536x512xbf16, #tpu.memory_space<vmem>>, vector<1536x512xbf16>
      %cst_26 = arith.constant dense<0.000000e+00> : vector<1x512xf32>
      %40 = tpu.matmul %38, %39, %cst_26 {dimension_numbers = #tpu.dot_dimension_numbers<[1], [0], [0], [1], [0, 0, 1, 1], [], []>} : vector<1x1536xbf16>, vector<1536x512xbf16>, vector<1x512xf32> -> vector<1x512xf32>
      %c0_27 = arith.constant 0 : index
      %c0_28 = arith.constant 0 : index
      %41 = vector.load %arg8[%c0_27, %c0_28] : memref<1x512xf32, #tpu.memory_space<vmem>>, vector<1x512xf32>
      %42 = arith.addf %40, %41 : vector<1x512xf32>
      %cst_29 = arith.constant 0.000000e+00 : f32
      %43 = vector.broadcast %cst_29 : f32 to vector<1x512xf32>
      %44 = arith.maximumf %42, %43 : vector<1x512xf32>
      %45 = arith.truncf %44 : vector<1x512xf32> to vector<1x512xbf16>
      %c0_30 = arith.constant 0 : index
      %c0_31 = arith.constant 0 : index
      %46 = vector.load %arg9[%c0_30, %c0_31] : memref<512x128xbf16, #tpu.memory_space<vmem>>, vector<512x128xbf16>
      %cst_32 = arith.constant dense<0.000000e+00> : vector<1x128xf32>
      %47 = tpu.matmul %45, %46, %cst_32 {dimension_numbers = #tpu.dot_dimension_numbers<[1], [0], [0], [1], [0, 0, 1, 1], [], []>} : vector<1x512xbf16>, vector<512x128xbf16>, vector<1x128xf32> -> vector<1x128xf32>
      %c0_33 = arith.constant 0 : index
      %c0_34 = arith.constant 0 : index
      %48 = vector.load %arg10[%c0_33, %c0_34] : memref<1x128xf32, #tpu.memory_space<vmem>>, vector<1x128xf32>
      %49 = arith.addf %47, %48 : vector<1x128xf32>
      %50 = vector.shape_cast %49 : vector<1x128xf32> to vector<1x1x128xf32>
      %c0_35 = arith.constant 0 : index
      %c0_36 = arith.constant 0 : index
      %c0_37 = arith.constant 0 : index
      %51 = vector.load %arg11[%c0_35, %c0_36, %c0_37] : memref<1x1x128xf32, #tpu.memory_space<vmem>>, vector<1x1x128xf32>
      tpu.vector_store %arg11[%c0_35, %c0_36, %c0_37], %50 {strides = array<i32>} : memref<1x1x128xf32, #tpu.memory_space<vmem>>, vector<1x1x128xf32>,
    } else {
    }
    return
  }
  func.func @transform_0(%arg0: i32, %arg1: i32) -> (i32, i32, i32) {
    %c0_i32 = arith.constant 0 : i32
    %c0_i32_0 = arith.constant 0 : i32
    return %arg0, %arg1, %c0_i32 : i32, i32, i32
  }
  func.func @transform_1(%arg0: i32, %arg1: i32) -> (i32, i32) {
    %c0_i32 = arith.constant 0 : i32
    %c0_i32_0 = arith.constant 0 : i32
    %c0_i32_1 = arith.constant 0 : i32
    return %c0_i32, %c0_i32_0 : i32, i32
  }
  func.func @transform_2(%arg0: i32, %arg1: i32) -> (i32, i32) {
    %c0_i32 = arith.constant 0 : i32
    %c0_i32_0 = arith.constant 0 : i32
    %c0_i32_1 = arith.constant 0 : i32
    return %c0_i32, %c0_i32_0 : i32, i32
  }
  func.func @transform_3(%arg0: i32, %arg1: i32) -> (i32, i32) {
    %c0_i32 = arith.constant 0 : i32
    %c0_i32_0 = arith.constant 0 : i32
    %c0_i32_1 = arith.constant 0 : i32
    return %c0_i32, %c0_i32_0 : i32, i32
  }
  func.func @transform_4(%arg0: i32, %arg1: i32) -> (i32, i32) {
    %c0_i32 = arith.constant 0 : i32
    %c0_i32_0 = arith.constant 0 : i32
    %c0_i32_1 = arith.constant 0 : i32
    return %c0_i32, %c0_i32_0 : i32, i32
  }
  func.func @transform_5(%arg0: i32, %arg1: i32) -> (i32, i32) {
    %c0_i32 = arith.constant 0 : i32
    %c0_i32_0 = arith.constant 0 : i32
    %c0_i32_1 = arith.constant 0 : i32
    return %c0_i32, %c0_i32_0 : i32, i32
  }
  func.func @transform_6(%arg0: i32, %arg1: i32) -> (i32, i32) {
    %c0_i32 = arith.constant 0 : i32
    %c0_i32_0 = arith.constant 0 : i32
    %c0_i32_1 = arith.constant 0 : i32
    return %c0_i32, %c0_i32_0 : i32, i32
  }
  func.func @transform_7(%arg0: i32, %arg1: i32) -> (i32, i32) {
    %c0_i32 = arith.constant 0 : i32
    %c0_i32_0 = arith.constant 0 : i32
    %c0_i32_1 = arith.constant 0 : i32
    return %c0_i32, %c0_i32_0 : i32, i32
  }
  func.func @transform_8(%arg0: i32, %arg1: i32) -> (i32, i32) {
    %c0_i32 = arith.constant 0 : i32
    %c0_i32_0 = arith.constant 0 : i32
    %c0_i32_1 = arith.constant 0 : i32
    return %c0_i32, %c0_i32_0 : i32, i32
  }
  func.func @transform_9(%arg0: i32, %arg1: i32) -> (i32, i32, i32) {
    %c0_i32 = arith.constant 0 : i32
    %c0_i32_0 = arith.constant 0 : i32
    %c0_i32_1 = arith.constant 0 : i32
    return %arg0, %c0_i32, %c0_i32_0 : i32, i32, i32
  }
}

</mosaic_0001>

<llo_original>
// kernel: deepfake_detector_forward.1
$region0: #{deepfake_detector_forward.1}
  #allocation0 [shape = 'u32[]', space=smem, size = 0x4, offset = 0x4, fixed_abs, tag = 'smem constant byte address 0x4 - core index']
  #allocation1 [shape = 'u32[144,128]{1,0:T(1,128)}', space=vmem, size = 0x12000, scoped, tag = 'internal scratch']
  #allocation2 [shape = 'f32[1,128]{1,0:T(1,128)}', space=vmem, size = 0x200, scoped, tag = 'scratch operand']
  %s0 = inlined_call_operand.vmem [shape: bf16[2,256,32], index: 0, kind: input, shape index: {}]
  %s1 = inlined_call_operand.vmem [shape: bf16[32,128], index: 1, kind: input, shape index: {}]
  %s2 = inlined_call_operand.vmem [shape: f32[1,128], index: 2, kind: input, shape index: {}]
  %s3 = inlined_call_operand.vmem [shape: bf16[128,1536], index: 3, kind: input, shape index: {}]
  %s4 = inlined_call_operand.vmem [shape: f32[1,1536], index: 4, kind: input, shape index: {}]
  %s5 = inlined_call_operand.vmem [shape: bf16[1536,512], index: 5, kind: input, shape index: {}]
  %s6 = inlined_call_operand.vmem [shape: f32[1,512], index: 6, kind: input, shape index: {}]
  %s7 = inlined_call_operand.vmem [shape: bf16[512,128], index: 7, kind: input, shape index: {}]
  %s8 = inlined_call_operand.vmem [shape: f32[1,128], index: 8, kind: input, shape index: {}]
  %s9 = inlined_call_operand.vmem [shape: f32[2,1,128], index: 9, kind: output, shape index: {}]
  %s10 = sld [smem:[#allocation0]]
  $region77: #{deepfake_detector_forward.1} parent=0
    _
  %s12 = ssub.s32 1, %s10
  %s13 = scalar_select 0, %s12, %s10
  loop: start=0, step=1, limit=4
  $region2: #{deepfake_detector_forward.1} parent=0 // loop_pre_header
    _
  $region3: #{deepfake_detector_forward.1} parent=0 // loop_header
    %s15 = sphi 0, %s19
    %p16 = scmp.ge.s32.totalorder %s15, 4
    %s22 = sphi 0, %s34
    %s23 = sphi 0, %s30
    %s24 = sphi 0, %s22
    %s25 = sphi 0, %s23
    %s26 = sphi 0, %s24
    %s27 = sphi 0, %s25
    %s39 = sphi 0, %s41
    %s42 = sphi 0, %s39
    %s43 = sphi 0, %s42
    %s59 = sphi 0, %s43
    %s63 = sphi 0, %s63
    %s65 = sphi 0, %s63
    %s66 = sphi 0, %s65
    %s80 = sphi 0, %s66
    %s84 = sphi 0, %s84
    %s86 = sphi 0, %s84
    %s87 = sphi 0, %s86
    %s101 = sphi 0, %s87
    %s105 = sphi 0, %s105
    %s107 = sphi 0, %s105
    %s108 = sphi 0, %s107
    %s122 = sphi 0, %s108
    %s126 = sphi 0, %s126
    %s128 = sphi 0, %s126
    %s129 = sphi 0, %s128
    %s143 = sphi 0, %s129
    %s147 = sphi 0, %s147
    %s149 = sphi 0, %s147
    %s150 = sphi 0, %s149
    %s164 = sphi 0, %s150
    %s168 = sphi 0, %s168
    %s170 = sphi 0, %s168
    %s171 = sphi 0, %s170
    %s185 = sphi 0, %s171
    %s189 = sphi 0, %s189
    %s191 = sphi 0, %s189
    %s192 = sphi 0, %s191
    %s206 = sphi 0, %s192
    %s210 = sphi 0, %s210
    %s212 = sphi 0, %s210
    %s213 = sphi 0, %s212
    %s227 = sphi 0, %s213
    %s233 = sphi 0, %s235
    %s236 = sphi 0, %s233
    %s237 = sphi 0, %s236
    %s253 = sphi 0, %s237
  $region4: #{deepfake_detector_forward.1} parent=0 // loop_header_branch
    %18 = sbr.rel (%p16) target = $region8
  $region5: #{deepfake_detector_forward.1} parent=0 // loop_body
    %s20 = ssub.s32 %s15, 1
    %s21 = ssub.s32 %s15, 2
    %s28 = sadd.s32 1, %s23
    %p29 = scmp.ge.s32.totalorder %s28, 1
    %s30 = scalar_select %p29, 0, %s28
    %s31 = sadd.s32 1, %s22
    %s32 = scalar_select %p29, %s31, %s22
    %p33 = scmp.ge.s32.totalorder %s32, 2
    %s34 = scalar_select %p33, 0, %s32
    %s35 = ssub.s32 %s22, %s34
    %s36 = ssub.s32 %s23, %s30
    %s37 = sor.u32 %s35, %s36
    %p38 = scmp.eq.s32.totalorder %s37, 0
    %s40 = sadd.s32 %s39, 1
    %s41 = scalar_select %p38, %s39, %s40
    %p44 = pneg %p38
    %p45 = scmp.eq.s32.totalorder %s15, 1
    %p46 = por %p44, %p45
    %p47 = scmp.ne.s32.totalorder %s39, %s42
    %p48 = scmp.eq.s32.totalorder %s15, 0
    %p49 = por %p47, %p48
    %p50 = scmp.ne.s32.totalorder %s39, %s42
    %p51 = scmp.eq.s32.totalorder %s20, 1
    %p52 = por %p50, %p51
    %p53 = scmp.ne.s32.totalorder %s42, %s43
    %p54 = scmp.eq.s32.totalorder %s20, 0
    %p55 = por %p53, %p54
    %p56 = scmp.ne.s32.totalorder %s42, %s43
    %p57 = scmp.eq.s32.totalorder %s21, 1
    %p58 = por %p56, %p57
    %p60 = scmp.ne.s32.totalorder %s43, %s59
    %p61 = scmp.eq.s32.totalorder %s21, 0
    %p62 = por %p60, %p61
    %s64 = sadd.s32 %s63, 1
    %p67 = scmp.eq.s32.totalorder %s15, 1
    %p68 = scmp.ne.s32.totalorder %s63, %s65
    %p69 = scmp.eq.s32.totalorder %s15, 0
    %p70 = por %p68, %p69
    %p71 = scmp.ne.s32.totalorder %s63, %s65
    %p72 = scmp.eq.s32.totalorder %s20, 1
    %p73 = por %p71, %p72
    %p74 = scmp.ne.s32.totalorder %s65, %s66
    %p75 = scmp.eq.s32.totalorder %s20, 0
    %p76 = por %p74, %p75
    %p77 = scmp.ne.s32.totalorder %s65, %s66
    %p78 = scmp.eq.s32.totalorder %s21, 1
    %p79 = por %p77, %p78
    %p81 = scmp.ne.s32.totalorder %s66, %s80
    %p82 = scmp.eq.s32.totalorder %s21, 0
    %p83 = por %p81, %p82
    %s85 = sadd.s32 %s84, 1
    %p88 = scmp.eq.s32.totalorder %s15, 1
    %p89 = scmp.ne.s32.totalorder %s84, %s86
    %p90 = scmp.eq.s32.totalorder %s15, 0
    %p91 = por %p89, %p90
    %p92 = scmp.ne.s32.totalorder %s84, %s86
    %p93 = scmp.eq.s32.totalorder %s20, 1
    %p94 = por %p92, %p93
    %p95 = scmp.ne.s32.totalorder %s86, %s87
    %p96 = scmp.eq.s32.totalorder %s20, 0
    %p97 = por %p95, %p96
    %p98 = scmp.ne.s32.totalorder %s86, %s87
    %p99 = scmp.eq.s32.totalorder %s21, 1
    %p100 = por %p98, %p99
    %p102 = scmp.ne.s32.totalorder %s87, %s101
    %p103 = scmp.eq.s32.totalorder %s21, 0
    %p104 = por %p102, %p103
    %s106 = sadd.s32 %s105, 1
    %p109 = scmp.eq.s32.totalorder %s15, 1
    %p110 = scmp.ne.s32.totalorder %s105, %s107
    %p111 = scmp.eq.s32.totalorder %s15, 0
    %p112 = por %p110, %p111
    %p113 = scmp.ne.s32.totalorder %s105, %s107
    %p114 = scmp.eq.s32.totalorder %s20, 1
    %p115 = por %p113, %p114
    %p116 = scmp.ne.s32.totalorder %s107, %s108
    %p117 = scmp.eq.s32.totalorder %s20, 0
    %p118 = por %p116, %p117
    %p119 = scmp.ne.s32.totalorder %s107, %s108
    %p120 = scmp.eq.s32.totalorder %s21, 1
    %p121 = por %p119, %p120
    %p123 = scmp.ne.s32.totalorder %s108, %s122
    %p124 = scmp.eq.s32.totalorder %s21, 0
    %p125 = por %p123, %p124
    %s127 = sadd.s32 %s126, 1
    %p130 = scmp.eq.s32.totalorder %s15, 1
    %p131 = scmp.ne.s32.totalorder %s126, %s128
    %p132 = scmp.eq.s32.totalorder %s15, 0
    %p133 = por %p131, %p132
    %p134 = scmp.ne.s32.totalorder %s126, %s128
    %p135 = scmp.eq.s32.totalorder %s20, 1
    %p136 = por %p134, %p135
    %p137 = scmp.ne.s32.totalorder %s128, %s129
    %p138 = scmp.eq.s32.totalorder %s20, 0
    %p139 = por %p137, %p138
    %p140 = scmp.ne.s32.totalorder %s128, %s129
    %p141 = scmp.eq.s32.totalorder %s21, 1
    %p142 = por %p140, %p141
    %p144 = scmp.ne.s32.totalorder %s129, %s143
    %p145 = scmp.eq.s32.totalorder %s21, 0
    %p146 = por %p144, %p145
    %s148 = sadd.s32 %s147, 1
    %p151 = scmp.eq.s32.totalorder %s15, 1
    %p152 = scmp.ne.s32.totalorder %s147, %s149
    %p153 = scmp.eq.s32.totalorder %s15, 0
    %p154 = por %p152, %p153
    %p155 = scmp.ne.s32.totalorder %s147, %s149
    %p156 = scmp.eq.s32.totalorder %s20, 1
    %p157 = por %p155, %p156
    %p158 = scmp.ne.s32.totalorder %s149, %s150
    %p159 = scmp.eq.s32.totalorder %s20, 0
    %p160 = por %p158, %p159
    %p161 = scmp.ne.s32.totalorder %s149, %s150
    %p162 = scmp.eq.s32.totalorder %s21, 1
    %p163 = por %p161, %p162
    %p165 = scmp.ne.s32.totalorder %s150, %s164
    %p166 = scmp.eq.s32.totalorder %s21, 0
    %p167 = por %p165, %p166
    %s169 = sadd.s32 %s168, 1
    %p172 = scmp.eq.s32.totalorder %s15, 1
    %p173 = scmp.ne.s32.totalorder %s168, %s170
    %p174 = scmp.eq.s32.totalorder %s15, 0
    %p175 = por %p173, %p174
    %p176 = scmp.ne.s32.totalorder %s168, %s170
    %p177 = scmp.eq.s32.totalorder %s20, 1
    %p178 = por %p176, %p177
    %p179 = scmp.ne.s32.totalorder %s170, %s171
    %p180 = scmp.eq.s32.totalorder %s20, 0
    %p181 = por %p179, %p180
    %p182 = scmp.ne.s32.totalorder %s170, %s171
    %p183 = scmp.eq.s32.totalorder %s21, 1
    %p184 = por %p182, %p183
    %p186 = scmp.ne.s32.totalorder %s171, %s185
    %p187 = scmp.eq.s32.totalorder %s21, 0
    %p188 = por %p186, %p187
    %s190 = sadd.s32 %s189, 1
    %p193 = scmp.eq.s32.totalorder %s15, 1
    %p194 = scmp.ne.s32.totalorder %s189, %s191
    %p195 = scmp.eq.s32.totalorder %s15, 0
    %p196 = por %p194, %p195
    %p197 = scmp.ne.s32.totalorder %s189, %s191
    %p198 = scmp.eq.s32.totalorder %s20, 1
    %p199 = por %p197, %p198
    %p200 = scmp.ne.s32.totalorder %s191, %s192
    %p201 = scmp.eq.s32.totalorder %s20, 0
    %p202 = por %p200, %p201
    %p203 = scmp.ne.s32.totalorder %s191, %s192
    %p204 = scmp.eq.s32.totalorder %s21, 1
    %p205 = por %p203, %p204
    %p207 = scmp.ne.s32.totalorder %s192, %s206
    %p208 = scmp.eq.s32.totalorder %s21, 0
    %p209 = por %p207, %p208
    %s211 = sadd.s32 %s210, 1
    %p214 = scmp.eq.s32.totalorder %s15, 1
    %p215 = scmp.ne.s32.totalorder %s210, %s212
    %p216 = scmp.eq.s32.totalorder %s15, 0
    %p217 = por %p215, %p216
    %p218 = scmp.ne.s32.totalorder %s210, %s212
    %p219 = scmp.eq.s32.totalorder %s20, 1
    %p220 = por %p218, %p219
    %p221 = scmp.ne.s32.totalorder %s212, %s213
    %p222 = scmp.eq.s32.totalorder %s20, 0
    %p223 = por %p221, %p222
    %p224 = scmp.ne.s32.totalorder %s212, %s213
    %p225 = scmp.eq.s32.totalorder %s21, 1
    %p226 = por %p224, %p225
    %p228 = scmp.ne.s32.totalorder %s213, %s227
    %p229 = scmp.eq.s32.totalorder %s21, 0
    %p230 = por %p228, %p229
    %s231 = ssub.s32 %s22, %s34
    %p232 = scmp.eq.s32.totalorder %s231, 0
    %s234 = sadd.s32 %s233, 1
    %s235 = scalar_select %p232, %s233, %s234
    %p238 = pneg %p232
    %p239 = scmp.eq.s32.totalorder %s15, 1
    %p240 = por %p238, %p239
    %p241 = scmp.ne.s32.totalorder %s233, %s236
    %p242 = scmp.eq.s32.totalorder %s15, 0
    %p243 = por %p241, %p242
    %p244 = scmp.ne.s32.totalorder %s233, %s236
    %p245 = scmp.eq.s32.totalorder %s20, 1
    %p246 = por %p244, %p245
    %p247 = scmp.ne.s32.totalorder %s236, %s237
    %p248 = scmp.eq.s32.totalorder %s20, 0
    %p249 = por %p247, %p248
    %p250 = scmp.ne.s32.totalorder %s236, %s237
    %p251 = scmp.eq.s32.totalorder %s21, 1
    %p252 = por %p250, %p251
    %p254 = scmp.ne.s32.totalorder %s237, %s253
    %p255 = scmp.eq.s32.totalorder %s21, 0
    %p256 = por %p254, %p255
    %p257 = scmp.le.s32.totalorder 1, %s15
    %p258 = scmp.lt.s32.totalorder %s15, 3
    %p259 = pnand %p257, %p258
    %p260 = pneg %p259
    // Predicated region
    $region9: #{deepfake_detector_forward.1} parent=5 // pred_check
      _
    $region10: #{deepfake_detector_forward.1} parent=5 // pred_check_branch
      %262 = sbr.rel (%p259) target = $region12
    $region11: #{deepfake_detector_forward.1} parent=5 // pred_region
      %s263 = ssub.s32 %s15, 1
      // Predicated region
      $region13: #{deepfake_detector_forward.1} parent=11 // pred_check
        %p264 = pneg %p76
      $region14: #{deepfake_detector_forward.1} parent=11 // pred_check_branch
        %266 = sbr.rel (%p264) target = $region16
      $region15: #{deepfake_detector_forward.1} parent=11 // pred_region
        _
      $region16: #{deepfake_detector_forward.1} parent=11 // pred_fallthru
        _
      // Predicated region
      $region17: #{deepfake_detector_forward.1} parent=11 // pred_check
        %p267 = pneg %p97
      $region18: #{deepfake_detector_forward.1} parent=11 // pred_check_branch
        %269 = sbr.rel (%p267) target = $region20
      $region19: #{deepfake_detector_forward.1} parent=11 // pred_region
        _
      $region20: #{deepfake_detector_forward.1} parent=11 // pred_fallthru
        _
      // Predicated region
      $region21: #{deepfake_detector_forward.1} parent=11 // pred_check
        %p270 = pneg %p118
      $region22: #{deepfake_detector_forward.1} parent=11 // pred_check_branch
        %272 = sbr.rel (%p270) target = $region24
      $region23: #{deepfake_detector_forward.1} parent=11 // pred_region
        _
      $region24: #{deepfake_detector_forward.1} parent=11 // pred_fallthru
        _
      // Predicated region
      $region25: #{deepfake_detector_forward.1} parent=11 // pred_check
        %p273 = pneg %p139
      $region26: #{deepfake_detector_forward.1} parent=11 // pred_check_branch
        %275 = sbr.rel (%p273) target = $region28
      $region27: #{deepfake_detector_forward.1} parent=11 // pred_region
        _
      $region28: #{deepfake_detector_forward.1} parent=11 // pred_fallthru
        _
      // Predicated region
      $region29: #{deepfake_detector_forward.1} parent=11 // pred_check
        %p276 = pneg %p160
      $region30: #{deepfake_detector_forward.1} parent=11 // pred_check_branch
        %278 = sbr.rel (%p276) target = $region32
      $region31: #{deepfake_detector_forward.1} parent=11 // pred_region
        _
      $region32: #{deepfake_detector_forward.1} parent=11 // pred_fallthru
        _
      // Predicated region
      $region33: #{deepfake_detector_forward.1} parent=11 // pred_check
        %p279 = pneg %p181
      $region34: #{deepfake_detector_forward.1} parent=11 // pred_check_branch
        %281 = sbr.rel (%p279) target = $region36
      $region35: #{deepfake_detector_forward.1} parent=11 // pred_region
        _
      $region36: #{deepfake_detector_forward.1} parent=11 // pred_fallthru
        _
      // Predicated region
      $region37: #{deepfake_detector_forward.1} parent=11 // pred_check
        %p282 = pneg %p202
      $region38: #{deepfake_detector_forward.1} parent=11 // pred_check_branch
        %284 = sbr.rel (%p282) target = $region40
      $region39: #{deepfake_detector_forward.1} parent=11 // pred_region
        _
      $region40: #{deepfake_detector_forward.1} parent=11 // pred_fallthru
        _
      // Predicated region
      $region41: #{deepfake_detector_forward.1} parent=11 // pred_check
        %p285 = pneg %p223
      $region42: #{deepfake_detector_forward.1} parent=11 // pred_check_branch
        %287 = sbr.rel (%p285) target = $region44
      $region43: #{deepfake_detector_forward.1} parent=11 // pred_region
        _
      $region44: #{deepfake_detector_forward.1} parent=11 // pred_fallthru
        _
    $region12: #{deepfake_detector_forward.1} parent=5 // pred_fallthru
      _
    %p288 = scmp.lt.s32.totalorder %s15, 2
    // Predicated region
    $region45: #{deepfake_detector_forward.1} parent=5 // pred_check
      %p289 = pneg %p288
    $region46: #{deepfake_detector_forward.1} parent=5 // pred_check_branch
      %291 = sbr.rel (%p289) target = $region48
    $region47: #{deepfake_detector_forward.1} parent=5 // pred_region
      // Predicated region
      $region49: #{deepfake_detector_forward.1} parent=47 // pred_check
        %p292 = pneg %p49
      $region50: #{deepfake_detector_forward.1} parent=47 // pred_check_branch
        %294 = sbr.rel (%p292) target = $region52
      $region51: #{deepfake_detector_forward.1} parent=47 // pred_region
        %s295 = smul.u32 32, %s23
        %p296 = scmp.lt.s32.totalorder %s22, 1
        %s297 = scalar_select %p296, %s22, 1
        %p298 = scmp.lt.s32.totalorder %s295, 31
        %s299 = scalar_select %p298, %s295, 31
        %s300 = smul.addr %s297, 32
        %s301 = sadd.s32 %s299, %s300
        %s302 = smul.addr %s301, 4
        %s303 = scalar_lea.vmem %s0, %s302
        %s304 = smul.u32 32, %s23
      $region52: #{deepfake_detector_forward.1} parent=47 // pred_fallthru
        _
    $region48: #{deepfake_detector_forward.1} parent=5 // pred_fallthru
      _
    %p305 = scmp.le.s32.totalorder 1, %s15
    %p306 = scmp.lt.s32.totalorder %s15, 3
    %p307 = pnand %p305, %p306
    %p308 = pneg %p307
    // Predicated region
    $region53: #{deepfake_detector_forward.1} parent=5 // pred_check
      _
    $region54: #{deepfake_detector_forward.1} parent=5 // pred_check_branch
      %310 = sbr.rel (%p307) target = $region56
    $region55: #{deepfake_detector_forward.1} parent=5 // pred_region
      %s311 = ssub.s32 %s15, 1
      %s312 = smul.u32 32, %s25
      %p313 = scmp.lt.s32.totalorder %s24, 1
      %s314 = scalar_select %p313, %s24, 1
      %p315 = scmp.lt.s32.totalorder %s312, 31
      %s316 = scalar_select %p315, %s312, 31
      %s317 = smul.addr %s314, 32
      %s318 = sadd.s32 %s316, %s317
      %s319 = smul.addr %s318, 4
      %s320 = scalar_lea.vmem %s0, %s319
      %p321 = pneg %p55
      %p322 = pneg %p52
      %p323 = pneg %p76
      %p324 = pneg %p73
      %p325 = pneg %p97
      %p326 = pneg %p94
      %p327 = pneg %p118
      %p328 = pneg %p115
      %p329 = pneg %p139
      %p330 = pneg %p136
      %p331 = pneg %p160
      %p332 = pneg %p157
      %p333 = pneg %p181
      %p334 = pneg %p178
      %p335 = pneg %p202
      %p336 = pneg %p199
      %p337 = pneg %p223
      %p338 = pneg %p220
      %p339 = pneg %p249
      %p340 = pneg %p246
      %p341 = scmp.lt.s32.totalorder %s24, 1
      %s342 = scalar_select %p341, %s24, 1
      %s343 = scalar_lea.vmem %s9, %s342
      %s344 = smul.u32 32, %s25
      %p345 = scmp.lt.s32.totalorder %s24, 1
      %s346 = scalar_select %p345, %s24, 1
      %p347 = scmp.lt.s32.totalorder %s344, 31
      %s348 = scalar_select %p347, %s344, 31
      %s349 = smul.addr %s346, 32
      %s350 = sadd.s32 %s348, %s349
      %s351 = smul.addr %s350, 4
      %s352 = scalar_lea.vmem %s0, %s351
      %s353 = smul.u32 32, %s25
      %p354 = scmp.lt.s32.totalorder %s24, 1
      %s355 = scalar_select %p354, %s24, 1
      %s356 = scalar_lea.vmem %s9, %s355
      %p358 = scmp.eq.s32.totalorder %s25, 0
      // Predicated region
      $region57: #{deepfake_detector_forward.1} parent=55 // pred_check
        %p359 = pneg %p358
      $region58: #{deepfake_detector_forward.1} parent=55 // pred_check_branch
        %361 = sbr.rel (%p359) target = $region60
      $region59: #{deepfake_detector_forward.1} parent=55 // pred_region
        %362 = vst [vmem:[#allocation2] sm:$0x1] 0.0
      $region60: #{deepfake_detector_forward.1} parent=55 // pred_fallthru
        _
      %v363 = vld [vmem:[%s352] sm:$0xf]
      %v364 = vld [vmem:[%s352 + $0x4] sm:$0xf]
      %v365 = vld [vmem:[%s352 + $0x8] sm:$0xf]
      %v366 = vld [vmem:[%s352 + $0xc] sm:$0xf]
      %v367 = vld [vmem:[%s352 + $0x10] sm:$0xf]
      %v368 = vld [vmem:[%s352 + $0x14] sm:$0xf]
      %v369 = vld [vmem:[%s352 + $0x18] sm:$0xf]
      %v370 = vld [vmem:[%s352 + $0x1c] sm:$0xf]
      %v371 = vld [vmem:[%s352 + $0x20] sm:$0xf]
      %v372 = vld [vmem:[%s352 + $0x24] sm:$0xf]
      %v373 = vld [vmem:[%s352 + $0x28] sm:$0xf]
      %v374 = vld [vmem:[%s352 + $0x2c] sm:$0xf]
      %v375 = vld [vmem:[%s352 + $0x30] sm:$0xf]
      %v376 = vld [vmem:[%s352 + $0x34] sm:$0xf]
      %v377 = vld [vmem:[%s352 + $0x38] sm:$0xf]
      %v378 = vld [vmem:[%s352 + $0x3c] sm:$0xf]
      %v379 = vld [vmem:[%s352 + $0x40] sm:$0xf]
      %v380 = vld [vmem:[%s352 + $0x44] sm:$0xf]
      %v381 = vld [vmem:[%s352 + $0x48] sm:$0xf]
      %v382 = vld [vmem:[%s352 + $0x4c] sm:$0xf]
      %v383 = vld [vmem:[%s352 + $0x50] sm:$0xf]
      %v384 = vld [vmem:[%s352 + $0x54] sm:$0xf]
      %v385 = vld [vmem:[%s352 + $0x58] sm:$0xf]
      %v386 = vld [vmem:[%s352 + $0x5c] sm:$0xf]
      %v387 = vld [vmem:[%s352 + $0x60] sm:$0xf]
      %v388 = vld [vmem:[%s352 + $0x64] sm:$0xf]
      %v389 = vld [vmem:[%s352 + $0x68] sm:$0xf]
      %v390 = vld [vmem:[%s352 + $0x6c] sm:$0xf]
      %v391 = vld [vmem:[%s352 + $0x70] sm:$0xf]
      %v392 = vld [vmem:[%s352 + $0x74] sm:$0xf]
      %v393 = vld [vmem:[%s352 + $0x78] sm:$0xf]
      %v394 = vld [vmem:[%s352 + $0x7c] sm:$0xf]
      %v395 = vld [vmem:[%s1] sm:$0xf]
      %v396 = vld [vmem:[%s1 + $0x4] sm:$0xf]
      %v397 = vld [vmem:[%s1 + $0x8] sm:$0xf]
      %v398 = vld [vmem:[%s1 + $0xc] sm:$0xf]
      %v399 = vld [vmem:[%s2] sm:$0x1]
      %v401 = vlaneseq
      %v402 = vshrl.u32 %v401, 7
      %v403 = vsub.s32 0, %v402
      %v404 = vrot.slane %v399, %v403
      %v438 = vunpack.c.l.b16 %v363
      %v439 = vunpack.c.l.b16 %v364
      %v440 = vunpack.c.l.b16 %v365
      %v441 = vunpack.c.l.b16 %v366
      %v442 = vunpack.c.l.b16 %v367
      %v443 = vunpack.c.l.b16 %v368
      %v444 = vunpack.c.l.b16 %v369
      %v445 = vunpack.c.l.b16 %v370
      %v446 = vunpack.c.l.b16 %v371
      %v447 = vunpack.c.l.b16 %v372
      %v448 = vunpack.c.l.b16 %v373
      %v449 = vunpack.c.l.b16 %v374
      %v450 = vunpack.c.l.b16 %v375
      %v451 = vunpack.c.l.b16 %v376
      %v452 = vunpack.c.l.b16 %v377
      %v453 = vunpack.c.l.b16 %v378
      %v454 = vunpack.c.l.b16 %v379
      %v455 = vunpack.c.l.b16 %v380
      %v456 = vunpack.c.l.b16 %v381
      %v457 = vunpack.c.l.b16 %v382
      %v458 = vunpack.c.l.b16 %v383
      %v459 = vunpack.c.l.b16 %v384
      %v460 = vunpack.c.l.b16 %v385
      %v461 = vunpack.c.l.b16 %v386
      %v462 = vunpack.c.l.b16 %v387
      %v463 = vunpack.c.l.b16 %v388
      %v464 = vunpack.c.l.b16 %v389
      %v465 = vunpack.c.l.b16 %v390
      %v466 = vunpack.c.l.b16 %v391
      %v467 = vunpack.c.l.b16 %v392
      %v468 = vunpack.c.l.b16 %v393
      %v469 = vunpack.c.l.b16 %v394
      %v470 = vpack.c.b16 %v439, %v438
      %v471 = vpack.c.b16 %v441, %v440
      %v472 = vpack.c.b16 %v443, %v442
      %v473 = vpack.c.b16 %v445, %v444
      %v474 = vpack.c.b16 %v447, %v446
      %v475 = vpack.c.b16 %v449, %v448
      %v476 = vpack.c.b16 %v451, %v450
      %v477 = vpack.c.b16 %v453, %v452
      %v478 = vpack.c.b16 %v455, %v454
      %v479 = vpack.c.b16 %v457, %v456
      %v480 = vpack.c.b16 %v459, %v458
      %v481 = vpack.c.b16 %v461, %v460
      %v482 = vpack.c.b16 %v463, %v462
      %v483 = vpack.c.b16 %v465, %v464
      %v484 = vpack.c.b16 %v467, %v466
      %v485 = vpack.c.b16 %v469, %v468
      %v490 = vunpack.c.l.b16 %v395
      %v491 = vunpack.c.l.b16 %v396
      %v492 = vunpack.c.l.b16 %v397
      %v493 = vunpack.c.l.b16 %v398
      %v494 = vpack.c.b16 %v491, %v490
      %v495 = vpack.c.b16 %v493, %v492
      %vm498 = vcmask 261120
      %v500 = vsel %vm498, %v470, 0
      %v503 = vsel %vm498, %v471, 0
      %v506 = vsel %vm498, %v472, 0
      %v509 = vsel %vm498, %v473, 0
      %v512 = vsel %vm498, %v474, 0
      %v515 = vsel %vm498, %v475, 0
      %v518 = vsel %vm498, %v476, 0
      %v521 = vsel %vm498, %v477, 0
      %v524 = vsel %vm498, %v478, 0
      %v527 = vsel %vm498, %v479, 0
      %v530 = vsel %vm498, %v480, 0
      %v533 = vsel %vm498, %v481, 0
      %v536 = vsel %vm498, %v482, 0
      %v539 = vsel %vm498, %v483, 0
      %v542 = vsel %vm498, %v484, 0
      %v545 = vsel %vm498, %v485, 0
      %547 = vmatprep.subr.bf16.mxu0 0
      %548 = vmatpush1.bf16.msra.mxu0 0
      %549 = vmatprep.subr.bf16.mxu0 0
      %550 = vmatpush1.bf16.msra.mxu0 0
      %551 = vmatprep.subr.bf16.mxu0 0
      %552 = vmatpush1.bf16.msra.mxu0 0
      %553 = vmatprep.subr.bf16.mxu0 0
      %554 = vmatpush1.bf16.msra.mxu0 0
      %555 = vmatprep.subr.bf16.mxu0 0
      %556 = vmatpush1.bf16.msra.mxu0 0
      %557 = vmatprep.subr.bf16.mxu0 0
      %558 = vmatpush1.bf16.msra.mxu0 0
      %559 = vmatprep.subr.bf16.mxu0 0
      %560 = vmatpush1.bf16.msra.mxu0 %v495
      %561 = vmatprep.subr.bf16.mxu0 0
      %562 = vmatpush1.bf16.msra.mxu0 %v494
      %563 = vmatprep.subr.bf16.mxu0 0
      %564 = vmatpush2.bf16.msra.mxu0 0
      %565 = vmatprep.subr.bf16.mxu0 0
      %566 = vmatpush2.bf16.msra.mxu0 0
      %567 = vmatprep.subr.bf16.mxu0 0
      %568 = vmatpush2.bf16.msra.mxu0 0
      %569 = vmatprep.subr.bf16.mxu0 0
      %570 = vmatpush2.bf16.msra.mxu0 0
      %571 = vmatprep.subr.bf16.mxu0 0
      %572 = vmatpush2.bf16.msra.mxu0 0
      %573 = vmatprep.subr.bf16.mxu0 0
      %574 = vmatpush2.bf16.msra.mxu0 0
      %575 = vmatprep.subr.bf16.mxu0 0
      %576 = vmatpush2.bf16.msra.mxu0 0
      %577 = vmatprep.subr.bf16.mxu0 0
      %578 = vmatpush2.bf16.msra.mxu0 0
      %579 = vmatprep.mubr.bf16.mxu0 0
      %580 = vmatmul.mubr.bf16.gmra.mxu0 %v500
      %v581 = vpop.f32.mrf.mxu0
      %v582 = vadd.f32 %v404, %v581
      %v583 = vpop.f32.mrf.mxu0
      %v584 = vpop.f32.mrf.mxu0
      %v585 = vadd.f32 %v404, %v584
      %v586 = vpop.f32.mrf.mxu0
      %587 = vmatprep.mubr.bf16.mxu0 0
      %588 = vmatmul.mubr.bf16.gmra.mxu0 %v503
      %v589 = vpop.f32.mrf.mxu0
      %v590 = vadd.f32 %v404, %v589
      %v591 = vpop.f32.mrf.mxu0
      %v592 = vpop.f32.mrf.mxu0
      %v593 = vadd.f32 %v404, %v592
      %v594 = vpop.f32.mrf.mxu0
      %595 = vmatprep.mubr.bf16.mxu0 0
      %596 = vmatmul.mubr.bf16.gmra.mxu0 %v506
      %v597 = vpop.f32.mrf.mxu0
      %v598 = vadd.f32 %v404, %v597
      %v599 = vpop.f32.mrf.mxu0
      %v600 = vpop.f32.mrf.mxu0
      %v601 = vadd.f32 %v404, %v600
      %v602 = vpop.f32.mrf.mxu0
      %603 = vmatprep.mubr.bf16.mxu0 0
      %604 = vmatmul.mubr.bf16.gmra.mxu0 %v509
      %v605 = vpop.f32.mrf.mxu0
      %v606 = vadd.f32 %v404, %v605
      %v607 = vpop.f32.mrf.mxu0
      %v608 = vpop.f32.mrf.mxu0
      %v609 = vadd.f32 %v404, %v608
      %v610 = vpop.f32.mrf.mxu0
      %611 = vmatprep.mubr.bf16.mxu0 0
      %612 = vmatmul.mubr.bf16.gmra.mxu0 %v512
      %v613 = vpop.f32.mrf.mxu0
      %v614 = vadd.f32 %v404, %v613
      %v615 = vpop.f32.mrf.mxu0
      %v616 = vpop.f32.mrf.mxu0
      %v617 = vadd.f32 %v404, %v616
      %v618 = vpop.f32.mrf.mxu0
      %619 = vmatprep.mubr.bf16.mxu0 0
      %620 = vmatmul.mubr.bf16.gmra.mxu0 %v515
      %v621 = vpop.f32.mrf.mxu0
      %v622 = vadd.f32 %v404, %v621
      %v623 = vpop.f32.mrf.mxu0
      %v624 = vpop.f32.mrf.mxu0
      %v625 = vadd.f32 %v404, %v624
      %v626 = vpop.f32.mrf.mxu0
      %627 = vmatprep.mubr.bf16.mxu0 0
      %628 = vmatmul.mubr.bf16.gmra.mxu0 %v518
      %v629 = vpop.f32.mrf.mxu0
      %v630 = vadd.f32 %v404, %v629
      %v631 = vpop.f32.mrf.mxu0
      %v632 = vpop.f32.mrf.mxu0
      %v633 = vadd.f32 %v404, %v632
      %v634 = vpop.f32.mrf.mxu0
      %635 = vmatprep.mubr.bf16.mxu0 0
      %636 = vmatmul.mubr.bf16.gmra.mxu0 %v521
      %v637 = vpop.f32.mrf.mxu0
      %v638 = vadd.f32 %v404, %v637
      %v639 = vpop.f32.mrf.mxu0
      %v640 = vpop.f32.mrf.mxu0
      %v641 = vadd.f32 %v404, %v640
      %v642 = vpop.f32.mrf.mxu0
      %643 = vmatprep.mubr.bf16.mxu0 0
      %644 = vmatmul.mubr.bf16.gmra.mxu0 %v524
      %v645 = vpop.f32.mrf.mxu0
      %v646 = vadd.f32 %v404, %v645
      %v647 = vpop.f32.mrf.mxu0
      %v648 = vpop.f32.mrf.mxu0
      %v649 = vadd.f32 %v404, %v648
      %v650 = vpop.f32.mrf.mxu0
      %651 = vmatprep.mubr.bf16.mxu0 0
      %652 = vmatmul.mubr.bf16.gmra.mxu0 %v527
      %v653 = vpop.f32.mrf.mxu0
      %v654 = vadd.f32 %v404, %v653
      %v655 = vpop.f32.mrf.mxu0
      %v656 = vpop.f32.mrf.mxu0
      %v657 = vadd.f32 %v404, %v656
      %v658 = vpop.f32.mrf.mxu0
      %659 = vmatprep.mubr.bf16.mxu0 0
      %660 = vmatmul.mubr.bf16.gmra.mxu0 %v530
      %v661 = vpop.f32.mrf.mxu0
      %v662 = vadd.f32 %v404, %v661
      %v663 = vpop.f32.mrf.mxu0
      %v664 = vpop.f32.mrf.mxu0
      %v665 = vadd.f32 %v404, %v664
      %v666 = vpop.f32.mrf.mxu0
      %667 = vmatprep.mubr.bf16.mxu0 0
      %668 = vmatmul.mubr.bf16.gmra.mxu0 %v533
      %v669 = vpop.f32.mrf.mxu0
      %v670 = vadd.f32 %v404, %v669
      %v671 = vpop.f32.mrf.mxu0
      %v672 = vpop.f32.mrf.mxu0
      %v673 = vadd.f32 %v404, %v672
      %v674 = vpop.f32.mrf.mxu0
      %675 = vmatprep.mubr.bf16.mxu0 0
      %676 = vmatmul.mubr.bf16.gmra.mxu0 %v536
      %v677 = vpop.f32.mrf.mxu0
      %v678 = vadd.f32 %v404, %v677
      %v679 = vpop.f32.mrf.mxu0
      %v680 = vpop.f32.mrf.mxu0
      %v681 = vadd.f32 %v404, %v680
      %v682 = vpop.f32.mrf.mxu0
      %683 = vmatprep.mubr.bf16.mxu0 0
      %684 = vmatmul.mubr.bf16.gmra.mxu0 %v539
      %v685 = vpop.f32.mrf.mxu0
      %v686 = vadd.f32 %v404, %v685
      %v687 = vpop.f32.mrf.mxu0
      %v688 = vpop.f32.mrf.mxu0
      %v689 = vadd.f32 %v404, %v688
      %v690 = vpop.f32.mrf.mxu0
      %691 = vmatprep.mubr.bf16.mxu0 0
      %692 = vmatmul.mubr.bf16.gmra.mxu0 %v542
      %v693 = vpop.f32.mrf.mxu0
      %v694 = vadd.f32 %v404, %v693
      %v695 = vpop.f32.mrf.mxu0
      %v696 = vpop.f32.mrf.mxu0
      %v697 = vadd.f32 %v404, %v696
      %v698 = vpop.f32.mrf.mxu0
      %699 = vmatprep.mubr.bf16.mxu0 0
      %700 = vmatmul.mubr.bf16.gmra.mxu0 %v545
      %v701 = vpop.f32.mrf.mxu0
      %v702 = vadd.f32 %v404, %v701
      %v703 = vpop.f32.mrf.mxu0
      %v704 = vpop.f32.mrf.mxu0
      %v705 = vadd.f32 %v404, %v704
      %v706 = vpop.f32.mrf.mxu0
      %707 = vdwg.mxu0
      %v708 = vxor.u32 %v582, 2147483648
      %v709 = vxor.u32 %v585, 2147483648
      %v710 = vxor.u32 %v590, 2147483648
      %v711 = vxor.u32 %v593, 2147483648
      %v712 = vxor.u32 %v598, 2147483648
      %v713 = vxor.u32 %v601, 2147483648
      %v714 = vxor.u32 %v606, 2147483648
      %v715 = vxor.u32 %v609, 2147483648
      %v716 = vxor.u32 %v614, 2147483648
      %v717 = vxor.u32 %v617, 2147483648
      %v718 = vxor.u32 %v622, 2147483648
      %v719 = vxor.u32 %v625, 2147483648
      %v720 = vxor.u32 %v630, 2147483648
      %v721 = vxor.u32 %v633, 2147483648
      %v722 = vxor.u32 %v638, 2147483648
      %v723 = vxor.u32 %v641, 2147483648
      %v724 = vxor.u32 %v646, 2147483648
      %v725 = vxor.u32 %v649, 2147483648
      %v726 = vxor.u32 %v654, 2147483648
      %v727 = vxor.u32 %v657, 2147483648
      %v728 = vxor.u32 %v662, 2147483648
      %v729 = vxor.u32 %v665, 2147483648
      %v730 = vxor.u32 %v670, 2147483648
      %v731 = vxor.u32 %v673, 2147483648
      %v732 = vxor.u32 %v678, 2147483648
      %v733 = vxor.u32 %v681, 2147483648
      %v734 = vxor.u32 %v686, 2147483648
      %v735 = vxor.u32 %v689, 2147483648
      %v736 = vxor.u32 %v694, 2147483648
      %v737 = vxor.u32 %v697, 2147483648
      %v738 = vxor.u32 %v702, 2147483648
      %v739 = vxor.u32 %v705, 2147483648
      %v740 = vmul.f32 %v708, 1.442695
      %v741 = vpow.pop %v740
      %v742 = vmul.f32 %v709, 1.442695
      %v743 = vpow.pop %v742
      %v744 = vmul.f32 %v710, 1.442695
      %v745 = vpow.pop %v744
      %v746 = vmul.f32 %v711, 1.442695
      %v747 = vpow.pop %v746
      %v748 = vmul.f32 %v712, 1.442695
      %v749 = vpow.pop %v748
      %v750 = vmul.f32 %v713, 1.442695
      %v751 = vpow.pop %v750
      %v752 = vmul.f32 %v714, 1.442695
      %v753 = vpow.pop %v752
      %v754 = vmul.f32 %v715, 1.442695
      %v755 = vpow.pop %v754
      %v756 = vmul.f32 %v716, 1.442695
      %v757 = vpow.pop %v756
      %v758 = vmul.f32 %v717, 1.442695
      %v759 = vpow.pop %v758
      %v760 = vmul.f32 %v718, 1.442695
      %v761 = vpow.pop %v760
      %v762 = vmul.f32 %v719, 1.442695
      %v763 = vpow.pop %v762
      %v764 = vmul.f32 %v720, 1.442695
      %v765 = vpow.pop %v764
      %v766 = vmul.f32 %v721, 1.442695
      %v767 = vpow.pop %v766
      %v768 = vmul.f32 %v722, 1.442695
      %v769 = vpow.pop %v768
      %v770 = vmul.f32 %v723, 1.442695
      %v771 = vpow.pop %v770
      %v772 = vmul.f32 %v724, 1.442695
      %v773 = vpow.pop %v772
      %v774 = vmul.f32 %v725, 1.442695
      %v775 = vpow.pop %v774
      %v776 = vmul.f32 %v726, 1.442695
      %v777 = vpow.pop %v776
      %v778 = vmul.f32 %v727, 1.442695
      %v779 = vpow.pop %v778
      %v780 = vmul.f32 %v728, 1.442695
      %v781 = vpow.pop %v780
      %v782 = vmul.f32 %v729, 1.442695
      %v783 = vpow.pop %v782
      %v784 = vmul.f32 %v730, 1.442695
      %v785 = vpow.pop %v784
      %v786 = vmul.f32 %v731, 1.442695
      %v787 = vpow.pop %v786
      %v788 = vmul.f32 %v732, 1.442695
      %v789 = vpow.pop %v788
      %v790 = vmul.f32 %v733, 1.442695
      %v791 = vpow.pop %v790
      %v792 = vmul.f32 %v734, 1.442695
      %v793 = vpow.pop %v792
      %v794 = vmul.f32 %v735, 1.442695
      %v795 = vpow.pop %v794
      %v796 = vmul.f32 %v736, 1.442695
      %v797 = vpow.pop %v796
      %v798 = vmul.f32 %v737, 1.442695
      %v799 = vpow.pop %v798
      %v800 = vmul.f32 %v738, 1.442695
      %v801 = vpow.pop %v800
      %v802 = vmul.f32 %v739, 1.442695
      %v803 = vpow.pop %v802
      %v804 = vadd.f32 %v741, 1.0
      %v805 = vadd.f32 %v743, 1.0
      %v806 = vadd.f32 %v745, 1.0
      %v807 = vadd.f32 %v747, 1.0
      %v808 = vadd.f32 %v749, 1.0
      %v809 = vadd.f32 %v751, 1.0
      %v810 = vadd.f32 %v753, 1.0
      %v811 = vadd.f32 %v755, 1.0
      %v812 = vadd.f32 %v757, 1.0
      %v813 = vadd.f32 %v759, 1.0
      %v814 = vadd.f32 %v761, 1.0
      %v815 = vadd.f32 %v763, 1.0
      %v816 = vadd.f32 %v765, 1.0
      %v817 = vadd.f32 %v767, 1.0
      %v818 = vadd.f32 %v769, 1.0
      %v819 = vadd.f32 %v771, 1.0
      %v820 = vadd.f32 %v773, 1.0
      %v821 = vadd.f32 %v775, 1.0
      %v822 = vadd.f32 %v777, 1.0
      %v823 = vadd.f32 %v779, 1.0
      %v824 = vadd.f32 %v781, 1.0
      %v825 = vadd.f32 %v783, 1.0
      %v826 = vadd.f32 %v785, 1.0
      %v827 = vadd.f32 %v787, 1.0
      %v828 = vadd.f32 %v789, 1.0
      %v829 = vadd.f32 %v791, 1.0
      %v830 = vadd.f32 %v793, 1.0
      %v831 = vadd.f32 %v795, 1.0
      %v832 = vadd.f32 %v797, 1.0
      %v833 = vadd.f32 %v799, 1.0
      %v834 = vadd.f32 %v801, 1.0
      %v835 = vadd.f32 %v803, 1.0
      %v836 = vrcp.pop %v804
      %v837 = vmul.f32 1.0, %v836
      %v838 = vrcp.pop %v805
      %v839 = vmul.f32 1.0, %v838
      %v840 = vrcp.pop %v806
      %v841 = vmul.f32 1.0, %v840
      %v842 = vrcp.pop %v807
      %v843 = vmul.f32 1.0, %v842
      %v844 = vrcp.pop %v808
      %v845 = vmul.f32 1.0, %v844
      %v846 = vrcp.pop %v809
      %v847 = vmul.f32 1.0, %v846
      %v848 = vrcp.pop %v810
      %v849 = vmul.f32 1.0, %v848
      %v850 = vrcp.pop %v811
      %v851 = vmul.f32 1.0, %v850
      %v852 = vrcp.pop %v812
      %v853 = vmul.f32 1.0, %v852
      %v854 = vrcp.pop %v813
      %v855 = vmul.f32 1.0, %v854
      %v856 = vrcp.pop %v814
      %v857 = vmul.f32 1.0, %v856
      %v858 = vrcp.pop %v815
      %v859 = vmul.f32 1.0, %v858
      %v860 = vrcp.pop %v816
      %v861 = vmul.f32 1.0, %v860
      %v862 = vrcp.pop %v817
      %v863 = vmul.f32 1.0, %v862
      %v864 = vrcp.pop %v818
      %v865 = vmul.f32 1.0, %v864
      %v866 = vrcp.pop %v819
      %v867 = vmul.f32 1.0, %v866
      %v868 = vrcp.pop %v820
      %v869 = vmul.f32 1.0, %v868
      %v870 = vrcp.pop %v821
      %v871 = vmul.f32 1.0, %v870
      %v872 = vrcp.pop %v822
      %v873 = vmul.f32 1.0, %v872
      %v874 = vrcp.pop %v823
      %v875 = vmul.f32 1.0, %v874
      %v876 = vrcp.pop %v824
      %v877 = vmul.f32 1.0, %v876
      %v878 = vrcp.pop %v825
      %v879 = vmul.f32 1.0, %v878
      %v880 = vrcp.pop %v826
      %v881 = vmul.f32 1.0, %v880
      %v882 = vrcp.pop %v827
      %v883 = vmul.f32 1.0, %v882
      %v884 = vrcp.pop %v828
      %v885 = vmul.f32 1.0, %v884
      %v886 = vrcp.pop %v829
      %v887 = vmul.f32 1.0, %v886
      %v888 = vrcp.pop %v830
      %v889 = vmul.f32 1.0, %v888
      %v890 = vrcp.pop %v831
      %v891 = vmul.f32 1.0, %v890
      %v892 = vrcp.pop %v832
      %v893 = vmul.f32 1.0, %v892
      %v894 = vrcp.pop %v833
      %v895 = vmul.f32 1.0, %v894
      %v896 = vrcp.pop %v834
      %v897 = vmul.f32 1.0, %v896
      %v898 = vrcp.pop %v835
      %v899 = vmul.f32 1.0, %v898
      %v900 = vmul.f32 %v582, %v837
      %v901 = vmul.f32 %v585, %v839
      %v902 = vmul.f32 %v590, %v841
      %v903 = vmul.f32 %v593, %v843
      %v904 = vmul.f32 %v598, %v845
      %v905 = vmul.f32 %v601, %v847
      %v906 = vmul.f32 %v606, %v849
      %v907 = vmul.f32 %v609, %v851
      %v908 = vmul.f32 %v614, %v853
      %v909 = vmul.f32 %v617, %v855
      %v910 = vmul.f32 %v622, %v857
      %v911 = vmul.f32 %v625, %v859
      %v912 = vmul.f32 %v630, %v861
      %v913 = vmul.f32 %v633, %v863
      %v914 = vmul.f32 %v638, %v865
      %v915 = vmul.f32 %v641, %v867
      %v916 = vmul.f32 %v646, %v869
      %v917 = vmul.f32 %v649, %v871
      %v918 = vmul.f32 %v654, %v873
      %v919 = vmul.f32 %v657, %v875
      %v920 = vmul.f32 %v662, %v877
      %v921 = vmul.f32 %v665, %v879
      %v922 = vmul.f32 %v670, %v881
      %v923 = vmul.f32 %v673, %v883
      %v924 = vmul.f32 %v678, %v885
      %v925 = vmul.f32 %v681, %v887
      %v926 = vmul.f32 %v686, %v889
      %v927 = vmul.f32 %v689, %v891
      %v928 = vmul.f32 %v694, %v893
      %v929 = vmul.f32 %v697, %v895
      %v930 = vmul.f32 %v702, %v897
      %v931 = vmul.f32 %v705, %v899
      %v932 = vld [vmem:[#allocation2] sm:$0x1]
      %v933 = vadd.f32 %v900, %v901
      %v934 = vadd.f32 %v933, %v902
      %v935 = vadd.f32 %v934, %v903
      %v936 = vadd.f32 %v935, %v904
      %v937 = vadd.f32 %v936, %v905
      %v938 = vadd.f32 %v937, %v906
      %v939 = vadd.f32 %v938, %v907
      %v940 = vadd.f32 %v939, %v908
      %v941 = vadd.f32 %v940, %v909
      %v942 = vadd.f32 %v941, %v910
      %v943 = vadd.f32 %v942, %v911
      %v944 = vadd.f32 %v943, %v912
      %v945 = vadd.f32 %v944, %v913
      %v946 = vadd.f32 %v945, %v914
      %v947 = vadd.f32 %v946, %v915
      %v948 = vadd.f32 %v947, %v916
      %v949 = vadd.f32 %v948, %v917
      %v950 = vadd.f32 %v949, %v918
      %v951 = vadd.f32 %v950, %v919
      %v952 = vadd.f32 %v951, %v920
      %v953 = vadd.f32 %v952, %v921
      %v954 = vadd.f32 %v953, %v922
      %v955 = vadd.f32 %v954, %v923
      %v956 = vadd.f32 %v955, %v924
      %v957 = vadd.f32 %v956, %v925
      %v958 = vadd.f32 %v957, %v926
      %v959 = vadd.f32 %v958, %v927
      %v960 = vadd.f32 %v959, %v928
      %v961 = vadd.f32 %v960, %v929
      %v962 = vadd.f32 %v961, %v930
      %v963 = vadd.f32 %v962, %v931
      %v964 = vrot.slane %v963, 4
      %v965 = vadd.f32 %v963, %v964
      %v966 = vrot.slane %v965, 2
      %v967 = vadd.f32 %v965, %v966
      %v968 = vrot.slane %v967, 1
      %v969 = vadd.f32 %v967, %v968
      %v970 = vadd.f32 %v932, %v969
      %971 = vst [vmem:[#allocation2] sm:$0x1] %v970
      // Predicated region
      $region61: #{deepfake_detector_forward.1} parent=55 // pred_check
        %p972 = pneg %p358
      $region62: #{deepfake_detector_forward.1} parent=55 // pred_check_branch
        %974 = sbr.rel (%p972) target = $region64
      $region63: #{deepfake_detector_forward.1} parent=55 // pred_region
        %v975 = vld [vmem:[#allocation2] sm:$0x1]
        %v976 = vmul.f32 %v975, 0.00390625
        %v977 = vpack.c.bf16 %v976, %v976
        %v978 = vld [vmem:[%s3] sm:$0xff]
        %v979 = vld [vmem:[%s3 + $0x8] sm:$0xff]
        %v980 = vld [vmem:[%s3 + $0x10] sm:$0xff]
        %v981 = vld [vmem:[%s3 + $0x18] sm:$0xff]
        %v982 = vld [vmem:[%s3 + $0x20] sm:$0xff]
        %v983 = vld [vmem:[%s3 + $0x28] sm:$0xff]
        %v984 = vld [vmem:[%s3 + $0x30] sm:$0xff]
        %v985 = vld [vmem:[%s3 + $0x38] sm:$0xff]
        %v986 = vld [vmem:[%s3 + $0x40] sm:$0xff]
        %v987 = vld [vmem:[%s3 + $0x48] sm:$0xff]
        %v988 = vld [vmem:[%s3 + $0x50] sm:$0xff]
        %v989 = vld [vmem:[%s3 + $0x58] sm:$0xff]
        %v990 = vld [vmem:[%s3 + $0x60] sm:$0xff]
        %v991 = vld [vmem:[%s3 + $0x68] sm:$0xff]
        %v992 = vld [vmem:[%s3 + $0x70] sm:$0xff]
        %v993 = vld [vmem:[%s3 + $0x78] sm:$0xff]
        %v994 = vld [vmem:[%s3 + $0x80] sm:$0xff]
        %v995 = vld [vmem:[%s3 + $0x88] sm:$0xff]
        %v996 = vld [vmem:[%s3 + $0x90] sm:$0xff]
        %v997 = vld [vmem:[%s3 + $0x98] sm:$0xff]
        %v998 = vld [vmem:[%s3 + $0xa0] sm:$0xff]
        %v999 = vld [vmem:[%s3 + $0xa8] sm:$0xff]
        %v1000 = vld [vmem:[%s3 + $0xb0] sm:$0xff]
        %v1001 = vld [vmem:[%s3 + $0xb8] sm:$0xff]
        %v1002 = vld [vmem:[%s3 + $0xc0] sm:$0xff]
        %v1003 = vld [vmem:[%s3 + $0xc8] sm:$0xff]
        %v1004 = vld [vmem:[%s3 + $0xd0] sm:$0xff]
        %v1005 = vld [vmem:[%s3 + $0xd8] sm:$0xff]
        %v1006 = vld [vmem:[%s3 + $0xe0] sm:$0xff]
        %v1007 = vld [vmem:[%s3 + $0xe8] sm:$0xff]
        %v1008 = vld [vmem:[%s3 + $0xf0] sm:$0xff]
        %v1009 = vld [vmem:[%s3 + $0xf8] sm:$0xff]
        %v1010 = vld [vmem:[%s3 + $0x100] sm:$0xff]
        %v1011 = vld [vmem:[%s3 + $0x108] sm:$0xff]
        %v1012 = vld [vmem:[%s3 + $0x110] sm:$0xff]
        %v1013 = vld [vmem:[%s3 + $0x118] sm:$0xff]
        %v1014 = vld [vmem:[%s3 + $0x120] sm:$0xff]
        %v1015 = vld [vmem:[%s3 + $0x128] sm:$0xff]
        %v1016 = vld [vmem:[%s3 + $0x130] sm:$0xff]
        %v1017 = vld [vmem:[%s3 + $0x138] sm:$0xff]
        %v1018 = vld [vmem:[%s3 + $0x140] sm:$0xff]
        %v1019 = vld [vmem:[%s3 + $0x148] sm:$0xff]
        %v1020 = vld [vmem:[%s3 + $0x150] sm:$0xff]
        %v1021 = vld [vmem:[%s3 + $0x158] sm:$0xff]
        %v1022 = vld [vmem:[%s3 + $0x160] sm:$0xff]
        %v1023 = vld [vmem:[%s3 + $0x168] sm:$0xff]
        %v1024 = vld [vmem:[%s3 + $0x170] sm:$0xff]
        %v1025 = vld [vmem:[%s3 + $0x178] sm:$0xff]
        %v1026 = vld [vmem:[%s3 + $0x180] sm:$0xff]
        %v1027 = vld [vmem:[%s3 + $0x188] sm:$0xff]
        %v1028 = vld [vmem:[%s3 + $0x190] sm:$0xff]
        %v1029 = vld [vmem:[%s3 + $0x198] sm:$0xff]
        %v1030 = vld [vmem:[%s3 + $0x1a0] sm:$0xff]
        %v1031 = vld [vmem:[%s3 + $0x1a8] sm:$0xff]
        %v1032 = vld [vmem:[%s3 + $0x1b0] sm:$0xff]
        %v1033 = vld [vmem:[%s3 + $0x1b8] sm:$0xff]
        %v1034 = vld [vmem:[%s3 + $0x1c0] sm:$0xff]
        %v1035 = vld [vmem:[%s3 + $0x1c8] sm:$0xff]
        %v1036 = vld [vmem:[%s3 + $0x1d0] sm:$0xff]
        %v1037 = vld [vmem:[%s3 + $0x1d8] sm:$0xff]
        %v1038 = vld [vmem:[%s3 + $0x1e0] sm:$0xff]
        %v1039 = vld [vmem:[%s3 + $0x1e8] sm:$0xff]
        %v1040 = vld [vmem:[%s3 + $0x1f0] sm:$0xff]
        %v1041 = vld [vmem:[%s3 + $0x1f8] sm:$0xff]
        %v1042 = vld [vmem:[%s3 + $0x200] sm:$0xff]
        %v1043 = vld [vmem:[%s3 + $0x208] sm:$0xff]
        %v1044 = vld [vmem:[%s3 + $0x210] sm:$0xff]
        %v1045 = vld [vmem:[%s3 + $0x218] sm:$0xff]
        %v1046 = vld [vmem:[%s3 + $0x220] sm:$0xff]
        %v1047 = vld [vmem:[%s3 + $0x228] sm:$0xff]
        %v1048 = vld [vmem:[%s3 + $0x230] sm:$0xff]
        %v1049 = vld [vmem:[%s3 + $0x238] sm:$0xff]
        %v1050 = vld [vmem:[%s3 + $0x240] sm:$0xff]
        %v1051 = vld [vmem:[%s3 + $0x248] sm:$0xff]
        %v1052 = vld [vmem:[%s3 + $0x250] sm:$0xff]
        %v1053 = vld [vmem:[%s3 + $0x258] sm:$0xff]
        %v1054 = vld [vmem:[%s3 + $0x260] sm:$0xff]
        %v1055 = vld [vmem:[%s3 + $0x268] sm:$0xff]
        %v1056 = vld [vmem:[%s3 + $0x270] sm:$0xff]
        %v1057 = vld [vmem:[%s3 + $0x278] sm:$0xff]
        %v1058 = vld [vmem:[%s3 + $0x280] sm:$0xff]
        %v1059 = vld [vmem:[%s3 + $0x288] sm:$0xff]
        %v1060 = vld [vmem:[%s3 + $0x290] sm:$0xff]
        %v1061 = vld [vmem:[%s3 + $0x298] sm:$0xff]
        %v1062 = vld [vmem:[%s3 + $0x2a0] sm:$0xff]
        %v1063 = vld [vmem:[%s3 + $0x2a8] sm:$0xff]
        %v1064 = vld [vmem:[%s3 + $0x2b0] sm:$0xff]
        %v1065 = vld [vmem:[%s3 + $0x2b8] sm:$0xff]
        %v1066 = vld [vmem:[%s3 + $0x2c0] sm:$0xff]
        %v1067 = vld [vmem:[%s3 + $0x2c8] sm:$0xff]
        %v1068 = vld [vmem:[%s3 + $0x2d0] sm:$0xff]
        %v1069 = vld [vmem:[%s3 + $0x2d8] sm:$0xff]
        %v1070 = vld [vmem:[%s3 + $0x2e0] sm:$0xff]
        %v1071 = vld [vmem:[%s3 + $0x2e8] sm:$0xff]
        %v1072 = vld [vmem:[%s3 + $0x2f0] sm:$0xff]
        %v1073 = vld [vmem:[%s3 + $0x2f8] sm:$0xff]
        %v1074 = vld [vmem:[%s4] sm:$0xff]
        %v1075 = vld [vmem:[%s4 + $0x8] sm:$0xf]
        %v1172 = vunpack.c.l.b16 %v978
        %v1173 = vunpack.c.h.b16 %v978
        %v1174 = vunpack.c.l.b16 %v979
        %v1175 = vunpack.c.h.b16 %v979
        %v1176 = vunpack.c.l.b16 %v980
        %v1177 = vunpack.c.h.b16 %v980
        %v1178 = vunpack.c.l.b16 %v981
        %v1179 = vunpack.c.h.b16 %v981
        %v1180 = vunpack.c.l.b16 %v982
        %v1181 = vunpack.c.h.b16 %v982
        %v1182 = vunpack.c.l.b16 %v983
        %v1183 = vunpack.c.h.b16 %v983
        %v1184 = vunpack.c.l.b16 %v984
        %v1185 = vunpack.c.h.b16 %v984
        %v1186 = vunpack.c.l.b16 %v985
        %v1187 = vunpack.c.h.b16 %v985
        %v1188 = vunpack.c.l.b16 %v986
        %v1189 = vunpack.c.h.b16 %v986
        %v1190 = vunpack.c.l.b16 %v987
        %v1191 = vunpack.c.h.b16 %v987
        %v1192 = vunpack.c.l.b16 %v988
        %v1193 = vunpack.c.h.b16 %v988
        %v1194 = vunpack.c.l.b16 %v989
        %v1195 = vunpack.c.h.b16 %v989
        %v1196 = vunpack.c.l.b16 %v990
        %v1197 = vunpack.c.h.b16 %v990
        %v1198 = vunpack.c.l.b16 %v991
        %v1199 = vunpack.c.h.b16 %v991
        %v1200 = vunpack.c.l.b16 %v992
        %v1201 = vunpack.c.h.b16 %v992
        %v1202 = vunpack.c.l.b16 %v993
        %v1203 = vunpack.c.h.b16 %v993
        %v1204 = vunpack.c.l.b16 %v994
        %v1205 = vunpack.c.h.b16 %v994
        %v1206 = vunpack.c.l.b16 %v995
        %v1207 = vunpack.c.h.b16 %v995
        %v1208 = vunpack.c.l.b16 %v996
        %v1209 = vunpack.c.h.b16 %v996
        %v1210 = vunpack.c.l.b16 %v997
        %v1211 = vunpack.c.h.b16 %v997
        %v1212 = vunpack.c.l.b16 %v998
        %v1213 = vunpack.c.h.b16 %v998
        %v1214 = vunpack.c.l.b16 %v999
        %v1215 = vunpack.c.h.b16 %v999
        %v1216 = vunpack.c.l.b16 %v1000
        %v1217 = vunpack.c.h.b16 %v1000
        %v1218 = vunpack.c.l.b16 %v1001
        %v1219 = vunpack.c.h.b16 %v1001
        %v1220 = vunpack.c.l.b16 %v1002
        %v1221 = vunpack.c.h.b16 %v1002
        %v1222 = vunpack.c.l.b16 %v1003
        %v1223 = vunpack.c.h.b16 %v1003
        %v1224 = vunpack.c.l.b16 %v1004
        %v1225 = vunpack.c.h.b16 %v1004
        %v1226 = vunpack.c.l.b16 %v1005
        %v1227 = vunpack.c.h.b16 %v1005
        %v1228 = vunpack.c.l.b16 %v1006
        %v1229 = vunpack.c.h.b16 %v1006
        %v1230 = vunpack.c.l.b16 %v1007
        %v1231 = vunpack.c.h.b16 %v1007
        %v1232 = vunpack.c.l.b16 %v1008
        %v1233 = vunpack.c.h.b16 %v1008
        %v1234 = vunpack.c.l.b16 %v1009
        %v1235 = vunpack.c.h.b16 %v1009
        %v1236 = vunpack.c.l.b16 %v1010
        %v1237 = vunpack.c.h.b16 %v1010
        %v1238 = vunpack.c.l.b16 %v1011
        %v1239 = vunpack.c.h.b16 %v1011
        %v1240 = vunpack.c.l.b16 %v1012
        %v1241 = vunpack.c.h.b16 %v1012
        %v1242 = vunpack.c.l.b16 %v1013
        %v1243 = vunpack.c.h.b16 %v1013
        %v1244 = vunpack.c.l.b16 %v1014
        %v1245 = vunpack.c.h.b16 %v1014
        %v1246 = vunpack.c.l.b16 %v1015
        %v1247 = vunpack.c.h.b16 %v1015
        %v1248 = vunpack.c.l.b16 %v1016
        %v1249 = vunpack.c.h.b16 %v1016
        %v1250 = vunpack.c.l.b16 %v1017
        %v1251 = vunpack.c.h.b16 %v1017
        %v1252 = vunpack.c.l.b16 %v1018
        %v1253 = vunpack.c.h.b16 %v1018
        %v1254 = vunpack.c.l.b16 %v1019
        %v1255 = vunpack.c.h.b16 %v1019
        %v1256 = vunpack.c.l.b16 %v1020
        %v1257 = vunpack.c.h.b16 %v1020
        %v1258 = vunpack.c.l.b16 %v1021
        %v1259 = vunpack.c.h.b16 %v1021
        %v1260 = vunpack.c.l.b16 %v1022
        %v1261 = vunpack.c.h.b16 %v1022
        %v1262 = vunpack.c.l.b16 %v1023
        %v1263 = vunpack.c.h.b16 %v1023
        %v1264 = vunpack.c.l.b16 %v1024
        %v1265 = vunpack.c.h.b16 %v1024
        %v1266 = vunpack.c.l.b16 %v1025
        %v1267 = vunpack.c.h.b16 %v1025
        %v1268 = vunpack.c.l.b16 %v1026
        %v1269 = vunpack.c.h.b16 %v1026
        %v1270 = vunpack.c.l.b16 %v1027
        %v1271 = vunpack.c.h.b16 %v1027
        %v1272 = vunpack.c.l.b16 %v1028
        %v1273 = vunpack.c.h.b16 %v1028
        %v1274 = vunpack.c.l.b16 %v1029
        %v1275 = vunpack.c.h.b16 %v1029
        %v1276 = vunpack.c.l.b16 %v1030
        %v1277 = vunpack.c.h.b16 %v1030
        %v1278 = vunpack.c.l.b16 %v1031
        %v1279 = vunpack.c.h.b16 %v1031
        %v1280 = vunpack.c.l.b16 %v1032
        %v1281 = vunpack.c.h.b16 %v1032
        %v1282 = vunpack.c.l.b16 %v1033
        %v1283 = vunpack.c.h.b16 %v1033
        %v1284 = vunpack.c.l.b16 %v1034
        %v1285 = vunpack.c.h.b16 %v1034
        %v1286 = vunpack.c.l.b16 %v1035
        %v1287 = vunpack.c.h.b16 %v1035
        %v1288 = vunpack.c.l.b16 %v1036
        %v1289 = vunpack.c.h.b16 %v1036
        %v1290 = vunpack.c.l.b16 %v1037
        %v1291 = vunpack.c.h.b16 %v1037
        %v1292 = vunpack.c.l.b16 %v1038
        %v1293 = vunpack.c.h.b16 %v1038
        %v1294 = vunpack.c.l.b16 %v1039
        %v1295 = vunpack.c.h.b16 %v1039
        %v1296 = vunpack.c.l.b16 %v1040
        %v1297 = vunpack.c.h.b16 %v1040
        %v1298 = vunpack.c.l.b16 %v1041
        %v1299 = vunpack.c.h.b16 %v1041
        %v1300 = vunpack.c.l.b16 %v1042
        %v1301 = vunpack.c.h.b16 %v1042
        %v1302 = vunpack.c.l.b16 %v1043
        %v1303 = vunpack.c.h.b16 %v1043
        %v1304 = vunpack.c.l.b16 %v1044
        %v1305 = vunpack.c.h.b16 %v1044
        %v1306 = vunpack.c.l.b16 %v1045
        %v1307 = vunpack.c.h.b16 %v1045
        %v1308 = vunpack.c.l.b16 %v1046
        %v1309 = vunpack.c.h.b16 %v1046
        %v1310 = vunpack.c.l.b16 %v1047
        %v1311 = vunpack.c.h.b16 %v1047
        %v1312 = vunpack.c.l.b16 %v1048
        %v1313 = vunpack.c.h.b16 %v1048
        %v1314 = vunpack.c.l.b16 %v1049
        %v1315 = vunpack.c.h.b16 %v1049
        %v1316 = vunpack.c.l.b16 %v1050
        %v1317 = vunpack.c.h.b16 %v1050
        %v1318 = vunpack.c.l.b16 %v1051
        %v1319 = vunpack.c.h.b16 %v1051
        %v1320 = vunpack.c.l.b16 %v1052
        %v1321 = vunpack.c.h.b16 %v1052
        %v1322 = vunpack.c.l.b16 %v1053
        %v1323 = vunpack.c.h.b16 %v1053
        %v1324 = vunpack.c.l.b16 %v1054
        %v1325 = vunpack.c.h.b16 %v1054
        %v1326 = vunpack.c.l.b16 %v1055
        %v1327 = vunpack.c.h.b16 %v1055
        %v1328 = vunpack.c.l.b16 %v1056
        %v1329 = vunpack.c.h.b16 %v1056
        %v1330 = vunpack.c.l.b16 %v1057
        %v1331 = vunpack.c.h.b16 %v1057
        %v1332 = vunpack.c.l.b16 %v1058
        %v1333 = vunpack.c.h.b16 %v1058
        %v1334 = vunpack.c.l.b16 %v1059
        %v1335 = vunpack.c.h.b16 %v1059
        %v1336 = vunpack.c.l.b16 %v1060
        %v1337 = vunpack.c.h.b16 %v1060
        %v1338 = vunpack.c.l.b16 %v1061
        %v1339 = vunpack.c.h.b16 %v1061
        %v1340 = vunpack.c.l.b16 %v1062
        %v1341 = vunpack.c.h.b16 %v1062
        %v1342 = vunpack.c.l.b16 %v1063
        %v1343 = vunpack.c.h.b16 %v1063
        %v1344 = vunpack.c.l.b16 %v1064
        %v1345 = vunpack.c.h.b16 %v1064
        %v1346 = vunpack.c.l.b16 %v1065
        %v1347 = vunpack.c.h.b16 %v1065
        %v1348 = vunpack.c.l.b16 %v1066
        %v1349 = vunpack.c.h.b16 %v1066
        %v1350 = vunpack.c.l.b16 %v1067
        %v1351 = vunpack.c.h.b16 %v1067
        %v1352 = vunpack.c.l.b16 %v1068
        %v1353 = vunpack.c.h.b16 %v1068
        %v1354 = vunpack.c.l.b16 %v1069
        %v1355 = vunpack.c.h.b16 %v1069
        %v1356 = vunpack.c.l.b16 %v1070
        %v1357 = vunpack.c.h.b16 %v1070
        %v1358 = vunpack.c.l.b16 %v1071
        %v1359 = vunpack.c.h.b16 %v1071
        %v1360 = vunpack.c.l.b16 %v1072
        %v1361 = vunpack.c.h.b16 %v1072
        %v1362 = vunpack.c.l.b16 %v1073
        %v1363 = vunpack.c.h.b16 %v1073
        %v1364 = vpack.c.b16 %v1184, %v1172
        %v1365 = vpack.c.b16 %v1185, %v1173
        %v1366 = vpack.c.b16 %v1186, %v1174
        %v1367 = vpack.c.b16 %v1187, %v1175
        %v1368 = vpack.c.b16 %v1188, %v1176
        %v1369 = vpack.c.b16 %v1189, %v1177
        %v1370 = vpack.c.b16 %v1190, %v1178
        %v1371 = vpack.c.b16 %v1191, %v1179
        %v1372 = vpack.c.b16 %v1192, %v1180
        %v1373 = vpack.c.b16 %v1193, %v1181
        %v1374 = vpack.c.b16 %v1194, %v1182
        %v1375 = vpack.c.b16 %v1195, %v1183
        %v1376 = vpack.c.b16 %v1208, %v1196
        %v1377 = vpack.c.b16 %v1209, %v1197
        %v1378 = vpack.c.b16 %v1210, %v1198
        %v1379 = vpack.c.b16 %v1211, %v1199
        %v1380 = vpack.c.b16 %v1212, %v1200
        %v1381 = vpack.c.b16 %v1213, %v1201
        %v1382 = vpack.c.b16 %v1214, %v1202
        %v1383 = vpack.c.b16 %v1215, %v1203
        %v1384 = vpack.c.b16 %v1216, %v1204
        %v1385 = vpack.c.b16 %v1217, %v1205
        %v1386 = vpack.c.b16 %v1218, %v1206
        %v1387 = vpack.c.b16 %v1219, %v1207
        %v1388 = vpack.c.b16 %v1232, %v1220
        %v1389 = vpack.c.b16 %v1233, %v1221
        %v1390 = vpack.c.b16 %v1234, %v1222
        %v1391 = vpack.c.b16 %v1235, %v1223
        %v1392 = vpack.c.b16 %v1236, %v1224
        %v1393 = vpack.c.b16 %v1237, %v1225
        %v1394 = vpack.c.b16 %v1238, %v1226
        %v1395 = vpack.c.b16 %v1239, %v1227
        %v1396 = vpack.c.b16 %v1240, %v1228
        %v1397 = vpack.c.b16 %v1241, %v1229
        %v1398 = vpack.c.b16 %v1242, %v1230
        %v1399 = vpack.c.b16 %v1243, %v1231
        %v1400 = vpack.c.b16 %v1256, %v1244
        %v1401 = vpack.c.b16 %v1257, %v1245
        %v1402 = vpack.c.b16 %v1258, %v1246
        %v1403 = vpack.c.b16 %v1259, %v1247
        %v1404 = vpack.c.b16 %v1260, %v1248
        %v1405 = vpack.c.b16 %v1261, %v1249
        %v1406 = vpack.c.b16 %v1262, %v1250
        %v1407 = vpack.c.b16 %v1263, %v1251
        %v1408 = vpack.c.b16 %v1264, %v1252
        %v1409 = vpack.c.b16 %v1265, %v1253
        %v1410 = vpack.c.b16 %v1266, %v1254
        %v1411 = vpack.c.b16 %v1267, %v1255
        %v1412 = vpack.c.b16 %v1280, %v1268
        %v1413 = vpack.c.b16 %v1281, %v1269
        %v1414 = vpack.c.b16 %v1282, %v1270
        %v1415 = vpack.c.b16 %v1283, %v1271
        %v1416 = vpack.c.b16 %v1284, %v1272
        %v1417 = vpack.c.b16 %v1285, %v1273
        %v1418 = vpack.c.b16 %v1286, %v1274
        %v1419 = vpack.c.b16 %v1287, %v1275
        %v1420 = vpack.c.b16 %v1288, %v1276
        %v1421 = vpack.c.b16 %v1289, %v1277
        %v1422 = vpack.c.b16 %v1290, %v1278
        %v1423 = vpack.c.b16 %v1291, %v1279
        %v1424 = vpack.c.b16 %v1304, %v1292
        %v1425 = vpack.c.b16 %v1305, %v1293
        %v1426 = vpack.c.b16 %v1306, %v1294
        %v1427 = vpack.c.b16 %v1307, %v1295
        %v1428 = vpack.c.b16 %v1308, %v1296
        %v1429 = vpack.c.b16 %v1309, %v1297
        %v1430 = vpack.c.b16 %v1310, %v1298
        %v1431 = vpack.c.b16 %v1311, %v1299
        %v1432 = vpack.c.b16 %v1312, %v1300
        %v1433 = vpack.c.b16 %v1313, %v1301
        %v1434 = vpack.c.b16 %v1314, %v1302
        %v1435 = vpack.c.b16 %v1315, %v1303
        %v1436 = vpack.c.b16 %v1328, %v1316
        %v1437 = vpack.c.b16 %v1329, %v1317
        %v1438 = vpack.c.b16 %v1330, %v1318
        %v1439 = vpack.c.b16 %v1331, %v1319
        %v1440 = vpack.c.b16 %v1332, %v1320
        %v1441 = vpack.c.b16 %v1333, %v1321
        %v1442 = vpack.c.b16 %v1334, %v1322
        %v1443 = vpack.c.b16 %v1335, %v1323
        %v1444 = vpack.c.b16 %v1336, %v1324
        %v1445 = vpack.c.b16 %v1337, %v1325
        %v1446 = vpack.c.b16 %v1338, %v1326
        %v1447 = vpack.c.b16 %v1339, %v1327
        %v1448 = vpack.c.b16 %v1352, %v1340
        %v1449 = vpack.c.b16 %v1353, %v1341
        %v1450 = vpack.c.b16 %v1354, %v1342
        %v1451 = vpack.c.b16 %v1355, %v1343
        %v1452 = vpack.c.b16 %v1356, %v1344
        %v1453 = vpack.c.b16 %v1357, %v1345
        %v1454 = vpack.c.b16 %v1358, %v1346
        %v1455 = vpack.c.b16 %v1359, %v1347
        %v1456 = vpack.c.b16 %v1360, %v1348
        %v1457 = vpack.c.b16 %v1361, %v1349
        %v1458 = vpack.c.b16 %v1362, %v1350
        %v1459 = vpack.c.b16 %v1363, %v1351
        %v1558 = vlaneseq
        %v1559 = vshrl.u32 %v1558, 7
        %v1560 = vsub.s32 0, %v1559
        %v1561 = vrot.slane %v1074, %v1560
        %v1562 = vlaneseq
        %v1563 = vshrl.u32 %v1562, 7
        %v1564 = vsub.s32 1, %v1563
        %v1565 = vrot.slane %v1074, %v1564
        %v1566 = vlaneseq
        %v1567 = vshrl.u32 %v1566, 7
        %v1568 = vsub.s32 2, %v1567
        %v1569 = vrot.slane %v1074, %v1568
        %v1570 = vlaneseq
        %v1571 = vshrl.u32 %v1570, 7
        %v1572 = vsub.s32 3, %v1571
        %v1573 = vrot.slane %v1074, %v1572
        %v1574 = vlaneseq
        %v1575 = vshrl.u32 %v1574, 7
        %v1576 = vsub.s32 4, %v1575
        %v1577 = vrot.slane %v1074, %v1576
        %v1578 = vlaneseq
        %v1579 = vshrl.u32 %v1578, 7
        %v1580 = vsub.s32 5, %v1579
        %v1581 = vrot.slane %v1074, %v1580
        %v1582 = vlaneseq
        %v1583 = vshrl.u32 %v1582, 7
        %v1584 = vsub.s32 6, %v1583
        %v1585 = vrot.slane %v1074, %v1584
        %v1586 = vlaneseq
        %v1587 = vshrl.u32 %v1586, 7
        %v1588 = vsub.s32 7, %v1587
        %v1589 = vrot.slane %v1074, %v1588
        %v1590 = vlaneseq
        %v1591 = vshrl.u32 %v1590, 7
        %v1592 = vsub.s32 0, %v1591
        %v1593 = vrot.slane %v1075, %v1592
        %v1594 = vlaneseq
        %v1595 = vshrl.u32 %v1594, 7
        %v1596 = vsub.s32 1, %v1595
        %v1597 = vrot.slane %v1075, %v1596
        %v1598 = vlaneseq
        %v1599 = vshrl.u32 %v1598, 7
        %v1600 = vsub.s32 2, %v1599
        %v1601 = vrot.slane %v1075, %v1600
        %v1602 = vlaneseq
        %v1603 = vshrl.u32 %v1602, 7
        %v1604 = vsub.s32 3, %v1603
        %v1605 = vrot.slane %v1075, %v1604
        %1618 = vmatprep.subr.bf16.mxu0 %v1449
        %1619 = vmatpush1.bf16.msra.mxu0 %v1448
        %1620 = vmatprep.subr.bf16.mxu0 %v1437
        %1621 = vmatpush1.bf16.msra.mxu0 %v1436
        %1622 = vmatprep.subr.bf16.mxu0 %v1425
        %1623 = vmatpush1.bf16.msra.mxu0 %v1424
        %1624 = vmatprep.subr.bf16.mxu0 %v1413
        %1625 = vmatpush1.bf16.msra.mxu0 %v1412
        %1626 = vmatprep.subr.bf16.mxu0 %v1401
        %1627 = vmatpush1.bf16.msra.mxu0 %v1400
        %1628 = vmatprep.subr.bf16.mxu0 %v1389
        %1629 = vmatpush1.bf16.msra.mxu0 %v1388
        %1630 = vmatprep.subr.bf16.mxu0 %v1377
        %1631 = vmatpush1.bf16.msra.mxu0 %v1376
        %1632 = vmatprep.subr.bf16.mxu0 %v1365
        %1633 = vmatpush1.bf16.msra.mxu0 %v1364
        %1634 = vmatprep.subr.bf16.mxu0 0
        %1635 = vmatpush2.bf16.msra.mxu0 0
        %1636 = vmatprep.subr.bf16.mxu0 0
        %1637 = vmatpush2.bf16.msra.mxu0 0
        %1638 = vmatprep.subr.bf16.mxu0 0
        %1639 = vmatpush2.bf16.msra.mxu0 0
        %1640 = vmatprep.subr.bf16.mxu0 0
        %1641 = vmatpush2.bf16.msra.mxu0 0
        %1642 = vmatprep.subr.bf16.mxu0 0
        %1643 = vmatpush2.bf16.msra.mxu0 0
        %1644 = vmatprep.subr.bf16.mxu0 0
        %1645 = vmatpush2.bf16.msra.mxu0 0
        %1646 = vmatprep.subr.bf16.mxu0 0
        %1647 = vmatpush2.bf16.msra.mxu0 0
        %1648 = vmatprep.subr.bf16.mxu0 0
        %1649 = vmatpush2.bf16.msra.mxu0 0
        %1650 = vmatprep.mubr.bf16.mxu0 0
        %1651 = vmatmul.mubr.bf16.gmra.mxu0 %v977
        %v1652 = vpop.f32.mrf.mxu0
        %v1653 = vadd.f32 %v1561, %v1652
        %v1654 = vpop.f32.mrf.mxu0
        %v1655 = vadd.f32 %v1565, %v1654
        %v1656 = vpop.f32.mrf.mxu0
        %v1657 = vpop.f32.mrf.mxu0
        %1658 = vdwg.mxu0
        %1659 = vmatprep.subr.bf16.mxu0 %v1451
        %1660 = vmatpush1.bf16.msra.mxu0 %v1450
        %1661 = vmatprep.subr.bf16.mxu0 %v1439
        %1662 = vmatpush1.bf16.msra.mxu0 %v1438
        %1663 = vmatprep.subr.bf16.mxu0 %v1427
        %1664 = vmatpush1.bf16.msra.mxu0 %v1426
        %1665 = vmatprep.subr.bf16.mxu0 %v1415
        %1666 = vmatpush1.bf16.msra.mxu0 %v1414
        %1667 = vmatprep.subr.bf16.mxu0 %v1403
        %1668 = vmatpush1.bf16.msra.mxu0 %v1402
        %1669 = vmatprep.subr.bf16.mxu0 %v1391
        %1670 = vmatpush1.bf16.msra.mxu0 %v1390
        %1671 = vmatprep.subr.bf16.mxu0 %v1379
        %1672 = vmatpush1.bf16.msra.mxu0 %v1378
        %1673 = vmatprep.subr.bf16.mxu0 %v1367
        %1674 = vmatpush1.bf16.msra.mxu0 %v1366
        %1675 = vmatprep.subr.bf16.mxu0 0
        %1676 = vmatpush2.bf16.msra.mxu0 0
        %1677 = vmatprep.subr.bf16.mxu0 0
        %1678 = vmatpush2.bf16.msra.mxu0 0
        %1679 = vmatprep.subr.bf16.mxu0 0
        %1680 = vmatpush2.bf16.msra.mxu0 0
        %1681 = vmatprep.subr.bf16.mxu0 0
        %1682 = vmatpush2.bf16.msra.mxu0 0
        %1683 = vmatprep.subr.bf16.mxu0 0
        %1684 = vmatpush2.bf16.msra.mxu0 0
        %1685 = vmatprep.subr.bf16.mxu0 0
        %1686 = vmatpush2.bf16.msra.mxu0 0
        %1687 = vmatprep.subr.bf16.mxu0 0
        %1688 = vmatpush2.bf16.msra.mxu0 0
        %1689 = vmatprep.subr.bf16.mxu0 0
        %1690 = vmatpush2.bf16.msra.mxu0 0
        %1691 = vmatprep.mubr.bf16.mxu0 0
        %1692 = vmatmul.mubr.bf16.gmra.mxu0 %v977
        %v1693 = vpop.f32.mrf.mxu0
        %v1694 = vadd.f32 %v1569, %v1693
        %v1695 = vpop.f32.mrf.mxu0
        %v1696 = vadd.f32 %v1573, %v1695
        %v1697 = vpop.f32.mrf.mxu0
        %v1698 = vpop.f32.mrf.mxu0
        %1699 = vdwg.mxu0
        %1700 = vmatprep.subr.bf16.mxu0 %v1453
        %1701 = vmatpush1.bf16.msra.mxu0 %v1452
        %1702 = vmatprep.subr.bf16.mxu0 %v1441
        %1703 = vmatpush1.bf16.msra.mxu0 %v1440
        %1704 = vmatprep.subr.bf16.mxu0 %v1429
        %1705 = vmatpush1.bf16.msra.mxu0 %v1428
        %1706 = vmatprep.subr.bf16.mxu0 %v1417
        %1707 = vmatpush1.bf16.msra.mxu0 %v1416
        %1708 = vmatprep.subr.bf16.mxu0 %v1405
        %1709 = vmatpush1.bf16.msra.mxu0 %v1404
        %1710 = vmatprep.subr.bf16.mxu0 %v1393
        %1711 = vmatpush1.bf16.msra.mxu0 %v1392
        %1712 = vmatprep.subr.bf16.mxu0 %v1381
        %1713 = vmatpush1.bf16.msra.mxu0 %v1380
        %1714 = vmatprep.subr.bf16.mxu0 %v1369
        %1715 = vmatpush1.bf16.msra.mxu0 %v1368
        %1716 = vmatprep.subr.bf16.mxu0 0
        %1717 = vmatpush2.bf16.msra.mxu0 0
        %1718 = vmatprep.subr.bf16.mxu0 0
        %1719 = vmatpush2.bf16.msra.mxu0 0
        %1720 = vmatprep.subr.bf16.mxu0 0
        %1721 = vmatpush2.bf16.msra.mxu0 0
        %1722 = vmatprep.subr.bf16.mxu0 0
        %1723 = vmatpush2.bf16.msra.mxu0 0
        %1724 = vmatprep.subr.bf16.mxu0 0
        %1725 = vmatpush2.bf16.msra.mxu0 0
        %1726 = vmatprep.subr.bf16.mxu0 0
        %1727 = vmatpush2.bf16.msra.mxu0 0
        %1728 = vmatprep.subr.bf16.mxu0 0
        %1729 = vmatpush2.bf16.msra.mxu0 0
        %1730 = vmatprep.subr.bf16.mxu0 0
        %1731 = vmatpush2.bf16.msra.mxu0 0
        %1732 = vmatprep.mubr.bf16.mxu0 0
        %1733 = vmatmul.mubr.bf16.gmra.mxu0 %v977
        %v1734 = vpop.f32.mrf.mxu0
        %v1735 = vadd.f32 %v1577, %v1734
        %v1736 = vpop.f32.mrf.mxu0
        %v1737 = vadd.f32 %v1581, %v1736
        %v1738 = vpop.f32.mrf.mxu0
        %v1739 = vpop.f32.mrf.mxu0
        %1740 = vdwg.mxu0
        %1741 = vmatprep.subr.bf16.mxu0 %v1455
        %1742 = vmatpush1.bf16.msra.mxu0 %v1454
        %1743 = vmatprep.subr.bf16.mxu0 %v1443
        %1744 = vmatpush1.bf16.msra.mxu0 %v1442
        %1745 = vmatprep.subr.bf16.mxu0 %v1431
        %1746 = vmatpush1.bf16.msra.mxu0 %v1430
        %1747 = vmatprep.subr.bf16.mxu0 %v1419
        %1748 = vmatpush1.bf16.msra.mxu0 %v1418
        %1749 = vmatprep.subr.bf16.mxu0 %v1407
        %1750 = vmatpush1.bf16.msra.mxu0 %v1406
        %1751 = vmatprep.subr.bf16.mxu0 %v1395
        %1752 = vmatpush1.bf16.msra.mxu0 %v1394
        %1753 = vmatprep.subr.bf16.mxu0 %v1383
        %1754 = vmatpush1.bf16.msra.mxu0 %v1382
        %1755 = vmatprep.subr.bf16.mxu0 %v1371
        %1756 = vmatpush1.bf16.msra.mxu0 %v1370
        %1757 = vmatprep.subr.bf16.mxu0 0
        %1758 = vmatpush2.bf16.msra.mxu0 0
        %1759 = vmatprep.subr.bf16.mxu0 0
        %1760 = vmatpush2.bf16.msra.mxu0 0
        %1761 = vmatprep.subr.bf16.mxu0 0
        %1762 = vmatpush2.bf16.msra.mxu0 0
        %1763 = vmatprep.subr.bf16.mxu0 0
        %1764 = vmatpush2.bf16.msra.mxu0 0
        %1765 = vmatprep.subr.bf16.mxu0 0
        %1766 = vmatpush2.bf16.msra.mxu0 0
        %1767 = vmatprep.subr.bf16.mxu0 0
        %1768 = vmatpush2.bf16.msra.mxu0 0
        %1769 = vmatprep.subr.bf16.mxu0 0
        %1770 = vmatpush2.bf16.msra.mxu0 0
        %1771 = vmatprep.subr.bf16.mxu0 0
        %1772 = vmatpush2.bf16.msra.mxu0 0
        %1773 = vmatprep.mubr.bf16.mxu0 0
        %1774 = vmatmul.mubr.bf16.gmra.mxu0 %v977
        %v1775 = vpop.f32.mrf.mxu0
        %v1776 = vadd.f32 %v1585, %v1775
        %v1777 = vpop.f32.mrf.mxu0
        %v1778 = vadd.f32 %v1589, %v1777
        %v1779 = vpop.f32.mrf.mxu0
        %v1780 = vpop.f32.mrf.mxu0
        %1781 = vdwg.mxu0
        %1782 = vmatprep.subr.bf16.mxu0 %v1457
        %1783 = vmatpush1.bf16.msra.mxu0 %v1456
        %1784 = vmatprep.subr.bf16.mxu0 %v1445
        %1785 = vmatpush1.bf16.msra.mxu0 %v1444
        %1786 = vmatprep.subr.bf16.mxu0 %v1433
        %1787 = vmatpush1.bf16.msra.mxu0 %v1432
        %1788 = vmatprep.subr.bf16.mxu0 %v1421
        %1789 = vmatpush1.bf16.msra.mxu0 %v1420
        %1790 = vmatprep.subr.bf16.mxu0 %v1409
        %1791 = vmatpush1.bf16.msra.mxu0 %v1408
        %1792 = vmatprep.subr.bf16.mxu0 %v1397
        %1793 = vmatpush1.bf16.msra.mxu0 %v1396
        %1794 = vmatprep.subr.bf16.mxu0 %v1385
        %1795 = vmatpush1.bf16.msra.mxu0 %v1384
        %1796 = vmatprep.subr.bf16.mxu0 %v1373
        %1797 = vmatpush1.bf16.msra.mxu0 %v1372
        %1798 = vmatprep.subr.bf16.mxu0 0
        %1799 = vmatpush2.bf16.msra.mxu0 0
        %1800 = vmatprep.subr.bf16.mxu0 0
        %1801 = vmatpush2.bf16.msra.mxu0 0
        %1802 = vmatprep.subr.bf16.mxu0 0
        %1803 = vmatpush2.bf16.msra.mxu0 0
        %1804 = vmatprep.subr.bf16.mxu0 0
        %1805 = vmatpush2.bf16.msra.mxu0 0
        %1806 = vmatprep.subr.bf16.mxu0 0
        %1807 = vmatpush2.bf16.msra.mxu0 0
        %1808 = vmatprep.subr.bf16.mxu0 0
        %1809 = vmatpush2.bf16.msra.mxu0 0
        %1810 = vmatprep.subr.bf16.mxu0 0
        %1811 = vmatpush2.bf16.msra.mxu0 0
        %1812 = vmatprep.subr.bf16.mxu0 0
        %1813 = vmatpush2.bf16.msra.mxu0 0
        %1814 = vmatprep.mubr.bf16.mxu0 0
        %1815 = vmatmul.mubr.bf16.gmra.mxu0 %v977
        %v1816 = vpop.f32.mrf.mxu0
        %v1817 = vadd.f32 %v1593, %v1816
        %v1818 = vpop.f32.mrf.mxu0
        %v1819 = vadd.f32 %v1597, %v1818
        %v1820 = vpop.f32.mrf.mxu0
        %v1821 = vpop.f32.mrf.mxu0
        %1822 = vdwg.mxu0
        %1823 = vmatprep.subr.bf16.mxu0 %v1459
        %1824 = vmatpush1.bf16.msra.mxu0 %v1458
        %1825 = vmatprep.subr.bf16.mxu0 %v1447
        %1826 = vmatpush1.bf16.msra.mxu0 %v1446
        %1827 = vmatprep.subr.bf16.mxu0 %v1435
        %1828 = vmatpush1.bf16.msra.mxu0 %v1434
        %1829 = vmatprep.subr.bf16.mxu0 %v1423
        %1830 = vmatpush1.bf16.msra.mxu0 %v1422
        %1831 = vmatprep.subr.bf16.mxu0 %v1411
        %1832 = vmatpush1.bf16.msra.mxu0 %v1410
        %1833 = vmatprep.subr.bf16.mxu0 %v1399
        %1834 = vmatpush1.bf16.msra.mxu0 %v1398
        %1835 = vmatprep.subr.bf16.mxu0 %v1387
        %1836 = vmatpush1.bf16.msra.mxu0 %v1386
        %1837 = vmatprep.subr.bf16.mxu0 %v1375
        %1838 = vmatpush1.bf16.msra.mxu0 %v1374
        %1839 = vmatprep.subr.bf16.mxu0 0
        %1840 = vmatpush2.bf16.msra.mxu0 0
        %1841 = vmatprep.subr.bf16.mxu0 0
        %1842 = vmatpush2.bf16.msra.mxu0 0
        %1843 = vmatprep.subr.bf16.mxu0 0
        %1844 = vmatpush2.bf16.msra.mxu0 0
        %1845 = vmatprep.subr.bf16.mxu0 0
        %1846 = vmatpush2.bf16.msra.mxu0 0
        %1847 = vmatprep.subr.bf16.mxu0 0
        %1848 = vmatpush2.bf16.msra.mxu0 0
        %1849 = vmatprep.subr.bf16.mxu0 0
        %1850 = vmatpush2.bf16.msra.mxu0 0
        %1851 = vmatprep.subr.bf16.mxu0 0
        %1852 = vmatpush2.bf16.msra.mxu0 0
        %1853 = vmatprep.subr.bf16.mxu0 0
        %1854 = vmatpush2.bf16.msra.mxu0 0
        %1855 = vmatprep.mubr.bf16.mxu0 0
        %1856 = vmatmul.mubr.bf16.gmra.mxu0 %v977
        %v1857 = vpop.f32.mrf.mxu0
        %v1858 = vadd.f32 %v1601, %v1857
        %v1859 = vpop.f32.mrf.mxu0
        %v1860 = vadd.f32 %v1605, %v1859
        %v1861 = vpop.f32.mrf.mxu0
        %v1862 = vpop.f32.mrf.mxu0
        %1863 = vdwg.mxu0
        %v1864 = vxor.u32 %v1653, 2147483648
        %v1865 = vxor.u32 %v1655, 2147483648
        %v1866 = vxor.u32 %v1694, 2147483648
        %v1867 = vxor.u32 %v1696, 2147483648
        %v1868 = vxor.u32 %v1735, 2147483648
        %v1869 = vxor.u32 %v1737, 2147483648
        %v1870 = vxor.u32 %v1776, 2147483648
        %v1871 = vxor.u32 %v1778, 2147483648
        %v1872 = vxor.u32 %v1817, 2147483648
        %v1873 = vxor.u32 %v1819, 2147483648
        %v1874 = vxor.u32 %v1858, 2147483648
        %v1875 = vxor.u32 %v1860, 2147483648
        %v1876 = vmul.f32 %v1864, 1.442695
        %v1877 = vpow.pop %v1876
        %v1878 = vmul.f32 %v1865, 1.442695
        %v1879 = vpow.pop %v1878
        %v1880 = vmul.f32 %v1866, 1.442695
        %v1881 = vpow.pop %v1880
        %v1882 = vmul.f32 %v1867, 1.442695
        %v1883 = vpow.pop %v1882
        %v1884 = vmul.f32 %v1868, 1.442695
        %v1885 = vpow.pop %v1884
        %v1886 = vmul.f32 %v1869, 1.442695
        %v1887 = vpow.pop %v1886
        %v1888 = vmul.f32 %v1870, 1.442695
        %v1889 = vpow.pop %v1888
        %v1890 = vmul.f32 %v1871, 1.442695
        %v1891 = vpow.pop %v1890
        %v1892 = vmul.f32 %v1872, 1.442695
        %v1893 = vpow.pop %v1892
        %v1894 = vmul.f32 %v1873, 1.442695
        %v1895 = vpow.pop %v1894
        %v1896 = vmul.f32 %v1874, 1.442695
        %v1897 = vpow.pop %v1896
        %v1898 = vmul.f32 %v1875, 1.442695
        %v1899 = vpow.pop %v1898
        %v1900 = vadd.f32 %v1877, 1.0
        %v1901 = vadd.f32 %v1879, 1.0
        %v1902 = vadd.f32 %v1881, 1.0
        %v1903 = vadd.f32 %v1883, 1.0
        %v1904 = vadd.f32 %v1885, 1.0
        %v1905 = vadd.f32 %v1887, 1.0
        %v1906 = vadd.f32 %v1889, 1.0
        %v1907 = vadd.f32 %v1891, 1.0
        %v1908 = vadd.f32 %v1893, 1.0
        %v1909 = vadd.f32 %v1895, 1.0
        %v1910 = vadd.f32 %v1897, 1.0
        %v1911 = vadd.f32 %v1899, 1.0
        %v1912 = vrcp.pop %v1900
        %v1913 = vmul.f32 1.0, %v1912
        %v1914 = vrcp.pop %v1901
        %v1915 = vmul.f32 1.0, %v1914
        %v1916 = vrcp.pop %v1902
        %v1917 = vmul.f32 1.0, %v1916
        %v1918 = vrcp.pop %v1903
        %v1919 = vmul.f32 1.0, %v1918
        %v1920 = vrcp.pop %v1904
        %v1921 = vmul.f32 1.0, %v1920
        %v1922 = vrcp.pop %v1905
        %v1923 = vmul.f32 1.0, %v1922
        %v1924 = vrcp.pop %v1906
        %v1925 = vmul.f32 1.0, %v1924
        %v1926 = vrcp.pop %v1907
        %v1927 = vmul.f32 1.0, %v1926
        %v1928 = vrcp.pop %v1908
        %v1929 = vmul.f32 1.0, %v1928
        %v1930 = vrcp.pop %v1909
        %v1931 = vmul.f32 1.0, %v1930
        %v1932 = vrcp.pop %v1910
        %v1933 = vmul.f32 1.0, %v1932
        %v1934 = vrcp.pop %v1911
        %v1935 = vmul.f32 1.0, %v1934
        %v1936 = vmul.f32 %v1653, %v1913
        %v1937 = vmul.f32 %v1655, %v1915
        %v1938 = vmul.f32 %v1694, %v1917
        %v1939 = vmul.f32 %v1696, %v1919
        %v1940 = vmul.f32 %v1735, %v1921
        %v1941 = vmul.f32 %v1737, %v1923
        %v1942 = vmul.f32 %v1776, %v1925
        %v1943 = vmul.f32 %v1778, %v1927
        %v1944 = vmul.f32 %v1817, %v1929
        %v1945 = vmul.f32 %v1819, %v1931
        %v1946 = vmul.f32 %v1858, %v1933
        %v1947 = vmul.f32 %v1860, %v1935
        %v1948 = vpack.c.bf16 %v1936, %v1936
        %v1949 = vpack.c.bf16 %v1937, %v1937
        %v1950 = vpack.c.bf16 %v1938, %v1938
        %v1951 = vpack.c.bf16 %v1939, %v1939
        %v1952 = vpack.c.bf16 %v1940, %v1940
        %v1953 = vpack.c.bf16 %v1941, %v1941
        %v1954 = vpack.c.bf16 %v1942, %v1942
        %v1955 = vpack.c.bf16 %v1943, %v1943
        %v1956 = vpack.c.bf16 %v1944, %v1944
        %v1957 = vpack.c.bf16 %v1945, %v1945
        %v1958 = vpack.c.bf16 %v1946, %v1946
        %v1959 = vpack.c.bf16 %v1947, %v1947
        %v1960 = vld [vmem:[%s5] sm:$0xff]
        %v1961 = vld [vmem:[%s5 + $0x8] sm:$0xff]
        %v1962 = vld [vmem:[%s5 + $0x10] sm:$0xff]
        %v1963 = vld [vmem:[%s5 + $0x18] sm:$0xff]
        %v1964 = vld [vmem:[%s5 + $0x20] sm:$0xff]
        %v1965 = vld [vmem:[%s5 + $0x28] sm:$0xff]
        %v1966 = vld [vmem:[%s5 + $0x30] sm:$0xff]
        %v1967 = vld [vmem:[%s5 + $0x38] sm:$0xff]
        %v1968 = vld [vmem:[%s5 + $0x40] sm:$0xff]
        %v1969 = vld [vmem:[%s5 + $0x48] sm:$0xff]
        %v1970 = vld [vmem:[%s5 + $0x50] sm:$0xff]
        %v1971 = vld [vmem:[%s5 + $0x58] sm:$0xff]
        %v1972 = vld [vmem:[%s5 + $0x60] sm:$0xff]
        %v1973 = vld [vmem:[%s5 + $0x68] sm:$0xff]
        %v1974 = vld [vmem:[%s5 + $0x70] sm:$0xff]
        %v1975 = vld [vmem:[%s5 + $0x78] sm:$0xff]
        %v1976 = vld [vmem:[%s5 + $0x80] sm:$0xff]
        %v1977 = vld [vmem:[%s5 + $0x88] sm:$0xff]
        %v1978 = vld [vmem:[%s5 + $0x90] sm:$0xff]
        %v1979 = vld [vmem:[%s5 + $0x98] sm:$0xff]
        %v1980 = vld [vmem:[%s5 + $0xa0] sm:$0xff]
        %v1981 = vld [vmem:[%s5 + $0xa8] sm:$0xff]
        %v1982 = vld [vmem:[%s5 + $0xb0] sm:$0xff]
        %v1983 = vld [vmem:[%s5 + $0xb8] sm:$0xff]
        %v1984 = vld [vmem:[%s5 + $0xc0] sm:$0xff]
        %v1985 = vld [vmem:[%s5 + $0xc8] sm:$0xff]
        %v1986 = vld [vmem:[%s5 + $0xd0] sm:$0xff]
        %v1987 = vld [vmem:[%s5 + $0xd8] sm:$0xff]
        %v1988 = vld [vmem:[%s5 + $0xe0] sm:$0xff]
        %v1989 = vld [vmem:[%s5 + $0xe8] sm:$0xff]
        %v1990 = vld [vmem:[%s5 + $0xf0] sm:$0xff]
        %v1991 = vld [vmem:[%s5 + $0xf8] sm:$0xff]
        %v1992 = vld [vmem:[%s5 + $0x100] sm:$0xff]
        %v1993 = vld [vmem:[%s5 + $0x108] sm:$0xff]
        %v1994 = vld [vmem:[%s5 + $0x110] sm:$0xff]
        %v1995 = vld [vmem:[%s5 + $0x118] sm:$0xff]
        %v1996 = vld [vmem:[%s5 + $0x120] sm:$0xff]
        %v1997 = vld [vmem:[%s5 + $0x128] sm:$0xff]
        %v1998 = vld [vmem:[%s5 + $0x130] sm:$0xff]
        %v1999 = vld [vmem:[%s5 + $0x138] sm:$0xff]
        %v2000 = vld [vmem:[%s5 + $0x140] sm:$0xff]
        %v2001 = vld [vmem:[%s5 + $0x148] sm:$0xff]
        %v2002 = vld [vmem:[%s5 + $0x150] sm:$0xff]
        %v2003 = vld [vmem:[%s5 + $0x158] sm:$0xff]
        %v2004 = vld [vmem:[%s5 + $0x160] sm:$0xff]
        %v2005 = vld [vmem:[%s5 + $0x168] sm:$0xff]
        %v2006 = vld [vmem:[%s5 + $0x170] sm:$0xff]
        %v2007 = vld [vmem:[%s5 + $0x178] sm:$0xff]
        %v2008 = vld [vmem:[%s5 + $0x180] sm:$0xff]
        %v2009 = vld [vmem:[%s5 + $0x188] sm:$0xff]
        %v2010 = vld [vmem:[%s5 + $0x190] sm:$0xff]
        %v2011 = vld [vmem:[%s5 + $0x198] sm:$0xff]
        %v2012 = vld [vmem:[%s5 + $0x1a0] sm:$0xff]
        %v2013 = vld [vmem:[%s5 + $0x1a8] sm:$0xff]
        %v2014 = vld [vmem:[%s5 + $0x1b0] sm:$0xff]
        %v2015 = vld [vmem:[%s5 + $0x1b8] sm:$0xff]
        %v2016 = vld [vmem:[%s5 + $0x1c0] sm:$0xff]
        %v2017 = vld [vmem:[%s5 + $0x1c8] sm:$0xff]
        %v2018 = vld [vmem:[%s5 + $0x1d0] sm:$0xff]
        %v2019 = vld [vmem:[%s5 + $0x1d8] sm:$0xff]
        %v2020 = vld [vmem:[%s5 + $0x1e0] sm:$0xff]
        %v2021 = vld [vmem:[%s5 + $0x1e8] sm:$0xff]
        %v2022 = vld [vmem:[%s5 + $0x1f0] sm:$0xff]
        %v2023 = vld [vmem:[%s5 + $0x1f8] sm:$0xff]
        %v2024 = vld [vmem:[%s5 + $0x200] sm:$0xff]
        %v2025 = vld [vmem:[%s5 + $0x208] sm:$0xff]
        %v2026 = vld [vmem:[%s5 + $0x210] sm:$0xff]
        %v2027 = vld [vmem:[%s5 + $0x218] sm:$0xff]
        %v2028 = vld [vmem:[%s5 + $0x220] sm:$0xff]
        %v2029 = vld [vmem:[%s5 + $0x228] sm:$0xff]
        %v2030 = vld [vmem:[%s5 + $0x230] sm:$0xff]
        %v2031 = vld [vmem:[%s5 + $0x238] sm:$0xff]
        %v2032 = vld [vmem:[%s5 + $0x240] sm:$0xff]
        %v2033 = vld [vmem:[%s5 + $0x248] sm:$0xff]
        %v2034 = vld [vmem:[%s5 + $0x250] sm:$0xff]
        %v2035 = vld [vmem:[%s5 + $0x258] sm:$0xff]
        %v2036 = vld [vmem:[%s5 + $0x260] sm:$0xff]
        %v2037 = vld [vmem:[%s5 + $0x268] sm:$0xff]
        %v2038 = vld [vmem:[%s5 + $0x270] sm:$0xff]
        %v2039 = vld [vmem:[%s5 + $0x278] sm:$0xff]
        %v2040 = vld [vmem:[%s5 + $0x280] sm:$0xff]
        %v2041 = vld [vmem:[%s5 + $0x288] sm:$0xff]
        %v2042 = vld [vmem:[%s5 + $0x290] sm:$0xff]
        %v2043 = vld [vmem:[%s5 + $0x298] sm:$0xff]
        %v2044 = vld [vmem:[%s5 + $0x2a0] sm:$0xff]
        %v2045 = vld [vmem:[%s5 + $0x2a8] sm:$0xff]
        %v2046 = vld [vmem:[%s5 + $0x2b0] sm:$0xff]
        %v2047 = vld [vmem:[%s5 + $0x2b8] sm:$0xff]
        %v2048 = vld [vmem:[%s5 + $0x2c0] sm:$0xff]
        %v2049 = vld [vmem:[%s5 + $0x2c8] sm:$0xff]
        %v2050 = vld [vmem:[%s5 + $0x2d0] sm:$0xff]
        %v2051 = vld [vmem:[%s5 + $0x2d8] sm:$0xff]
        %v2052 = vld [vmem:[%s5 + $0x2e0] sm:$0xff]
        %v2053 = vld [vmem:[%s5 + $0x2e8] sm:$0xff]
        %v2054 = vld [vmem:[%s5 + $0x2f0] sm:$0xff]
        %v2055 = vld [vmem:[%s5 + $0x2f8] sm:$0xff]
        %v2056 = vld [vmem:[%s5 + $0x300] sm:$0xff]
        %v2057 = vld [vmem:[%s5 + $0x308] sm:$0xff]
        %v2058 = vld [vmem:[%s5 + $0x310] sm:$0xff]
        %v2059 = vld [vmem:[%s5 + $0x318] sm:$0xff]
        %v2060 = vld [vmem:[%s5 + $0x320] sm:$0xff]
        %v2061 = vld [vmem:[%s5 + $0x328] sm:$0xff]
        %v2062 = vld [vmem:[%s5 + $0x330] sm:$0xff]
        %v2063 = vld [vmem:[%s5 + $0x338] sm:$0xff]
        %v2064 = vld [vmem:[%s5 + $0x340] sm:$0xff]
        %v2065 = vld [vmem:[%s5 + $0x348] sm:$0xff]
        %v2066 = vld [vmem:[%s5 + $0x350] sm:$0xff]
        %v2067 = vld [vmem:[%s5 + $0x358] sm:$0xff]
        %v2068 = vld [vmem:[%s5 + $0x360] sm:$0xff]
        %v2069 = vld [vmem:[%s5 + $0x368] sm:$0xff]
        %v2070 = vld [vmem:[%s5 + $0x370] sm:$0xff]
        %v2071 = vld [vmem:[%s5 + $0x378] sm:$0xff]
        %v2072 = vld [vmem:[%s5 + $0x380] sm:$0xff]
        %v2073 = vld [vmem:[%s5 + $0x388] sm:$0xff]
        %v2074 = vld [vmem:[%s5 + $0x390] sm:$0xff]
        %v2075 = vld [vmem:[%s5 + $0x398] sm:$0xff]
        %v2076 = vld [vmem:[%s5 + $0x3a0] sm:$0xff]
        %v2077 = vld [vmem:[%s5 + $0x3a8] sm:$0xff]
        %v2078 = vld [vmem:[%s5 + $0x3b0] sm:$0xff]
        %v2079 = vld [vmem:[%s5 + $0x3b8] sm:$0xff]
        %v2080 = vld [vmem:[%s5 + $0x3c0] sm:$0xff]
        %v2081 = vld [vmem:[%s5 + $0x3c8] sm:$0xff]
        %v2082 = vld [vmem:[%s5 + $0x3d0] sm:$0xff]
        %v2083 = vld [vmem:[%s5 + $0x3d8] sm:$0xff]
        %v2084 = vld [vmem:[%s5 + $0x3e0] sm:$0xff]
        %v2085 = vld [vmem:[%s5 + $0x3e8] sm:$0xff]
        %v2086 = vld [vmem:[%s5 + $0x3f0] sm:$0xff]
        %v2087 = vld [vmem:[%s5 + $0x3f8] sm:$0xff]
        %v2088 = vld [vmem:[%s5 + $0x400] sm:$0xff]
        %v2089 = vld [vmem:[%s5 + $0x408] sm:$0xff]
        %v2090 = vld [vmem:[%s5 + $0x410] sm:$0xff]
        %v2091 = vld [vmem:[%s5 + $0x418] sm:$0xff]
        %v2092 = vld [vmem:[%s5 + $0x420] sm:$0xff]
        %v2093 = vld [vmem:[%s5 + $0x428] sm:$0xff]
        %v2094 = vld [vmem:[%s5 + $0x430] sm:$0xff]
        %v2095 = vld [vmem:[%s5 + $0x438] sm:$0xff]
        %v2096 = vld [vmem:[%s5 + $0x440] sm:$0xff]
        %v2097 = vld [vmem:[%s5 + $0x448] sm:$0xff]
        %v2098 = vld [vmem:[%s5 + $0x450] sm:$0xff]
        %v2099 = vld [vmem:[%s5 + $0x458] sm:$0xff]
        %v2100 = vld [vmem:[%s5 + $0x460] sm:$0xff]
        %v2101 = vld [vmem:[%s5 + $0x468] sm:$0xff]
        %v2102 = vld [vmem:[%s5 + $0x470] sm:$0xff]
        %v2103 = vld [vmem:[%s5 + $0x478] sm:$0xff]
        %v2104 = vld [vmem:[%s5 + $0x480] sm:$0xff]
        %v2105 = vld [vmem:[%s5 + $0x488] sm:$0xff]
        %v2106 = vld [vmem:[%s5 + $0x490] sm:$0xff]
        %v2107 = vld [vmem:[%s5 + $0x498] sm:$0xff]
        %v2108 = vld [vmem:[%s5 + $0x4a0] sm:$0xff]
        %v2109 = vld [vmem:[%s5 + $0x4a8] sm:$0xff]
        %v2110 = vld [vmem:[%s5 + $0x4b0] sm:$0xff]
        %v2111 = vld [vmem:[%s5 + $0x4b8] sm:$0xff]
        %v2112 = vld [vmem:[%s5 + $0x4c0] sm:$0xff]
        %v2113 = vld [vmem:[%s5 + $0x4c8] sm:$0xff]
        %v2114 = vld [vmem:[%s5 + $0x4d0] sm:$0xff]
        %v2115 = vld [vmem:[%s5 + $0x4d8] sm:$0xff]
        %v2116 = vld [vmem:[%s5 + $0x4e0] sm:$0xff]
        %v2117 = vld [vmem:[%s5 + $0x4e8] sm:$0xff]
        %v2118 = vld [vmem:[%s5 + $0x4f0] sm:$0xff]
        %v2119 = vld [vmem:[%s5 + $0x4f8] sm:$0xff]
        %v2120 = vld [vmem:[%s5 + $0x500] sm:$0xff]
        %v2121 = vld [vmem:[%s5 + $0x508] sm:$0xff]
        %v2122 = vld [vmem:[%s5 + $0x510] sm:$0xff]
        %v2123 = vld [vmem:[%s5 + $0x518] sm:$0xff]
        %v2124 = vld [vmem:[%s5 + $0x520] sm:$0xff]
        %v2125 = vld [vmem:[%s5 + $0x528] sm:$0xff]
        %v2126 = vld [vmem:[%s5 + $0x530] sm:$0xff]
        %v2127 = vld [vmem:[%s5 + $0x538] sm:$0xff]
        %v2128 = vld [vmem:[%s5 + $0x540] sm:$0xff]
        %v2129 = vld [vmem:[%s5 + $0x548] sm:$0xff]
        %v2130 = vld [vmem:[%s5 + $0x550] sm:$0xff]
        %v2131 = vld [vmem:[%s5 + $0x558] sm:$0xff]
        %v2132 = vld [vmem:[%s5 + $0x560] sm:$0xff]
        %v2133 = vld [vmem:[%s5 + $0x568] sm:$0xff]
        %v2134 = vld [vmem:[%s5 + $0x570] sm:$0xff]
        %v2135 = vld [vmem:[%s5 + $0x578] sm:$0xff]
        %v2136 = vld [vmem:[%s5 + $0x580] sm:$0xff]
        %v2137 = vld [vmem:[%s5 + $0x588] sm:$0xff]
        %v2138 = vld [vmem:[%s5 + $0x590] sm:$0xff]
        %v2139 = vld [vmem:[%s5 + $0x598] sm:$0xff]
        %v2140 = vld [vmem:[%s5 + $0x5a0] sm:$0xff]
        %v2141 = vld [vmem:[%s5 + $0x5a8] sm:$0xff]
        %v2142 = vld [vmem:[%s5 + $0x5b0] sm:$0xff]
        %v2143 = vld [vmem:[%s5 + $0x5b8] sm:$0xff]
        %v2144 = vld [vmem:[%s5 + $0x5c0] sm:$0xff]
        %v2145 = vld [vmem:[%s5 + $0x5c8] sm:$0xff]
        %v2146 = vld [vmem:[%s5 + $0x5d0] sm:$0xff]
        %v2147 = vld [vmem:[%s5 + $0x5d8] sm:$0xff]
        %v2148 = vld [vmem:[%s5 + $0x5e0] sm:$0xff]
        %v2149 = vld [vmem:[%s5 + $0x5e8] sm:$0xff]
        %v2150 = vld [vmem:[%s5 + $0x5f0] sm:$0xff]
        %v2151 = vld [vmem:[%s5 + $0x5f8] sm:$0xff]
        %v2152 = vld [vmem:[%s5 + $0x600] sm:$0xff]
        %v2153 = vld [vmem:[%s5 + $0x608] sm:$0xff]
        %v2154 = vld [vmem:[%s5 + $0x610] sm:$0xff]
        %v2155 = vld [vmem:[%s5 + $0x618] sm:$0xff]
        %v2156 = vld [vmem:[%s5 + $0x620] sm:$0xff]
        %v2157 = vld [vmem:[%s5 + $0x628] sm:$0xff]
        %v2158 = vld [vmem:[%s5 + $0x630] sm:$0xff]
        %v2159 = vld [vmem:[%s5 + $0x638] sm:$0xff]
        %v2160 = vld [vmem:[%s5 + $0x640] sm:$0xff]
        %v2161 = vld [vmem:[%s5 + $0x648] sm:$0xff]
        %v2162 = vld [vmem:[%s5 + $0x650] sm:$0xff]
        %v2163 = vld [vmem:[%s5 + $0x658] sm:$0xff]
        %v2164 = vld [vmem:[%s5 + $0x660] sm:$0xff]
        %v2165 = vld [vmem:[%s5 + $0x668] sm:$0xff]
        %v2166 = vld [vmem:[%s5 + $0x670] sm:$0xff]
        %v2167 = vld [vmem:[%s5 + $0x678] sm:$0xff]
        %v2168 = vld [vmem:[%s5 + $0x680] sm:$0xff]
        %v2169 = vld [vmem:[%s5 + $0x688] sm:$0xff]
        %v2170 = vld [vmem:[%s5 + $0x690] sm:$0xff]
        %v2171 = vld [vmem:[%s5 + $0x698] sm:$0xff]
        %v2172 = vld [vmem:[%s5 + $0x6a0] sm:$0xff]
        %v2173 = vld [vmem:[%s5 + $0x6a8] sm:$0xff]
        %v2174 = vld [vmem:[%s5 + $0x6b0] sm:$0xff]
        %v2175 = vld [vmem:[%s5 + $0x6b8] sm:$0xff]
        %v2176 = vld [vmem:[%s5 + $0x6c0] sm:$0xff]
        %v2177 = vld [vmem:[%s5 + $0x6c8] sm:$0xff]
        %v2178 = vld [vmem:[%s5 + $0x6d0] sm:$0xff]
        %v2179 = vld [vmem:[%s5 + $0x6d8] sm:$0xff]
        %v2180 = vld [vmem:[%s5 + $0x6e0] sm:$0xff]
        %v2181 = vld [vmem:[%s5 + $0x6e8] sm:$0xff]
        %v2182 = vld [vmem:[%s5 + $0x6f0] sm:$0xff]
        %v2183 = vld [vmem:[%s5 + $0x6f8] sm:$0xff]
        %v2184 = vld [vmem:[%s5 + $0x700] sm:$0xff]
        %v2185 = vld [vmem:[%s5 + $0x708] sm:$0xff]
        %v2186 = vld [vmem:[%s5 + $0x710] sm:$0xff]
        %v2187 = vld [vmem:[%s5 + $0x718] sm:$0xff]
        %v2188 = vld [vmem:[%s5 + $0x720] sm:$0xff]
        %v2189 = vld [vmem:[%s5 + $0x728] sm:$0xff]
        %v2190 = vld [vmem:[%s5 + $0x730] sm:$0xff]
        %v2191 = vld [vmem:[%s5 + $0x738] sm:$0xff]
        %v2192 = vld [vmem:[%s5 + $0x740] sm:$0xff]
        %v2193 = vld [vmem:[%s5 + $0x748] sm:$0xff]
        %v2194 = vld [vmem:[%s5 + $0x750] sm:$0xff]
        %v2195 = vld [vmem:[%s5 + $0x758] sm:$0xff]
        %v2196 = vld [vmem:[%s5 + $0x760] sm:$0xff]
        %v2197 = vld [vmem:[%s5 + $0x768] sm:$0xff]
        %v2198 = vld [vmem:[%s5 + $0x770] sm:$0xff]
        %v2199 = vld [vmem:[%s5 + $0x778] sm:$0xff]
        %v2200 = vld [vmem:[%s5 + $0x780] sm:$0xff]
        %v2201 = vld [vmem:[%s5 + $0x788] sm:$0xff]
        %v2202 = vld [vmem:[%s5 + $0x790] sm:$0xff]
        %v2203 = vld [vmem:[%s5 + $0x798] sm:$0xff]
        %v2204 = vld [vmem:[%s5 + $0x7a0] sm:$0xff]
        %v2205 = vld [vmem:[%s5 + $0x7a8] sm:$0xff]
        %v2206 = vld [vmem:[%s5 + $0x7b0] sm:$0xff]
        %v2207 = vld [vmem:[%s5 + $0x7b8] sm:$0xff]
        %v2208 = vld [vmem:[%s5 + $0x7c0] sm:$0xff]
        %v2209 = vld [vmem:[%s5 + $0x7c8] sm:$0xff]
        %v2210 = vld [vmem:[%s5 + $0x7d0] sm:$0xff]
        %v2211 = vld [vmem:[%s5 + $0x7d8] sm:$0xff]
        %v2212 = vld [vmem:[%s5 + $0x7e0] sm:$0xff]
        %v2213 = vld [vmem:[%s5 + $0x7e8] sm:$0xff]
        %v2214 = vld [vmem:[%s5 + $0x7f0] sm:$0xff]
        %v2215 = vld [vmem:[%s5 + $0x7f8] sm:$0xff]
        %v2216 = vld [vmem:[%s5 + $0x800] sm:$0xff]
        %v2217 = vld [vmem:[%s5 + $0x808] sm:$0xff]
        %v2218 = vld [vmem:[%s5 + $0x810] sm:$0xff]
        %v2219 = vld [vmem:[%s5 + $0x818] sm:$0xff]
        %v2220 = vld [vmem:[%s5 + $0x820] sm:$0xff]
        %v2221 = vld [vmem:[%s5 + $0x828] sm:$0xff]
        %v2222 = vld [vmem:[%s5 + $0x830] sm:$0xff]
        %v2223 = vld [vmem:[%s5 + $0x838] sm:$0xff]
        %v2224 = vld [vmem:[%s5 + $0x840] sm:$0xff]
        %v2225 = vld [vmem:[%s5 + $0x848] sm:$0xff]
        %v2226 = vld [vmem:[%s5 + $0x850] sm:$0xff]
        %v2227 = vld [vmem:[%s5 + $0x858] sm:$0xff]
        %v2228 = vld [vmem:[%s5 + $0x860] sm:$0xff]
        %v2229 = vld [vmem:[%s5 + $0x868] sm:$0xff]
        %v2230 = vld [vmem:[%s5 + $0x870] sm:$0xff]
        %v2231 = vld [vmem:[%s5 + $0x878] sm:$0xff]
        %v2232 = vld [vmem:[%s5 + $0x880] sm:$0xff]
        %v2233 = vld [vmem:[%s5 + $0x888] sm:$0xff]
        %v2234 = vld [vmem:[%s5 + $0x890] sm:$0xff]
        %v2235 = vld [vmem:[%s5 + $0x898] sm:$0xff]
        %v2236 = vld [vmem:[%s5 + $0x8a0] sm:$0xff]
        %v2237 = vld [vmem:[%s5 + $0x8a8] sm:$0xff]
        %v2238 = vld [vmem:[%s5 + $0x8b0] sm:$0xff]
        %v2239 = vld [vmem:[%s5 + $0x8b8] sm:$0xff]
        %v2240 = vld [vmem:[%s5 + $0x8c0] sm:$0xff]
        %v2241 = vld [vmem:[%s5 + $0x8c8] sm:$0xff]
        %v2242 = vld [vmem:[%s5 + $0x8d0] sm:$0xff]
        %v2243 = vld [vmem:[%s5 + $0x8d8] sm:$0xff]
        %v2244 = vld [vmem:[%s5 + $0x8e0] sm:$0xff]
        %v2245 = vld [vmem:[%s5 + $0x8e8] sm:$0xff]
        %v2246 = vld [vmem:[%s5 + $0x8f0] sm:$0xff]
        %v2247 = vld [vmem:[%s5 + $0x8f8] sm:$0xff]
        %v2248 = vld [vmem:[%s5 + $0x900] sm:$0xff]
        %v2249 = vld [vmem:[%s5 + $0x908] sm:$0xff]
        %v2250 = vld [vmem:[%s5 + $0x910] sm:$0xff]
        %v2251 = vld [vmem:[%s5 + $0x918] sm:$0xff]
        %v2252 = vld [vmem:[%s5 + $0x920] sm:$0xff]
        %v2253 = vld [vmem:[%s5 + $0x928] sm:$0xff]
        %v2254 = vld [vmem:[%s5 + $0x930] sm:$0xff]
        %v2255 = vld [vmem:[%s5 + $0x938] sm:$0xff]
        %v2256 = vld [vmem:[%s5 + $0x940] sm:$0xff]
        %v2257 = vld [vmem:[%s5 + $0x948] sm:$0xff]
        %v2258 = vld [vmem:[%s5 + $0x950] sm:$0xff]
        %v2259 = vld [vmem:[%s5 + $0x958] sm:$0xff]
        %v2260 = vld [vmem:[%s5 + $0x960] sm:$0xff]
        %v2261 = vld [vmem:[%s5 + $0x968] sm:$0xff]
        %v2262 = vld [vmem:[%s5 + $0x970] sm:$0xff]
        %v2263 = vld [vmem:[%s5 + $0x978] sm:$0xff]
        %v2264 = vld [vmem:[%s5 + $0x980] sm:$0xff]
        %v2265 = vld [vmem:[%s5 + $0x988] sm:$0xff]
        %v2266 = vld [vmem:[%s5 + $0x990] sm:$0xff]
        %v2267 = vld [vmem:[%s5 + $0x998] sm:$0xff]
        %v2268 = vld [vmem:[%s5 + $0x9a0] sm:$0xff]
        %v2269 = vld [vmem:[%s5 + $0x9a8] sm:$0xff]
        %v2270 = vld [vmem:[%s5 + $0x9b0] sm:$0xff]
        %v2271 = vld [vmem:[%s5 + $0x9b8] sm:$0xff]
        %v2272 = vld [vmem:[%s5 + $0x9c0] sm:$0xff]
        %v2273 = vld [vmem:[%s5 + $0x9c8] sm:$0xff]
        %v2274 = vld [vmem:[%s5 + $0x9d0] sm:$0xff]
        %v2275 = vld [vmem:[%s5 + $0x9d8] sm:$0xff]
        %v2276 = vld [vmem:[%s5 + $0x9e0] sm:$0xff]
        %v2277 = vld [vmem:[%s5 + $0x9e8] sm:$0xff]
        %v2278 = vld [vmem:[%s5 + $0x9f0] sm:$0xff]
        %v2279 = vld [vmem:[%s5 + $0x9f8] sm:$0xff]
        %v2280 = vld [vmem:[%s5 + $0xa00] sm:$0xff]
        %v2281 = vld [vmem:[%s5 + $0xa08] sm:$0xff]
        %v2282 = vld [vmem:[%s5 + $0xa10] sm:$0xff]
        %v2283 = vld [vmem:[%s5 + $0xa18] sm:$0xff]
        %v2284 = vld [vmem:[%s5 + $0xa20] sm:$0xff]
        %v2285 = vld [vmem:[%s5 + $0xa28] sm:$0xff]
        %v2286 = vld [vmem:[%s5 + $0xa30] sm:$0xff]
        %v2287 = vld [vmem:[%s5 + $0xa38] sm:$0xff]
        %v2288 = vld [vmem:[%s5 + $0xa40] sm:$0xff]
        %v2289 = vld [vmem:[%s5 + $0xa48] sm:$0xff]
        %v2290 = vld [vmem:[%s5 + $0xa50] sm:$0xff]
        %v2291 = vld [vmem:[%s5 + $0xa58] sm:$0xff]
        %v2292 = vld [vmem:[%s5 + $0xa60] sm:$0xff]
        %v2293 = vld [vmem:[%s5 + $0xa68] sm:$0xff]
        %v2294 = vld [vmem:[%s5 + $0xa70] sm:$0xff]
        %v2295 = vld [vmem:[%s5 + $0xa78] sm:$0xff]
        %v2296 = vld [vmem:[%s5 + $0xa80] sm:$0xff]
        %v2297 = vld [vmem:[%s5 + $0xa88] sm:$0xff]
        %v2298 = vld [vmem:[%s5 + $0xa90] sm:$0xff]
        %v2299 = vld [vmem:[%s5 + $0xa98] sm:$0xff]
        %v2300 = vld [vmem:[%s5 + $0xaa0] sm:$0xff]
        %v2301 = vld [vmem:[%s5 + $0xaa8] sm:$0xff]
        %v2302 = vld [vmem:[%s5 + $0xab0] sm:$0xff]
        %v2303 = vld [vmem:[%s5 + $0xab8] sm:$0xff]
        %v2304 = vld [vmem:[%s5 + $0xac0] sm:$0xff]
        %v2305 = vld [vmem:[%s5 + $0xac8] sm:$0xff]
        %v2306 = vld [vmem:[%s5 + $0xad0] sm:$0xff]
        %v2307 = vld [vmem:[%s5 + $0xad8] sm:$0xff]
        %v2308 = vld [vmem:[%s5 + $0xae0] sm:$0xff]
        %v2309 = vld [vmem:[%s5 + $0xae8] sm:$0xff]
        %v2310 = vld [vmem:[%s5 + $0xaf0] sm:$0xff]
        %v2311 = vld [vmem:[%s5 + $0xaf8] sm:$0xff]
        %v2312 = vld [vmem:[%s5 + $0xb00] sm:$0xff]
        %v2313 = vld [vmem:[%s5 + $0xb08] sm:$0xff]
        %v2314 = vld [vmem:[%s5 + $0xb10] sm:$0xff]
        %v2315 = vld [vmem:[%s5 + $0xb18] sm:$0xff]
        %v2316 = vld [vmem:[%s5 + $0xb20] sm:$0xff]
        %v2317 = vld [vmem:[%s5 + $0xb28] sm:$0xff]
        %v2318 = vld [vmem:[%s5 + $0xb30] sm:$0xff]
        %v2319 = vld [vmem:[%s5 + $0xb38] sm:$0xff]
        %v2320 = vld [vmem:[%s5 + $0xb40] sm:$0xff]
        %v2321 = vld [vmem:[%s5 + $0xb48] sm:$0xff]
        %v2322 = vld [vmem:[%s5 + $0xb50] sm:$0xff]
        %v2323 = vld [vmem:[%s5 + $0xb58] sm:$0xff]
        %v2324 = vld [vmem:[%s5 + $0xb60] sm:$0xff]
        %v2325 = vld [vmem:[%s5 + $0xb68] sm:$0xff]
        %v2326 = vld [vmem:[%s5 + $0xb70] sm:$0xff]
        %v2327 = vld [vmem:[%s5 + $0xb78] sm:$0xff]
        %v2328 = vld [vmem:[%s5 + $0xb80] sm:$0xff]
        %v2329 = vld [vmem:[%s5 + $0xb88] sm:$0xff]
        %v2330 = vld [vmem:[%s5 + $0xb90] sm:$0xff]
        %v2331 = vld [vmem:[%s5 + $0xb98] sm:$0xff]
        %v2332 = vld [vmem:[%s5 + $0xba0] sm:$0xff]
        %v2333 = vld [vmem:[%s5 + $0xba8] sm:$0xff]
        %v2334 = vld [vmem:[%s5 + $0xbb0] sm:$0xff]
        %v2335 = vld [vmem:[%s5 + $0xbb8] sm:$0xff]
        %v2336 = vld [vmem:[%s5 + $0xbc0] sm:$0xff]
        %v2337 = vld [vmem:[%s5 + $0xbc8] sm:$0xff]
        %v2338 = vld [vmem:[%s5 + $0xbd0] sm:$0xff]
        %v2339 = vld [vmem:[%s5 + $0xbd8] sm:$0xff]
        %v2340 = vld [vmem:[%s5 + $0xbe0] sm:$0xff]
        %v2341 = vld [vmem:[%s5 + $0xbe8] sm:$0xff]
        %v2342 = vld [vmem:[%s5 + $0xbf0] sm:$0xff]
        %v2343 = vld [vmem:[%s5 + $0xbf8] sm:$0xff]
        %v2344 = vld [vmem:[%s6] sm:$0xf]
        %v2729 = vunpack.c.l.b16 %v1960
        %v2730 = vunpack.c.h.b16 %v1960
        %v2731 = vunpack.c.l.b16 %v1961
        %v2732 = vunpack.c.h.b16 %v1961
        %v2733 = vunpack.c.l.b16 %v1962
        %v2734 = vunpack.c.h.b16 %v1962
        %v2735 = vunpack.c.l.b16 %v1963
        %v2736 = vunpack.c.h.b16 %v1963
        %v2737 = vunpack.c.l.b16 %v1964
        %v2738 = vunpack.c.h.b16 %v1964
        %v2739 = vunpack.c.l.b16 %v1965
        %v2740 = vunpack.c.h.b16 %v1965
        %v2741 = vunpack.c.l.b16 %v1966
        %v2742 = vunpack.c.h.b16 %v1966
        %v2743 = vunpack.c.l.b16 %v1967
        %v2744 = vunpack.c.h.b16 %v1967
        %v2745 = vunpack.c.l.b16 %v1968
        %v2746 = vunpack.c.h.b16 %v1968
        %v2747 = vunpack.c.l.b16 %v1969
        %v2748 = vunpack.c.h.b16 %v1969
        %v2749 = vunpack.c.l.b16 %v1970
        %v2750 = vunpack.c.h.b16 %v1970
        %v2751 = vunpack.c.l.b16 %v1971
        %v2752 = vunpack.c.h.b16 %v1971
        %v2753 = vunpack.c.l.b16 %v1972
        %v2754 = vunpack.c.h.b16 %v1972
        %v2755 = vunpack.c.l.b16 %v1973
        %v2756 = vunpack.c.h.b16 %v1973
        %v2757 = vunpack.c.l.b16 %v1974
        %v2758 = vunpack.c.h.b16 %v1974
        %v2759 = vunpack.c.l.b16 %v1975
        %v2760 = vunpack.c.h.b16 %v1975
        %v2761 = vunpack.c.l.b16 %v1976
        %v2762 = vunpack.c.h.b16 %v1976
        %v2763 = vunpack.c.l.b16 %v1977
        %v2764 = vunpack.c.h.b16 %v1977
        %v2765 = vunpack.c.l.b16 %v1978
        %v2766 = vunpack.c.h.b16 %v1978
        %v2767 = vunpack.c.l.b16 %v1979
        %v2768 = vunpack.c.h.b16 %v1979
        %v2769 = vunpack.c.l.b16 %v1980
        %v2770 = vunpack.c.h.b16 %v1980
        %v2771 = vunpack.c.l.b16 %v1981
        %v2772 = vunpack.c.h.b16 %v1981
        %v2773 = vunpack.c.l.b16 %v1982
        %v2774 = vunpack.c.h.b16 %v1982
        %v2775 = vunpack.c.l.b16 %v1983
        %v2776 = vunpack.c.h.b16 %v1983
        %v2777 = vunpack.c.l.b16 %v1984
        %v2778 = vunpack.c.h.b16 %v1984
        %v2779 = vunpack.c.l.b16 %v1985
        %v2780 = vunpack.c.h.b16 %v1985
        %v2781 = vunpack.c.l.b16 %v1986
        %v2782 = vunpack.c.h.b16 %v1986
        %v2783 = vunpack.c.l.b16 %v1987
        %v2784 = vunpack.c.h.b16 %v1987
        %v2785 = vunpack.c.l.b16 %v1988
        %v2786 = vunpack.c.h.b16 %v1988
        %v2787 = vunpack.c.l.b16 %v1989
        %v2788 = vunpack.c.h.b16 %v1989
        %v2789 = vunpack.c.l.b16 %v1990
        %v2790 = vunpack.c.h.b16 %v1990
        %v2791 = vunpack.c.l.b16 %v1991
        %v2792 = vunpack.c.h.b16 %v1991
        %v2793 = vunpack.c.l.b16 %v1992
        %v2794 = vunpack.c.h.b16 %v1992
        %v2795 = vunpack.c.l.b16 %v1993
        %v2796 = vunpack.c.h.b16 %v1993
        %v2797 = vunpack.c.l.b16 %v1994
        %v2798 = vunpack.c.h.b16 %v1994
        %v2799 = vunpack.c.l.b16 %v1995
        %v2800 = vunpack.c.h.b16 %v1995
        %v2801 = vunpack.c.l.b16 %v1996
        %v2802 = vunpack.c.h.b16 %v1996
        %v2803 = vunpack.c.l.b16 %v1997
        %v2804 = vunpack.c.h.b16 %v1997
        %v2805 = vunpack.c.l.b16 %v1998
        %v2806 = vunpack.c.h.b16 %v1998
        %v2807 = vunpack.c.l.b16 %v1999
        %v2808 = vunpack.c.h.b16 %v1999
        %v2809 = vunpack.c.l.b16 %v2000
        %v2810 = vunpack.c.h.b16 %v2000
        %v2811 = vunpack.c.l.b16 %v2001
        %v2812 = vunpack.c.h.b16 %v2001
        %v2813 = vunpack.c.l.b16 %v2002
        %v2814 = vunpack.c.h.b16 %v2002
        %v2815 = vunpack.c.l.b16 %v2003
        %v2816 = vunpack.c.h.b16 %v2003
        %v2817 = vunpack.c.l.b16 %v2004
        %v2818 = vunpack.c.h.b16 %v2004
        %v2819 = vunpack.c.l.b16 %v2005
        %v2820 = vunpack.c.h.b16 %v2005
        %v2821 = vunpack.c.l.b16 %v2006
        %v2822 = vunpack.c.h.b16 %v2006
        %v2823 = vunpack.c.l.b16 %v2007
        %v2824 = vunpack.c.h.b16 %v2007
        %v2825 = vunpack.c.l.b16 %v2008
        %v2826 = vunpack.c.h.b16 %v2008
        %v2827 = vunpack.c.l.b16 %v2009
        %v2828 = vunpack.c.h.b16 %v2009
        %v2829 = vunpack.c.l.b16 %v2010
        %v2830 = vunpack.c.h.b16 %v2010
        %v2831 = vunpack.c.l.b16 %v2011
        %v2832 = vunpack.c.h.b16 %v2011
        %v2833 = vunpack.c.l.b16 %v2012
        %v2834 = vunpack.c.h.b16 %v2012
        %v2835 = vunpack.c.l.b16 %v2013
        %v2836 = vunpack.c.h.b16 %v2013
        %v2837 = vunpack.c.l.b16 %v2014
        %v2838 = vunpack.c.h.b16 %v2014
        %v2839 = vunpack.c.l.b16 %v2015
        %v2840 = vunpack.c.h.b16 %v2015
        %v2841 = vunpack.c.l.b16 %v2016
        %v2842 = vunpack.c.h.b16 %v2016
        %v2843 = vunpack.c.l.b16 %v2017
        %v2844 = vunpack.c.h.b16 %v2017
        %v2845 = vunpack.c.l.b16 %v2018
        %v2846 = vunpack.c.h.b16 %v2018
        %v2847 = vunpack.c.l.b16 %v2019
        %v2848 = vunpack.c.h.b16 %v2019
        %v2849 = vunpack.c.l.b16 %v2020
        %v2850 = vunpack.c.h.b16 %v2020
        %v2851 = vunpack.c.l.b16 %v2021
        %v2852 = vunpack.c.h.b16 %v2021
        %v2853 = vunpack.c.l.b16 %v2022
        %v2854 = vunpack.c.h.b16 %v2022
        %v2855 = vunpack.c.l.b16 %v2023
        %v2856 = vunpack.c.h.b16 %v2023
        %v2857 = vunpack.c.l.b16 %v2024
        %v2858 = vunpack.c.h.b16 %v2024
        %v2859 = vunpack.c.l.b16 %v2025
        %v2860 = vunpack.c.h.b16 %v2025
        %v2861 = vunpack.c.l.b16 %v2026
        %v2862 = vunpack.c.h.b16 %v2026
        %v2863 = vunpack.c.l.b16 %v2027
        %v2864 = vunpack.c.h.b16 %v2027
        %v2865 = vunpack.c.l.b16 %v2028
        %v2866 = vunpack.c.h.b16 %v2028
        %v2867 = vunpack.c.l.b16 %v2029
        %v2868 = vunpack.c.h.b16 %v2029
        %v2869 = vunpack.c.l.b16 %v2030
        %v2870 = vunpack.c.h.b16 %v2030
        %v2871 = vunpack.c.l.b16 %v2031
        %v2872 = vunpack.c.h.b16 %v2031
        %v2873 = vunpack.c.l.b16 %v2032
        %v2874 = vunpack.c.h.b16 %v2032
        %v2875 = vunpack.c.l.b16 %v2033
        %v2876 = vunpack.c.h.b16 %v2033
        %v2877 = vunpack.c.l.b16 %v2034
        %v2878 = vunpack.c.h.b16 %v2034
        %v2879 = vunpack.c.l.b16 %v2035
        %v2880 = vunpack.c.h.b16 %v2035
        %v2881 = vunpack.c.l.b16 %v2036
        %v2882 = vunpack.c.h.b16 %v2036
        %v2883 = vunpack.c.l.b16 %v2037
        %v2884 = vunpack.c.h.b16 %v2037
        %v2885 = vunpack.c.l.b16 %v2038
        %v2886 = vunpack.c.h.b16 %v2038
        %v2887 = vunpack.c.l.b16 %v2039
        %v2888 = vunpack.c.h.b16 %v2039
        %v2889 = vunpack.c.l.b16 %v2040
        %v2890 = vunpack.c.h.b16 %v2040
        %v2891 = vunpack.c.l.b16 %v2041
        %v2892 = vunpack.c.h.b16 %v2041
        %v2893 = vunpack.c.l.b16 %v2042
        %v2894 = vunpack.c.h.b16 %v2042
        %v2895 = vunpack.c.l.b16 %v2043
        %v2896 = vunpack.c.h.b16 %v2043
        %v2897 = vunpack.c.l.b16 %v2044
        %v2898 = vunpack.c.h.b16 %v2044
        %v2899 = vunpack.c.l.b16 %v2045
        %v2900 = vunpack.c.h.b16 %v2045
        %v2901 = vunpack.c.l.b16 %v2046
        %v2902 = vunpack.c.h.b16 %v2046
        %v2903 = vunpack.c.l.b16 %v2047
        %v2904 = vunpack.c.h.b16 %v2047
        %v2905 = vunpack.c.l.b16 %v2048
        %v2906 = vunpack.c.h.b16 %v2048
        %v2907 = vunpack.c.l.b16 %v2049
        %v2908 = vunpack.c.h.b16 %v2049
        %v2909 = vunpack.c.l.b16 %v2050
        %v2910 = vunpack.c.h.b16 %v2050
        %v2911 = vunpack.c.l.b16 %v2051
        %v2912 = vunpack.c.h.b16 %v2051
        %v2913 = vunpack.c.l.b16 %v2052
        %v2914 = vunpack.c.h.b16 %v2052
        %v2915 = vunpack.c.l.b16 %v2053
        %v2916 = vunpack.c.h.b16 %v2053
        %v2917 = vunpack.c.l.b16 %v2054
        %v2918 = vunpack.c.h.b16 %v2054
        %v2919 = vunpack.c.l.b16 %v2055
        %v2920 = vunpack.c.h.b16 %v2055
        %v2921 = vunpack.c.l.b16 %v2056
        %v2922 = vunpack.c.h.b16 %v2056
        %v2923 = vunpack.c.l.b16 %v2057
        %v2924 = vunpack.c.h.b16 %v2057
        %v2925 = vunpack.c.l.b16 %v2058
        %v2926 = vunpack.c.h.b16 %v2058
        %v2927 = vunpack.c.l.b16 %v2059
        %v2928 = vunpack.c.h.b16 %v2059
        %v2929 = vunpack.c.l.b16 %v2060
        %v2930 = vunpack.c.h.b16 %v2060
        %v2931 = vunpack.c.l.b16 %v2061
        %v2932 = vunpack.c.h.b16 %v2061
        %v2933 = vunpack.c.l.b16 %v2062
        %v2934 = vunpack.c.h.b16 %v2062
        %v2935 = vunpack.c.l.b16 %v2063
        %v2936 = vunpack.c.h.b16 %v2063
        %v2937 = vunpack.c.l.b16 %v2064
        %v2938 = vunpack.c.h.b16 %v2064
        %v2939 = vunpack.c.l.b16 %v2065
        %v2940 = vunpack.c.h.b16 %v2065
        %v2941 = vunpack.c.l.b16 %v2066
        %v2942 = vunpack.c.h.b16 %v2066
        %v2943 = vunpack.c.l.b16 %v2067
        %v2944 = vunpack.c.h.b16 %v2067
        %v2945 = vunpack.c.l.b16 %v2068
        %v2946 = vunpack.c.h.b16 %v2068
        %v2947 = vunpack.c.l.b16 %v2069
        %v2948 = vunpack.c.h.b16 %v2069
        %v2949 = vunpack.c.l.b16 %v2070
        %v2950 = vunpack.c.h.b16 %v2070
        %v2951 = vunpack.c.l.b16 %v2071
        %v2952 = vunpack.c.h.b16 %v2071
        %v2953 = vunpack.c.l.b16 %v2072
        %v2954 = vunpack.c.h.b16 %v2072
        %v2955 = vunpack.c.l.b16 %v2073
        %v2956 = vunpack.c.h.b16 %v2073
        %v2957 = vunpack.c.l.b16 %v2074
        %v2958 = vunpack.c.h.b16 %v2074
        %v2959 = vunpack.c.l.b16 %v2075
        %v2960 = vunpack.c.h.b16 %v2075
        %v2961 = vunpack.c.l.b16 %v2076
        %v2962 = vunpack.c.h.b16 %v2076
        %v2963 = vunpack.c.l.b16 %v2077
        %v2964 = vunpack.c.h.b16 %v2077
        %v2965 = vunpack.c.l.b16 %v2078
        %v2966 = vunpack.c.h.b16 %v2078
        %v2967 = vunpack.c.l.b16 %v2079
        %v2968 = vunpack.c.h.b16 %v2079
        %v2969 = vunpack.c.l.b16 %v2080
        %v2970 = vunpack.c.h.b16 %v2080
        %v2971 = vunpack.c.l.b16 %v2081
        %v2972 = vunpack.c.h.b16 %v2081
        %v2973 = vunpack.c.l.b16 %v2082
        %v2974 = vunpack.c.h.b16 %v2082
        %v2975 = vunpack.c.l.b16 %v2083
        %v2976 = vunpack.c.h.b16 %v2083
        %v2977 = vunpack.c.l.b16 %v2084
        %v2978 = vunpack.c.h.b16 %v2084
        %v2979 = vunpack.c.l.b16 %v2085
        %v2980 = vunpack.c.h.b16 %v2085
        %v2981 = vunpack.c.l.b16 %v2086
        %v2982 = vunpack.c.h.b16 %v2086
        %v2983 = vunpack.c.l.b16 %v2087
        %v2984 = vunpack.c.h.b16 %v2087
        %v2985 = vunpack.c.l.b16 %v2088
        %v2986 = vunpack.c.h.b16 %v2088
        %v2987 = vunpack.c.l.b16 %v2089
        %v2988 = vunpack.c.h.b16 %v2089
        %v2989 = vunpack.c.l.b16 %v2090
        %v2990 = vunpack.c.h.b16 %v2090
        %v2991 = vunpack.c.l.b16 %v2091
        %v2992 = vunpack.c.h.b16 %v2091
        %v2993 = vunpack.c.l.b16 %v2092
        %v2994 = vunpack.c.h.b16 %v2092
        %v2995 = vunpack.c.l.b16 %v2093
        %v2996 = vunpack.c.h.b16 %v2093
        %v2997 = vunpack.c.l.b16 %v2094
        %v2998 = vunpack.c.h.b16 %v2094
        %v2999 = vunpack.c.l.b16 %v2095
        %v3000 = vunpack.c.h.b16 %v2095
        %v3001 = vunpack.c.l.b16 %v2096
        %v3002 = vunpack.c.h.b16 %v2096
        %v3003 = vunpack.c.l.b16 %v2097
        %v3004 = vunpack.c.h.b16 %v2097
        %v3005 = vunpack.c.l.b16 %v2098
        %v3006 = vunpack.c.h.b16 %v2098
        %v3007 = vunpack.c.l.b16 %v2099
        %v3008 = vunpack.c.h.b16 %v2099
        %v3009 = vunpack.c.l.b16 %v2100
        %v3010 = vunpack.c.h.b16 %v2100
        %v3011 = vunpack.c.l.b16 %v2101
        %v3012 = vunpack.c.h.b16 %v2101
        %v3013 = vunpack.c.l.b16 %v2102
        %v3014 = vunpack.c.h.b16 %v2102
        %v3015 = vunpack.c.l.b16 %v2103
        %v3016 = vunpack.c.h.b16 %v2103
        %v3017 = vunpack.c.l.b16 %v2104
        %v3018 = vunpack.c.h.b16 %v2104
        %v3019 = vunpack.c.l.b16 %v2105
        %v3020 = vunpack.c.h.b16 %v2105
        %v3021 = vunpack.c.l.b16 %v2106
        %v3022 = vunpack.c.h.b16 %v2106
        %v3023 = vunpack.c.l.b16 %v2107
        %v3024 = vunpack.c.h.b16 %v2107
        %v3025 = vunpack.c.l.b16 %v2108
        %v3026 = vunpack.c.h.b16 %v2108
        %v3027 = vunpack.c.l.b16 %v2109
        %v3028 = vunpack.c.h.b16 %v2109
        %v3029 = vunpack.c.l.b16 %v2110
        %v3030 = vunpack.c.h.b16 %v2110
        %v3031 = vunpack.c.l.b16 %v2111
        %v3032 = vunpack.c.h.b16 %v2111
        %v3033 = vunpack.c.l.b16 %v2112
        %v3034 = vunpack.c.h.b16 %v2112
        %v3035 = vunpack.c.l.b16 %v2113
        %v3036 = vunpack.c.h.b16 %v2113
        %v3037 = vunpack.c.l.b16 %v2114
        %v3038 = vunpack.c.h.b16 %v2114
        %v3039 = vunpack.c.l.b16 %v2115
        %v3040 = vunpack.c.h.b16 %v2115
        %v3041 = vunpack.c.l.b16 %v2116
        %v3042 = vunpack.c.h.b16 %v2116
        %v3043 = vunpack.c.l.b16 %v2117
        %v3044 = vunpack.c.h.b16 %v2117
        %v3045 = vunpack.c.l.b16 %v2118
        %v3046 = vunpack.c.h.b16 %v2118
        %v3047 = vunpack.c.l.b16 %v2119
        %v3048 = vunpack.c.h.b16 %v2119
        %v3049 = vunpack.c.l.b16 %v2120
        %v3050 = vunpack.c.h.b16 %v2120
        %v3051 = vunpack.c.l.b16 %v2121
        %v3052 = vunpack.c.h.b16 %v2121
        %v3053 = vunpack.c.l.b16 %v2122
        %v3054 = vunpack.c.h.b16 %v2122
        %v3055 = vunpack.c.l.b16 %v2123
        %v3056 = vunpack.c.h.b16 %v2123
        %v3057 = vunpack.c.l.b16 %v2124
        %v3058 = vunpack.c.h.b16 %v2124
        %v3059 = vunpack.c.l.b16 %v2125
        %v3060 = vunpack.c.h.b16 %v2125
        %v3061 = vunpack.c.l.b16 %v2126
        %v3062 = vunpack.c.h.b16 %v2126
        %v3063 = vunpack.c.l.b16 %v2127
        %v3064 = vunpack.c.h.b16 %v2127
        %v3065 = vunpack.c.l.b16 %v2128
        %v3066 = vunpack.c.h.b16 %v2128
        %v3067 = vunpack.c.l.b16 %v2129
        %v3068 = vunpack.c.h.b16 %v2129
        %v3069 = vunpack.c.l.b16 %v2130
        %v3070 = vunpack.c.h.b16 %v2130
        %v3071 = vunpack.c.l.b16 %v2131
        %v3072 = vunpack.c.h.b16 %v2131
        %v3073 = vunpack.c.l.b16 %v2132
        %v3074 = vunpack.c.h.b16 %v2132
        %v3075 = vunpack.c.l.b16 %v2133
        %v3076 = vunpack.c.h.b16 %v2133
        %v3077 = vunpack.c.l.b16 %v2134
        %v3078 = vunpack.c.h.b16 %v2134
        %v3079 = vunpack.c.l.b16 %v2135
        %v3080 = vunpack.c.h.b16 %v2135
        %v3081 = vunpack.c.l.b16 %v2136
        %v3082 = vunpack.c.h.b16 %v2136
        %v3083 = vunpack.c.l.b16 %v2137
        %v3084 = vunpack.c.h.b16 %v2137
        %v3085 = vunpack.c.l.b16 %v2138
        %v3086 = vunpack.c.h.b16 %v2138
        %v3087 = vunpack.c.l.b16 %v2139
        %v3088 = vunpack.c.h.b16 %v2139
        %v3089 = vunpack.c.l.b16 %v2140
        %v3090 = vunpack.c.h.b16 %v2140
        %v3091 = vunpack.c.l.b16 %v2141
        %v3092 = vunpack.c.h.b16 %v2141
        %v3093 = vunpack.c.l.b16 %v2142
        %v3094 = vunpack.c.h.b16 %v2142
        %v3095 = vunpack.c.l.b16 %v2143
        %v3096 = vunpack.c.h.b16 %v2143
        %v3097 = vunpack.c.l.b16 %v2144
        %v3098 = vunpack.c.h.b16 %v2144
        %v3099 = vunpack.c.l.b16 %v2145
        %v3100 = vunpack.c.h.b16 %v2145
        %v3101 = vunpack.c.l.b16 %v2146
        %v3102 = vunpack.c.h.b16 %v2146
        %v3103 = vunpack.c.l.b16 %v2147
        %v3104 = vunpack.c.h.b16 %v2147
        %v3105 = vunpack.c.l.b16 %v2148
        %v3106 = vunpack.c.h.b16 %v2148
        %v3107 = vunpack.c.l.b16 %v2149
        %v3108 = vunpack.c.h.b16 %v2149
        %v3109 = vunpack.c.l.b16 %v2150
        %v3110 = vunpack.c.h.b16 %v2150
        %v3111 = vunpack.c.l.b16 %v2151
        %v3112 = vunpack.c.h.b16 %v2151
        %v3113 = vunpack.c.l.b16 %v2152
        %v3114 = vunpack.c.h.b16 %v2152
        %v3115 = vunpack.c.l.b16 %v2153
        %v3116 = vunpack.c.h.b16 %v2153
        %v3117 = vunpack.c.l.b16 %v2154
        %v3118 = vunpack.c.h.b16 %v2154
        %v3119 = vunpack.c.l.b16 %v2155
        %v3120 = vunpack.c.h.b16 %v2155
        %v3121 = vunpack.c.l.b16 %v2156
        %v3122 = vunpack.c.h.b16 %v2156
        %v3123 = vunpack.c.l.b16 %v2157
        %v3124 = vunpack.c.h.b16 %v2157
        %v3125 = vunpack.c.l.b16 %v2158
        %v3126 = vunpack.c.h.b16 %v2158
        %v3127 = vunpack.c.l.b16 %v2159
        %v3128 = vunpack.c.h.b16 %v2159
        %v3129 = vunpack.c.l.b16 %v2160
        %v3130 = vunpack.c.h.b16 %v2160
        %v3131 = vunpack.c.l.b16 %v2161
        %v3132 = vunpack.c.h.b16 %v2161
        %v3133 = vunpack.c.l.b16 %v2162
        %v3134 = vunpack.c.h.b16 %v2162
        %v3135 = vunpack.c.l.b16 %v2163
        %v3136 = vunpack.c.h.b16 %v2163
        %v3137 = vunpack.c.l.b16 %v2164
        %v3138 = vunpack.c.h.b16 %v2164
        %v3139 = vunpack.c.l.b16 %v2165
        %v3140 = vunpack.c.h.b16 %v2165
        %v3141 = vunpack.c.l.b16 %v2166
        %v3142 = vunpack.c.h.b16 %v2166
        %v3143 = vunpack.c.l.b16 %v2167
        %v3144 = vunpack.c.h.b16 %v2167
        %v3145 = vunpack.c.l.b16 %v2168
        %v3146 = vunpack.c.h.b16 %v2168
        %v3147 = vunpack.c.l.b16 %v2169
        %v3148 = vunpack.c.h.b16 %v2169
        %v3149 = vunpack.c.l.b16 %v2170
        %v3150 = vunpack.c.h.b16 %v2170
        %v3151 = vunpack.c.l.b16 %v2171
        %v3152 = vunpack.c.h.b16 %v2171
        %v3153 = vunpack.c.l.b16 %v2172
        %v3154 = vunpack.c.h.b16 %v2172
        %v3155 = vunpack.c.l.b16 %v2173
        %v3156 = vunpack.c.h.b16 %v2173
        %v3157 = vunpack.c.l.b16 %v2174
        %v3158 = vunpack.c.h.b16 %v2174
        %v3159 = vunpack.c.l.b16 %v2175
        %v3160 = vunpack.c.h.b16 %v2175
        %v3161 = vunpack.c.l.b16 %v2176
        %v3162 = vunpack.c.h.b16 %v2176
        %v3163 = vunpack.c.l.b16 %v2177
        %v3164 = vunpack.c.h.b16 %v2177
        %v3165 = vunpack.c.l.b16 %v2178
        %v3166 = vunpack.c.h.b16 %v2178
        %v3167 = vunpack.c.l.b16 %v2179
        %v3168 = vunpack.c.h.b16 %v2179
        %v3169 = vunpack.c.l.b16 %v2180
        %v3170 = vunpack.c.h.b16 %v2180
        %v3171 = vunpack.c.l.b16 %v2181
        %v3172 = vunpack.c.h.b16 %v2181
        %v3173 = vunpack.c.l.b16 %v2182
        %v3174 = vunpack.c.h.b16 %v2182
        %v3175 = vunpack.c.l.b16 %v2183
        %v3176 = vunpack.c.h.b16 %v2183
        %v3177 = vunpack.c.l.b16 %v2184
        %v3178 = vunpack.c.h.b16 %v2184
        %v3179 = vunpack.c.l.b16 %v2185
        %v3180 = vunpack.c.h.b16 %v2185
        %v3181 = vunpack.c.l.b16 %v2186
        %v3182 = vunpack.c.h.b16 %v2186
        %v3183 = vunpack.c.l.b16 %v2187
        %v3184 = vunpack.c.h.b16 %v2187
        %v3185 = vunpack.c.l.b16 %v2188
        %v3186 = vunpack.c.h.b16 %v2188
        %v3187 = vunpack.c.l.b16 %v2189
        %v3188 = vunpack.c.h.b16 %v2189
        %v3189 = vunpack.c.l.b16 %v2190
        %v3190 = vunpack.c.h.b16 %v2190
        %v3191 = vunpack.c.l.b16 %v2191
        %v3192 = vunpack.c.h.b16 %v2191
        %v3193 = vunpack.c.l.b16 %v2192
        %v3194 = vunpack.c.h.b16 %v2192
        %v3195 = vunpack.c.l.b16 %v2193
        %v3196 = vunpack.c.h.b16 %v2193
        %v3197 = vunpack.c.l.b16 %v2194
        %v3198 = vunpack.c.h.b16 %v2194
        %v3199 = vunpack.c.l.b16 %v2195
        %v3200 = vunpack.c.h.b16 %v2195
        %v3201 = vunpack.c.l.b16 %v2196
        %v3202 = vunpack.c.h.b16 %v2196
        %v3203 = vunpack.c.l.b16 %v2197
        %v3204 = vunpack.c.h.b16 %v2197
        %v3205 = vunpack.c.l.b16 %v2198
        %v3206 = vunpack.c.h.b16 %v2198
        %v3207 = vunpack.c.l.b16 %v2199
        %v3208 = vunpack.c.h.b16 %v2199
        %v3209 = vunpack.c.l.b16 %v2200
        %v3210 = vunpack.c.h.b16 %v2200
        %v3211 = vunpack.c.l.b16 %v2201
        %v3212 = vunpack.c.h.b16 %v2201
        %v3213 = vunpack.c.l.b16 %v2202
        %v3214 = vunpack.c.h.b16 %v2202
        %v3215 = vunpack.c.l.b16 %v2203
        %v3216 = vunpack.c.h.b16 %v2203
        %v3217 = vunpack.c.l.b16 %v2204
        %v3218 = vunpack.c.h.b16 %v2204
        %v3219 = vunpack.c.l.b16 %v2205
        %v3220 = vunpack.c.h.b16 %v2205
        %v3221 = vunpack.c.l.b16 %v2206
        %v3222 = vunpack.c.h.b16 %v2206
        %v3223 = vunpack.c.l.b16 %v2207
        %v3224 = vunpack.c.h.b16 %v2207
        %v3225 = vunpack.c.l.b16 %v2208
        %v3226 = vunpack.c.h.b16 %v2208
        %v3227 = vunpack.c.l.b16 %v2209
        %v3228 = vunpack.c.h.b16 %v2209
        %v3229 = vunpack.c.l.b16 %v2210
        %v3230 = vunpack.c.h.b16 %v2210
        %v3231 = vunpack.c.l.b16 %v2211
        %v3232 = vunpack.c.h.b16 %v2211
        %v3233 = vunpack.c.l.b16 %v2212
        %v3234 = vunpack.c.h.b16 %v2212
        %v3235 = vunpack.c.l.b16 %v2213
        %v3236 = vunpack.c.h.b16 %v2213
        %v3237 = vunpack.c.l.b16 %v2214
        %v3238 = vunpack.c.h.b16 %v2214
        %v3239 = vunpack.c.l.b16 %v2215
        %v3240 = vunpack.c.h.b16 %v2215
        %v3241 = vunpack.c.l.b16 %v2216
        %v3242 = vunpack.c.h.b16 %v2216
        %v3243 = vunpack.c.l.b16 %v2217
        %v3244 = vunpack.c.h.b16 %v2217
        %v3245 = vunpack.c.l.b16 %v2218
        %v3246 = vunpack.c.h.b16 %v2218
        %v3247 = vunpack.c.l.b16 %v2219
        %v3248 = vunpack.c.h.b16 %v2219
        %v3249 = vunpack.c.l.b16 %v2220
        %v3250 = vunpack.c.h.b16 %v2220
        %v3251 = vunpack.c.l.b16 %v2221
        %v3252 = vunpack.c.h.b16 %v2221
        %v3253 = vunpack.c.l.b16 %v2222
        %v3254 = vunpack.c.h.b16 %v2222
        %v3255 = vunpack.c.l.b16 %v2223
        %v3256 = vunpack.c.h.b16 %v2223
        %v3257 = vunpack.c.l.b16 %v2224
        %v3258 = vunpack.c.h.b16 %v2224
        %v3259 = vunpack.c.l.b16 %v2225
        %v3260 = vunpack.c.h.b16 %v2225
        %v3261 = vunpack.c.l.b16 %v2226
        %v3262 = vunpack.c.h.b16 %v2226
        %v3263 = vunpack.c.l.b16 %v2227
        %v3264 = vunpack.c.h.b16 %v2227
        %v3265 = vunpack.c.l.b16 %v2228
        %v3266 = vunpack.c.h.b16 %v2228
        %v3267 = vunpack.c.l.b16 %v2229
        %v3268 = vunpack.c.h.b16 %v2229
        %v3269 = vunpack.c.l.b16 %v2230
        %v3270 = vunpack.c.h.b16 %v2230
        %v3271 = vunpack.c.l.b16 %v2231
        %v3272 = vunpack.c.h.b16 %v2231
        %v3273 = vunpack.c.l.b16 %v2232
        %v3274 = vunpack.c.h.b16 %v2232
        %v3275 = vunpack.c.l.b16 %v2233
        %v3276 = vunpack.c.h.b16 %v2233
        %v3277 = vunpack.c.l.b16 %v2234
        %v3278 = vunpack.c.h.b16 %v2234
        %v3279 = vunpack.c.l.b16 %v2235
        %v3280 = vunpack.c.h.b16 %v2235
        %v3281 = vunpack.c.l.b16 %v2236
        %v3282 = vunpack.c.h.b16 %v2236
        %v3283 = vunpack.c.l.b16 %v2237
        %v3284 = vunpack.c.h.b16 %v2237
        %v3285 = vunpack.c.l.b16 %v2238
        %v3286 = vunpack.c.h.b16 %v2238
        %v3287 = vunpack.c.l.b16 %v2239
        %v3288 = vunpack.c.h.b16 %v2239
        %v3289 = vunpack.c.l.b16 %v2240
        %v3290 = vunpack.c.h.b16 %v2240
        %v3291 = vunpack.c.l.b16 %v2241
        %v3292 = vunpack.c.h.b16 %v2241
        %v3293 = vunpack.c.l.b16 %v2242
        %v3294 = vunpack.c.h.b16 %v2242
        %v3295 = vunpack.c.l.b16 %v2243
        %v3296 = vunpack.c.h.b16 %v2243
        %v3297 = vunpack.c.l.b16 %v2244
        %v3298 = vunpack.c.h.b16 %v2244
        %v3299 = vunpack.c.l.b16 %v2245
        %v3300 = vunpack.c.h.b16 %v2245
        %v3301 = vunpack.c.l.b16 %v2246
        %v3302 = vunpack.c.h.b16 %v2246
        %v3303 = vunpack.c.l.b16 %v2247
        %v3304 = vunpack.c.h.b16 %v2247
        %v3305 = vunpack.c.l.b16 %v2248
        %v3306 = vunpack.c.h.b16 %v2248
        %v3307 = vunpack.c.l.b16 %v2249
        %v3308 = vunpack.c.h.b16 %v2249
        %v3309 = vunpack.c.l.b16 %v2250
        %v3310 = vunpack.c.h.b16 %v2250
        %v3311 = vunpack.c.l.b16 %v2251
        %v3312 = vunpack.c.h.b16 %v2251
        %v3313 = vunpack.c.l.b16 %v2252
        %v3314 = vunpack.c.h.b16 %v2252
        %v3315 = vunpack.c.l.b16 %v2253
        %v3316 = vunpack.c.h.b16 %v2253
        %v3317 = vunpack.c.l.b16 %v2254
        %v3318 = vunpack.c.h.b16 %v2254
        %v3319 = vunpack.c.l.b16 %v2255
        %v3320 = vunpack.c.h.b16 %v2255
        %v3321 = vunpack.c.l.b16 %v2256
        %v3322 = vunpack.c.h.b16 %v2256
        %v3323 = vunpack.c.l.b16 %v2257
        %v3324 = vunpack.c.h.b16 %v2257
        %v3325 = vunpack.c.l.b16 %v2258
        %v3326 = vunpack.c.h.b16 %v2258
        %v3327 = vunpack.c.l.b16 %v2259
        %v3328 = vunpack.c.h.b16 %v2259
        %v3329 = vunpack.c.l.b16 %v2260
        %v3330 = vunpack.c.h.b16 %v2260
        %v3331 = vunpack.c.l.b16 %v2261
        %v3332 = vunpack.c.h.b16 %v2261
        %v3333 = vunpack.c.l.b16 %v2262
        %v3334 = vunpack.c.h.b16 %v2262
        %v3335 = vunpack.c.l.b16 %v2263
        %v3336 = vunpack.c.h.b16 %v2263
        %v3337 = vunpack.c.l.b16 %v2264
        %v3338 = vunpack.c.h.b16 %v2264
        %v3339 = vunpack.c.l.b16 %v2265
        %v3340 = vunpack.c.h.b16 %v2265
        %v3341 = vunpack.c.l.b16 %v2266
        %v3342 = vunpack.c.h.b16 %v2266
        %v3343 = vunpack.c.l.b16 %v2267
        %v3344 = vunpack.c.h.b16 %v2267
        %v3345 = vunpack.c.l.b16 %v2268
        %v3346 = vunpack.c.h.b16 %v2268
        %v3347 = vunpack.c.l.b16 %v2269
        %v3348 = vunpack.c.h.b16 %v2269
        %v3349 = vunpack.c.l.b16 %v2270
        %v3350 = vunpack.c.h.b16 %v2270
        %v3351 = vunpack.c.l.b16 %v2271
        %v3352 = vunpack.c.h.b16 %v2271
        %v3353 = vunpack.c.l.b16 %v2272
        %v3354 = vunpack.c.h.b16 %v2272
        %v3355 = vunpack.c.l.b16 %v2273
        %v3356 = vunpack.c.h.b16 %v2273
        %v3357 = vunpack.c.l.b16 %v2274
        %v3358 = vunpack.c.h.b16 %v2274
        %v3359 = vunpack.c.l.b16 %v2275
        %v3360 = vunpack.c.h.b16 %v2275
        %v3361 = vunpack.c.l.b16 %v2276
        %v3362 = vunpack.c.h.b16 %v2276
        %v3363 = vunpack.c.l.b16 %v2277
        %v3364 = vunpack.c.h.b16 %v2277
        %v3365 = vunpack.c.l.b16 %v2278
        %v3366 = vunpack.c.h.b16 %v2278
        %v3367 = vunpack.c.l.b16 %v2279
        %v3368 = vunpack.c.h.b16 %v2279
        %v3369 = vunpack.c.l.b16 %v2280
        %v3370 = vunpack.c.h.b16 %v2280
        %v3371 = vunpack.c.l.b16 %v2281
        %v3372 = vunpack.c.h.b16 %v2281
        %v3373 = vunpack.c.l.b16 %v2282
        %v3374 = vunpack.c.h.b16 %v2282
        %v3375 = vunpack.c.l.b16 %v2283
        %v3376 = vunpack.c.h.b16 %v2283
        %v3377 = vunpack.c.l.b16 %v2284
        %v3378 = vunpack.c.h.b16 %v2284
        %v3379 = vunpack.c.l.b16 %v2285
        %v3380 = vunpack.c.h.b16 %v2285
        %v3381 = vunpack.c.l.b16 %v2286
        %v3382 = vunpack.c.h.b16 %v2286
        %v3383 = vunpack.c.l.b16 %v2287
        %v3384 = vunpack.c.h.b16 %v2287
        %v3385 = vunpack.c.l.b16 %v2288
        %v3386 = vunpack.c.h.b16 %v2288
        %v3387 = vunpack.c.l.b16 %v2289
        %v3388 = vunpack.c.h.b16 %v2289
        %v3389 = vunpack.c.l.b16 %v2290
        %v3390 = vunpack.c.h.b16 %v2290
        %v3391 = vunpack.c.l.b16 %v2291
        %v3392 = vunpack.c.h.b16 %v2291
        %v3393 = vunpack.c.l.b16 %v2292
        %v3394 = vunpack.c.h.b16 %v2292
        %v3395 = vunpack.c.l.b16 %v2293
        %v3396 = vunpack.c.h.b16 %v2293
        %v3397 = vunpack.c.l.b16 %v2294
        %v3398 = vunpack.c.h.b16 %v2294
        %v3399 = vunpack.c.l.b16 %v2295
        %v3400 = vunpack.c.h.b16 %v2295
        %v3401 = vunpack.c.l.b16 %v2296
        %v3402 = vunpack.c.h.b16 %v2296
        %v3403 = vunpack.c.l.b16 %v2297
        %v3404 = vunpack.c.h.b16 %v2297
        %v3405 = vunpack.c.l.b16 %v2298
        %v3406 = vunpack.c.h.b16 %v2298
        %v3407 = vunpack.c.l.b16 %v2299
        %v3408 = vunpack.c.h.b16 %v2299
        %v3409 = vunpack.c.l.b16 %v2300
        %v3410 = vunpack.c.h.b16 %v2300
        %v3411 = vunpack.c.l.b16 %v2301
        %v3412 = vunpack.c.h.b16 %v2301
        %v3413 = vunpack.c.l.b16 %v2302
        %v3414 = vunpack.c.h.b16 %v2302
        %v3415 = vunpack.c.l.b16 %v2303
        %v3416 = vunpack.c.h.b16 %v2303
        %v3417 = vunpack.c.l.b16 %v2304
        %v3418 = vunpack.c.h.b16 %v2304
        %v3419 = vunpack.c.l.b16 %v2305
        %v3420 = vunpack.c.h.b16 %v2305
        %v3421 = vunpack.c.l.b16 %v2306
        %v3422 = vunpack.c.h.b16 %v2306
        %v3423 = vunpack.c.l.b16 %v2307
        %v3424 = vunpack.c.h.b16 %v2307
        %v3425 = vunpack.c.l.b16 %v2308
        %v3426 = vunpack.c.h.b16 %v2308
        %v3427 = vunpack.c.l.b16 %v2309
        %v3428 = vunpack.c.h.b16 %v2309
        %v3429 = vunpack.c.l.b16 %v2310
        %v3430 = vunpack.c.h.b16 %v2310
        %v3431 = vunpack.c.l.b16 %v2311
        %v3432 = vunpack.c.h.b16 %v2311
        %v3433 = vunpack.c.l.b16 %v2312
        %v3434 = vunpack.c.h.b16 %v2312
        %v3435 = vunpack.c.l.b16 %v2313
        %v3436 = vunpack.c.h.b16 %v2313
        %v3437 = vunpack.c.l.b16 %v2314
        %v3438 = vunpack.c.h.b16 %v2314
        %v3439 = vunpack.c.l.b16 %v2315
        %v3440 = vunpack.c.h.b16 %v2315
        %v3441 = vunpack.c.l.b16 %v2316
        %v3442 = vunpack.c.h.b16 %v2316
        %v3443 = vunpack.c.l.b16 %v2317
        %v3444 = vunpack.c.h.b16 %v2317
        %v3445 = vunpack.c.l.b16 %v2318
        %v3446 = vunpack.c.h.b16 %v2318
        %v3447 = vunpack.c.l.b16 %v2319
        %v3448 = vunpack.c.h.b16 %v2319
        %v3449 = vunpack.c.l.b16 %v2320
        %v3450 = vunpack.c.h.b16 %v2320
        %v3451 = vunpack.c.l.b16 %v2321
        %v3452 = vunpack.c.h.b16 %v2321
        %v3453 = vunpack.c.l.b16 %v2322
        %v3454 = vunpack.c.h.b16 %v2322
        %v3455 = vunpack.c.l.b16 %v2323
        %v3456 = vunpack.c.h.b16 %v2323
        %v3457 = vunpack.c.l.b16 %v2324
        %v3458 = vunpack.c.h.b16 %v2324
        %v3459 = vunpack.c.l.b16 %v2325
        %v3460 = vunpack.c.h.b16 %v2325
        %v3461 = vunpack.c.l.b16 %v2326
        %v3462 = vunpack.c.h.b16 %v2326
        %v3463 = vunpack.c.l.b16 %v2327
        %v3464 = vunpack.c.h.b16 %v2327
        %v3465 = vunpack.c.l.b16 %v2328
        %v3466 = vunpack.c.h.b16 %v2328
        %v3467 = vunpack.c.l.b16 %v2329
        %v3468 = vunpack.c.h.b16 %v2329
        %v3469 = vunpack.c.l.b16 %v2330
        %v3470 = vunpack.c.h.b16 %v2330
        %v3471 = vunpack.c.l.b16 %v2331
        %v3472 = vunpack.c.h.b16 %v2331
        %v3473 = vunpack.c.l.b16 %v2332
        %v3474 = vunpack.c.h.b16 %v2332
        %v3475 = vunpack.c.l.b16 %v2333
        %v3476 = vunpack.c.h.b16 %v2333
        %v3477 = vunpack.c.l.b16 %v2334
        %v3478 = vunpack.c.h.b16 %v2334
        %v3479 = vunpack.c.l.b16 %v2335
        %v3480 = vunpack.c.h.b16 %v2335
        %v3481 = vunpack.c.l.b16 %v2336
        %v3482 = vunpack.c.h.b16 %v2336
        %v3483 = vunpack.c.l.b16 %v2337
        %v3484 = vunpack.c.h.b16 %v2337
        %v3485 = vunpack.c.l.b16 %v2338
        %v3486 = vunpack.c.h.b16 %v2338
        %v3487 = vunpack.c.l.b16 %v2339
        %v3488 = vunpack.c.h.b16 %v2339
        %v3489 = vunpack.c.l.b16 %v2340
        %v3490 = vunpack.c.h.b16 %v2340
        %v3491 = vunpack.c.l.b16 %v2341
        %v3492 = vunpack.c.h.b16 %v2341
        %v3493 = vunpack.c.l.b16 %v2342
        %v3494 = vunpack.c.h.b16 %v2342
        %v3495 = vunpack.c.l.b16 %v2343
        %v3496 = vunpack.c.h.b16 %v2343
        %v3497 = vpack.c.b16 %v2733, %v2729
        %v3498 = vpack.c.b16 %v2734, %v2730
        %v3499 = vpack.c.b16 %v2735, %v2731
        %v3500 = vpack.c.b16 %v2736, %v2732
        %v3501 = vpack.c.b16 %v2741, %v2737
        %v3502 = vpack.c.b16 %v2742, %v2738
        %v3503 = vpack.c.b16 %v2743, %v2739
        %v3504 = vpack.c.b16 %v2744, %v2740
        %v3505 = vpack.c.b16 %v2749, %v2745
        %v3506 = vpack.c.b16 %v2750, %v2746
        %v3507 = vpack.c.b16 %v2751, %v2747
        %v3508 = vpack.c.b16 %v2752, %v2748
        %v3509 = vpack.c.b16 %v2757, %v2753
        %v3510 = vpack.c.b16 %v2758, %v2754
        %v3511 = vpack.c.b16 %v2759, %v2755
        %v3512 = vpack.c.b16 %v2760, %v2756
        %v3513 = vpack.c.b16 %v2765, %v2761
        %v3514 = vpack.c.b16 %v2766, %v2762
        %v3515 = vpack.c.b16 %v2767, %v2763
        %v3516 = vpack.c.b16 %v2768, %v2764
        %v3517 = vpack.c.b16 %v2773, %v2769
        %v3518 = vpack.c.b16 %v2774, %v2770
        %v3519 = vpack.c.b16 %v2775, %v2771
        %v3520 = vpack.c.b16 %v2776, %v2772
        %v3521 = vpack.c.b16 %v2781, %v2777
        %v3522 = vpack.c.b16 %v2782, %v2778
        %v3523 = vpack.c.b16 %v2783, %v2779
        %v3524 = vpack.c.b16 %v2784, %v2780
        %v3525 = vpack.c.b16 %v2789, %v2785
        %v3526 = vpack.c.b16 %v2790, %v2786
        %v3527 = vpack.c.b16 %v2791, %v2787
        %v3528 = vpack.c.b16 %v2792, %v2788
        %v3529 = vpack.c.b16 %v2797, %v2793
        %v3530 = vpack.c.b16 %v2798, %v2794
        %v3531 = vpack.c.b16 %v2799, %v2795
        %v3532 = vpack.c.b16 %v2800, %v2796
        %v3533 = vpack.c.b16 %v2805, %v2801
        %v3534 = vpack.c.b16 %v2806, %v2802
        %v3535 = vpack.c.b16 %v2807, %v2803
        %v3536 = vpack.c.b16 %v2808, %v2804
        %v3537 = vpack.c.b16 %v2813, %v2809
        %v3538 = vpack.c.b16 %v2814, %v2810
        %v3539 = vpack.c.b16 %v2815, %v2811
        %v3540 = vpack.c.b16 %v2816, %v2812
        %v3541 = vpack.c.b16 %v2821, %v2817
        %v3542 = vpack.c.b16 %v2822, %v2818
        %v3543 = vpack.c.b16 %v2823, %v2819
        %v3544 = vpack.c.b16 %v2824, %v2820
        %v3545 = vpack.c.b16 %v2829, %v2825
        %v3546 = vpack.c.b16 %v2830, %v2826
        %v3547 = vpack.c.b16 %v2831, %v2827
        %v3548 = vpack.c.b16 %v2832, %v2828
        %v3549 = vpack.c.b16 %v2837, %v2833
        %v3550 = vpack.c.b16 %v2838, %v2834
        %v3551 = vpack.c.b16 %v2839, %v2835
        %v3552 = vpack.c.b16 %v2840, %v2836
        %v3553 = vpack.c.b16 %v2845, %v2841
        %v3554 = vpack.c.b16 %v2846, %v2842
        %v3555 = vpack.c.b16 %v2847, %v2843
        %v3556 = vpack.c.b16 %v2848, %v2844
        %v3557 = vpack.c.b16 %v2853, %v2849
        %v3558 = vpack.c.b16 %v2854, %v2850
        %v3559 = vpack.c.b16 %v2855, %v2851
        %v3560 = vpack.c.b16 %v2856, %v2852
        %v3561 = vpack.c.b16 %v2861, %v2857
        %v3562 = vpack.c.b16 %v2862, %v2858
        %v3563 = vpack.c.b16 %v2863, %v2859
        %v3564 = vpack.c.b16 %v2864, %v2860
        %v3565 = vpack.c.b16 %v2869, %v2865
        %v3566 = vpack.c.b16 %v2870, %v2866
        %v3567 = vpack.c.b16 %v2871, %v2867
        %v3568 = vpack.c.b16 %v2872, %v2868
        %v3569 = vpack.c.b16 %v2877, %v2873
        %v3570 = vpack.c.b16 %v2878, %v2874
        %v3571 = vpack.c.b16 %v2879, %v2875
        %v3572 = vpack.c.b16 %v2880, %v2876
        %v3573 = vpack.c.b16 %v2885, %v2881
        %v3574 = vpack.c.b16 %v2886, %v2882
        %v3575 = vpack.c.b16 %v2887, %v2883
        %v3576 = vpack.c.b16 %v2888, %v2884
        %v3577 = vpack.c.b16 %v2893, %v2889
        %v3578 = vpack.c.b16 %v2894, %v2890
        %v3579 = vpack.c.b16 %v2895, %v2891
        %v3580 = vpack.c.b16 %v2896, %v2892
        %v3581 = vpack.c.b16 %v2901, %v2897
        %v3582 = vpack.c.b16 %v2902, %v2898
        %v3583 = vpack.c.b16 %v2903, %v2899
        %v3584 = vpack.c.b16 %v2904, %v2900
        %v3585 = vpack.c.b16 %v2909, %v2905
        %v3586 = vpack.c.b16 %v2910, %v2906
        %v3587 = vpack.c.b16 %v2911, %v2907
        %v3588 = vpack.c.b16 %v2912, %v2908
        %v3589 = vpack.c.b16 %v2917, %v2913
        %v3590 = vpack.c.b16 %v2918, %v2914
        %v3591 = vpack.c.b16 %v2919, %v2915
        %v3592 = vpack.c.b16 %v2920, %v2916
        %v3593 = vpack.c.b16 %v2925, %v2921
        %v3594 = vpack.c.b16 %v2926, %v2922
        %v3595 = vpack.c.b16 %v2927, %v2923
        %v3596 = vpack.c.b16 %v2928, %v2924
        %v3597 = vpack.c.b16 %v2933, %v2929
        %v3598 = vpack.c.b16 %v2934, %v2930
        %v3599 = vpack.c.b16 %v2935, %v2931
        %v3600 = vpack.c.b16 %v2936, %v2932
        %v3601 = vpack.c.b16 %v2941, %v2937
        %v3602 = vpack.c.b16 %v2942, %v2938
        %v3603 = vpack.c.b16 %v2943, %v2939
        %v3604 = vpack.c.b16 %v2944, %v2940
        %v3605 = vpack.c.b16 %v2949, %v2945
        %v3606 = vpack.c.b16 %v2950, %v2946
        %v3607 = vpack.c.b16 %v2951, %v2947
        %v3608 = vpack.c.b16 %v2952, %v2948
        %v3609 = vpack.c.b16 %v2957, %v2953
        %v3610 = vpack.c.b16 %v2958, %v2954
        %v3611 = vpack.c.b16 %v2959, %v2955
        %v3612 = vpack.c.b16 %v2960, %v2956
        %v3613 = vpack.c.b16 %v2965, %v2961
        %v3614 = vpack.c.b16 %v2966, %v2962
        %v3615 = vpack.c.b16 %v2967, %v2963
        %v3616 = vpack.c.b16 %v2968, %v2964
        %v3617 = vpack.c.b16 %v2973, %v2969
        %v3618 = vpack.c.b16 %v2974, %v2970
        %v3619 = vpack.c.b16 %v2975, %v2971
        %v3620 = vpack.c.b16 %v2976, %v2972
        %v3621 = vpack.c.b16 %v2981, %v2977
        %v3622 = vpack.c.b16 %v2982, %v2978
        %v3623 = vpack.c.b16 %v2983, %v2979
        %v3624 = vpack.c.b16 %v2984, %v2980
        %v3625 = vpack.c.b16 %v2989, %v2985
        %v3626 = vpack.c.b16 %v2990, %v2986
        %v3627 = vpack.c.b16 %v2991, %v2987
        %v3628 = vpack.c.b16 %v2992, %v2988
        %v3629 = vpack.c.b16 %v2997, %v2993
        %v3630 = vpack.c.b16 %v2998, %v2994
        %v3631 = vpack.c.b16 %v2999, %v2995
        %v3632 = vpack.c.b16 %v3000, %v2996
        %v3633 = vpack.c.b16 %v3005, %v3001
        %v3634 = vpack.c.b16 %v3006, %v3002
        %v3635 = vpack.c.b16 %v3007, %v3003
        %v3636 = vpack.c.b16 %v3008, %v3004
        %v3637 = vpack.c.b16 %v3013, %v3009
        %v3638 = vpack.c.b16 %v3014, %v3010
        %v3639 = vpack.c.b16 %v3015, %v3011
        %v3640 = vpack.c.b16 %v3016, %v3012
        %v3641 = vpack.c.b16 %v3021, %v3017
        %v3642 = vpack.c.b16 %v3022, %v3018
        %v3643 = vpack.c.b16 %v3023, %v3019
        %v3644 = vpack.c.b16 %v3024, %v3020
        %v3645 = vpack.c.b16 %v3029, %v3025
        %v3646 = vpack.c.b16 %v3030, %v3026
        %v3647 = vpack.c.b16 %v3031, %v3027
        %v3648 = vpack.c.b16 %v3032, %v3028
        %v3649 = vpack.c.b16 %v3037, %v3033
        %v3650 = vpack.c.b16 %v3038, %v3034
        %v3651 = vpack.c.b16 %v3039, %v3035
        %v3652 = vpack.c.b16 %v3040, %v3036
        %v3653 = vpack.c.b16 %v3045, %v3041
        %v3654 = vpack.c.b16 %v3046, %v3042
        %v3655 = vpack.c.b16 %v3047, %v3043
        %v3656 = vpack.c.b16 %v3048, %v3044
        %v3657 = vpack.c.b16 %v3053, %v3049
        %v3658 = vpack.c.b16 %v3054, %v3050
        %v3659 = vpack.c.b16 %v3055, %v3051
        %v3660 = vpack.c.b16 %v3056, %v3052
        %v3661 = vpack.c.b16 %v3061, %v3057
        %v3662 = vpack.c.b16 %v3062, %v3058
        %v3663 = vpack.c.b16 %v3063, %v3059
        %v3664 = vpack.c.b16 %v3064, %v3060
        %v3665 = vpack.c.b16 %v3069, %v3065
        %v3666 = vpack.c.b16 %v3070, %v3066
        %v3667 = vpack.c.b16 %v3071, %v3067
        %v3668 = vpack.c.b16 %v3072, %v3068
        %v3669 = vpack.c.b16 %v3077, %v3073
        %v3670 = vpack.c.b16 %v3078, %v3074
        %v3671 = vpack.c.b16 %v3079, %v3075
        %v3672 = vpack.c.b16 %v3080, %v3076
        %v3673 = vpack.c.b16 %v3085, %v3081
        %v3674 = vpack.c.b16 %v3086, %v3082
        %v3675 = vpack.c.b16 %v3087, %v3083
        %v3676 = vpack.c.b16 %v3088, %v3084
        %v3677 = vpack.c.b16 %v3093, %v3089
        %v3678 = vpack.c.b16 %v3094, %v3090
        %v3679 = vpack.c.b16 %v3095, %v3091
        %v3680 = vpack.c.b16 %v3096, %v3092
        %v3681 = vpack.c.b16 %v3101, %v3097
        %v3682 = vpack.c.b16 %v3102, %v3098
        %v3683 = vpack.c.b16 %v3103, %v3099
        %v3684 = vpack.c.b16 %v3104, %v3100
        %v3685 = vpack.c.b16 %v3109, %v3105
        %v3686 = vpack.c.b16 %v3110, %v3106
        %v3687 = vpack.c.b16 %v3111, %v3107
        %v3688 = vpack.c.b16 %v3112, %v3108
        %v3689 = vpack.c.b16 %v3117, %v3113
        %v3690 = vpack.c.b16 %v3118, %v3114
        %v3691 = vpack.c.b16 %v3119, %v3115
        %v3692 = vpack.c.b16 %v3120, %v3116
        %v3693 = vpack.c.b16 %v3125, %v3121
        %v3694 = vpack.c.b16 %v3126, %v3122
        %v3695 = vpack.c.b16 %v3127, %v3123
        %v3696 = vpack.c.b16 %v3128, %v3124
        %v3697 = vpack.c.b16 %v3133, %v3129
        %v3698 = vpack.c.b16 %v3134, %v3130
        %v3699 = vpack.c.b16 %v3135, %v3131
        %v3700 = vpack.c.b16 %v3136, %v3132
        %v3701 = vpack.c.b16 %v3141, %v3137
        %v3702 = vpack.c.b16 %v3142, %v3138
        %v3703 = vpack.c.b16 %v3143, %v3139
        %v3704 = vpack.c.b16 %v3144, %v3140
        %v3705 = vpack.c.b16 %v3149, %v3145
        %v3706 = vpack.c.b16 %v3150, %v3146
        %v3707 = vpack.c.b16 %v3151, %v3147
        %v3708 = vpack.c.b16 %v3152, %v3148
        %v3709 = vpack.c.b16 %v3157, %v3153
        %v3710 = vpack.c.b16 %v3158, %v3154
        %v3711 = vpack.c.b16 %v3159, %v3155
        %v3712 = vpack.c.b16 %v3160, %v3156
        %v3713 = vpack.c.b16 %v3165, %v3161
        %v3714 = vpack.c.b16 %v3166, %v3162
        %v3715 = vpack.c.b16 %v3167, %v3163
        %v3716 = vpack.c.b16 %v3168, %v3164
        %v3717 = vpack.c.b16 %v3173, %v3169
        %v3718 = vpack.c.b16 %v3174, %v3170
        %v3719 = vpack.c.b16 %v3175, %v3171
        %v3720 = vpack.c.b16 %v3176, %v3172
        %v3721 = vpack.c.b16 %v3181, %v3177
        %v3722 = vpack.c.b16 %v3182, %v3178
        %v3723 = vpack.c.b16 %v3183, %v3179
        %v3724 = vpack.c.b16 %v3184, %v3180
        %v3725 = vpack.c.b16 %v3189, %v3185
        %v3726 = vpack.c.b16 %v3190, %v3186
        %v3727 = vpack.c.b16 %v3191, %v3187
        %v3728 = vpack.c.b16 %v3192, %v3188
        %v3729 = vpack.c.b16 %v3197, %v3193
        %v3730 = vpack.c.b16 %v3198, %v3194
        %v3731 = vpack.c.b16 %v3199, %v3195
        %v3732 = vpack.c.b16 %v3200, %v3196
        %v3733 = vpack.c.b16 %v3205, %v3201
        %v3734 = vpack.c.b16 %v3206, %v3202
        %v3735 = vpack.c.b16 %v3207, %v3203
        %v3736 = vpack.c.b16 %v3208, %v3204
        %v3737 = vpack.c.b16 %v3213, %v3209
        %v3738 = vpack.c.b16 %v3214, %v3210
        %v3739 = vpack.c.b16 %v3215, %v3211
        %v3740 = vpack.c.b16 %v3216, %v3212
        %v3741 = vpack.c.b16 %v3221, %v3217
        %v3742 = vpack.c.b16 %v3222, %v3218
        %v3743 = vpack.c.b16 %v3223, %v3219
        %v3744 = vpack.c.b16 %v3224, %v3220
        %v3745 = vpack.c.b16 %v3229, %v3225
        %v3746 = vpack.c.b16 %v3230, %v3226
        %v3747 = vpack.c.b16 %v3231, %v3227
        %v3748 = vpack.c.b16 %v3232, %v3228
        %v3749 = vpack.c.b16 %v3237, %v3233
        %v3750 = vpack.c.b16 %v3238, %v3234
        %v3751 = vpack.c.b16 %v3239, %v3235
        %v3752 = vpack.c.b16 %v3240, %v3236
        %v3753 = vpack.c.b16 %v3245, %v3241
        %v3754 = vpack.c.b16 %v3246, %v3242
        %v3755 = vpack.c.b16 %v3247, %v3243
        %v3756 = vpack.c.b16 %v3248, %v3244
        %v3757 = vpack.c.b16 %v3253, %v3249
        %v3758 = vpack.c.b16 %v3254, %v3250
        %v3759 = vpack.c.b16 %v3255, %v3251
        %v3760 = vpack.c.b16 %v3256, %v3252
        %v3761 = vpack.c.b16 %v3261, %v3257
        %v3762 = vpack.c.b16 %v3262, %v3258
        %v3763 = vpack.c.b16 %v3263, %v3259
        %v3764 = vpack.c.b16 %v3264, %v3260
        %v3765 = vpack.c.b16 %v3269, %v3265
        %v3766 = vpack.c.b16 %v3270, %v3266
        %v3767 = vpack.c.b16 %v3271, %v3267
        %v3768 = vpack.c.b16 %v3272, %v3268
        %v3769 = vpack.c.b16 %v3277, %v3273
        %v3770 = vpack.c.b16 %v3278, %v3274
        %v3771 = vpack.c.b16 %v3279, %v3275
        %v3772 = vpack.c.b16 %v3280, %v3276
        %v3773 = vpack.c.b16 %v3285, %v3281
        %v3774 = vpack.c.b16 %v3286, %v3282
        %v3775 = vpack.c.b16 %v3287, %v3283
        %v3776 = vpack.c.b16 %v3288, %v3284
        %v3777 = vpack.c.b16 %v3293, %v3289
        %v3778 = vpack.c.b16 %v3294, %v3290
        %v3779 = vpack.c.b16 %v3295, %v3291
        %v3780 = vpack.c.b16 %v3296, %v3292
        %v3781 = vpack.c.b16 %v3301, %v3297
        %v3782 = vpack.c.b16 %v3302, %v3298
        %v3783 = vpack.c.b16 %v3303, %v3299
        %v3784 = vpack.c.b16 %v3304, %v3300
        %v3785 = vpack.c.b16 %v3309, %v3305
        %v3786 = vpack.c.b16 %v3310, %v3306
        %v3787 = vpack.c.b16 %v3311, %v3307
        %v3788 = vpack.c.b16 %v3312, %v3308
        %v3789 = vpack.c.b16 %v3317, %v3313
        %v3790 = vpack.c.b16 %v3318, %v3314
        %v3791 = vpack.c.b16 %v3319, %v3315
        %v3792 = vpack.c.b16 %v3320, %v3316
        %v3793 = vpack.c.b16 %v3325, %v3321
        %v3794 = vpack.c.b16 %v3326, %v3322
        %v3795 = vpack.c.b16 %v3327, %v3323
        %v3796 = vpack.c.b16 %v3328, %v3324
        %v3797 = vpack.c.b16 %v3333, %v3329
        %v3798 = vpack.c.b16 %v3334, %v3330
        %v3799 = vpack.c.b16 %v3335, %v3331
        %v3800 = vpack.c.b16 %v3336, %v3332
        %v3801 = vpack.c.b16 %v3341, %v3337
        %v3802 = vpack.c.b16 %v3342, %v3338
        %v3803 = vpack.c.b16 %v3343, %v3339
        %v3804 = vpack.c.b16 %v3344, %v3340
        %v3805 = vpack.c.b16 %v3349, %v3345
        %v3806 = vpack.c.b16 %v3350, %v3346
        %v3807 = vpack.c.b16 %v3351, %v3347
        %v3808 = vpack.c.b16 %v3352, %v3348
        %v3809 = vpack.c.b16 %v3357, %v3353
        %v3810 = vpack.c.b16 %v3358, %v3354
        %v3811 = vpack.c.b16 %v3359, %v3355
        %v3812 = vpack.c.b16 %v3360, %v3356
        %v3813 = vpack.c.b16 %v3365, %v3361
        %v3814 = vpack.c.b16 %v3366, %v3362
        %v3815 = vpack.c.b16 %v3367, %v3363
        %v3816 = vpack.c.b16 %v3368, %v3364
        %v3817 = vpack.c.b16 %v3373, %v3369
        %v3818 = vpack.c.b16 %v3374, %v3370
        %v3819 = vpack.c.b16 %v3375, %v3371
        %v3820 = vpack.c.b16 %v3376, %v3372
        %v3821 = vpack.c.b16 %v3381, %v3377
        %v3822 = vpack.c.b16 %v3382, %v3378
        %v3823 = vpack.c.b16 %v3383, %v3379
        %v3824 = vpack.c.b16 %v3384, %v3380
        %v3825 = vpack.c.b16 %v3389, %v3385
        %v3826 = vpack.c.b16 %v3390, %v3386
        %v3827 = vpack.c.b16 %v3391, %v3387
        %v3828 = vpack.c.b16 %v3392, %v3388
        %v3829 = vpack.c.b16 %v3397, %v3393
        %v3830 = vpack.c.b16 %v3398, %v3394
        %v3831 = vpack.c.b16 %v3399, %v3395
        %v3832 = vpack.c.b16 %v3400, %v3396
        %v3833 = vpack.c.b16 %v3405, %v3401
        %v3834 = vpack.c.b16 %v3406, %v3402
        %v3835 = vpack.c.b16 %v3407, %v3403
        %v3836 = vpack.c.b16 %v3408, %v3404
        %v3837 = vpack.c.b16 %v3413, %v3409
        %v3838 = vpack.c.b16 %v3414, %v3410
        %v3839 = vpack.c.b16 %v3415, %v3411
        %v3840 = vpack.c.b16 %v3416, %v3412
        %v3841 = vpack.c.b16 %v3421, %v3417
        %v3842 = vpack.c.b16 %v3422, %v3418
        %v3843 = vpack.c.b16 %v3423, %v3419
        %v3844 = vpack.c.b16 %v3424, %v3420
        %v3845 = vpack.c.b16 %v3429, %v3425
        %v3846 = vpack.c.b16 %v3430, %v3426
        %v3847 = vpack.c.b16 %v3431, %v3427
        %v3848 = vpack.c.b16 %v3432, %v3428
        %v3849 = vpack.c.b16 %v3437, %v3433
        %v3850 = vpack.c.b16 %v3438, %v3434
        %v3851 = vpack.c.b16 %v3439, %v3435
        %v3852 = vpack.c.b16 %v3440, %v3436
        %v3853 = vpack.c.b16 %v3445, %v3441
        %v3854 = vpack.c.b16 %v3446, %v3442
        %v3855 = vpack.c.b16 %v3447, %v3443
        %v3856 = vpack.c.b16 %v3448, %v3444
        %v3857 = vpack.c.b16 %v3453, %v3449
        %v3858 = vpack.c.b16 %v3454, %v3450
        %v3859 = vpack.c.b16 %v3455, %v3451
        %v3860 = vpack.c.b16 %v3456, %v3452
        %v3861 = vpack.c.b16 %v3461, %v3457
        %v3862 = vpack.c.b16 %v3462, %v3458
        %v3863 = vpack.c.b16 %v3463, %v3459
        %v3864 = vpack.c.b16 %v3464, %v3460
        %v3865 = vpack.c.b16 %v3469, %v3465
        %v3866 = vpack.c.b16 %v3470, %v3466
        %v3867 = vpack.c.b16 %v3471, %v3467
        %v3868 = vpack.c.b16 %v3472, %v3468
        %v3869 = vpack.c.b16 %v3477, %v3473
        %v3870 = vpack.c.b16 %v3478, %v3474
        %v3871 = vpack.c.b16 %v3479, %v3475
        %v3872 = vpack.c.b16 %v3480, %v3476
        %v3873 = vpack.c.b16 %v3485, %v3481
        %v3874 = vpack.c.b16 %v3486, %v3482
        %v3875 = vpack.c.b16 %v3487, %v3483
        %v3876 = vpack.c.b16 %v3488, %v3484
        %v3877 = vpack.c.b16 %v3493, %v3489
        %v3878 = vpack.c.b16 %v3494, %v3490
        %v3879 = vpack.c.b16 %v3495, %v3491
        %v3880 = vpack.c.b16 %v3496, %v3492
        %v4266 = vlaneseq
        %v4267 = vshrl.u32 %v4266, 7
        %v4268 = vsub.s32 0, %v4267
        %v4269 = vrot.slane %v2344, %v4268
        %v4270 = vlaneseq
        %v4271 = vshrl.u32 %v4270, 7
        %v4272 = vsub.s32 1, %v4271
        %v4273 = vrot.slane %v2344, %v4272
        %v4274 = vlaneseq
        %v4275 = vshrl.u32 %v4274, 7
        %v4276 = vsub.s32 2, %v4275
        %v4277 = vrot.slane %v2344, %v4276
        %v4278 = vlaneseq
        %v4279 = vshrl.u32 %v4278, 7
        %v4280 = vsub.s32 3, %v4279
        %v4281 = vrot.slane %v2344, %v4280
        %4286 = vmatprep.subr.bf16.mxu0 %v3526
        %4287 = vmatpush1.bf16.msra.mxu0 %v3525
        %4288 = vmatprep.subr.bf16.mxu0 %v3522
        %4289 = vmatpush1.bf16.msra.mxu0 %v3521
        %4290 = vmatprep.subr.bf16.mxu0 %v3518
        %4291 = vmatpush1.bf16.msra.mxu0 %v3517
        %4292 = vmatprep.subr.bf16.mxu0 %v3514
        %4293 = vmatpush1.bf16.msra.mxu0 %v3513
        %4294 = vmatprep.subr.bf16.mxu0 %v3510
        %4295 = vmatpush1.bf16.msra.mxu0 %v3509
        %4296 = vmatprep.subr.bf16.mxu0 %v3506
        %4297 = vmatpush1.bf16.msra.mxu0 %v3505
        %4298 = vmatprep.subr.bf16.mxu0 %v3502
        %4299 = vmatpush1.bf16.msra.mxu0 %v3501
        %4300 = vmatprep.subr.bf16.mxu0 %v3498
        %4301 = vmatpush1.bf16.msra.mxu0 %v3497
        %4302 = vmatprep.subr.bf16.mxu0 %v3558
        %4303 = vmatpush2.bf16.msra.mxu0 %v3557
        %4304 = vmatprep.subr.bf16.mxu0 %v3554
        %4305 = vmatpush2.bf16.msra.mxu0 %v3553
        %4306 = vmatprep.subr.bf16.mxu0 %v3550
        %4307 = vmatpush2.bf16.msra.mxu0 %v3549
        %4308 = vmatprep.subr.bf16.mxu0 %v3546
        %4309 = vmatpush2.bf16.msra.mxu0 %v3545
        %4310 = vmatprep.subr.bf16.mxu0 %v3542
        %4311 = vmatpush2.bf16.msra.mxu0 %v3541
        %4312 = vmatprep.subr.bf16.mxu0 %v3538
        %4313 = vmatpush2.bf16.msra.mxu0 %v3537
        %4314 = vmatprep.subr.bf16.mxu0 %v3534
        %4315 = vmatpush2.bf16.msra.mxu0 %v3533
        %4316 = vmatprep.subr.bf16.mxu0 %v3530
        %4317 = vmatpush2.bf16.msra.mxu0 %v3529
        %4318 = vmatprep.mubr.bf16.mxu0 %v1949
        %4319 = vmatmul.mubr.bf16.gmra.mxu0 %v1948
        %v4320 = vpop.f32.mrf.mxu0
        %v4321 = vadd.f32 %v4269, %v4320
        %v4322 = vpop.f32.mrf.mxu0
        %v4323 = vadd.f32 %v4273, %v4322
        %v4324 = vpop.f32.mrf.mxu0
        %v4325 = vpop.f32.mrf.mxu0
        %4326 = vdwg.mxu0
        %4327 = vmatprep.subr.bf16.mxu0 %v3590
        %4328 = vmatpush1.bf16.msra.mxu0 %v3589
        %4329 = vmatprep.subr.bf16.mxu0 %v3586
        %4330 = vmatpush1.bf16.msra.mxu0 %v3585
        %4331 = vmatprep.subr.bf16.mxu0 %v3582
        %4332 = vmatpush1.bf16.msra.mxu0 %v3581
        %4333 = vmatprep.subr.bf16.mxu0 %v3578
        %4334 = vmatpush1.bf16.msra.mxu0 %v3577
        %4335 = vmatprep.subr.bf16.mxu0 %v3574
        %4336 = vmatpush1.bf16.msra.mxu0 %v3573
        %4337 = vmatprep.subr.bf16.mxu0 %v3570
        %4338 = vmatpush1.bf16.msra.mxu0 %v3569
        %4339 = vmatprep.subr.bf16.mxu0 %v3566
        %4340 = vmatpush1.bf16.msra.mxu0 %v3565
        %4341 = vmatprep.subr.bf16.mxu0 %v3562
        %4342 = vmatpush1.bf16.msra.mxu0 %v3561
        %4343 = vmatprep.subr.bf16.mxu0 %v3622
        %4344 = vmatpush2.bf16.msra.mxu0 %v3621
        %4345 = vmatprep.subr.bf16.mxu0 %v3618
        %4346 = vmatpush2.bf16.msra.mxu0 %v3617
        %4347 = vmatprep.subr.bf16.mxu0 %v3614
        %4348 = vmatpush2.bf16.msra.mxu0 %v3613
        %4349 = vmatprep.subr.bf16.mxu0 %v3610
        %4350 = vmatpush2.bf16.msra.mxu0 %v3609
        %4351 = vmatprep.subr.bf16.mxu0 %v3606
        %4352 = vmatpush2.bf16.msra.mxu0 %v3605
        %4353 = vmatprep.subr.bf16.mxu0 %v3602
        %4354 = vmatpush2.bf16.msra.mxu0 %v3601
        %4355 = vmatprep.subr.bf16.mxu0 %v3598
        %4356 = vmatpush2.bf16.msra.mxu0 %v3597
        %4357 = vmatprep.subr.bf16.mxu0 %v3594
        %4358 = vmatpush2.bf16.msra.mxu0 %v3593
        %4359 = vmatprep.mubr.bf16.mxu0 %v1951
        %4360 = vmatmul.mubr.bf16.gmra.mxu0 %v1950
        %v4361 = vpop.f32.mrf.mxu0
        %v4362 = vadd.f32 %v4321, %v4361
        %v4363 = vpop.f32.mrf.mxu0
        %v4364 = vadd.f32 %v4323, %v4363
        %v4365 = vpop.f32.mrf.mxu0
        %v4366 = vpop.f32.mrf.mxu0
        %4367 = vdwg.mxu0
        %4368 = vmatprep.subr.bf16.mxu0 %v3654
        %4369 = vmatpush1.bf16.msra.mxu0 %v3653
        %4370 = vmatprep.subr.bf16.mxu0 %v3650
        %4371 = vmatpush1.bf16.msra.mxu0 %v3649
        %4372 = vmatprep.subr.bf16.mxu0 %v3646
        %4373 = vmatpush1.bf16.msra.mxu0 %v3645
        %4374 = vmatprep.subr.bf16.mxu0 %v3642
        %4375 = vmatpush1.bf16.msra.mxu0 %v3641
        %4376 = vmatprep.subr.bf16.mxu0 %v3638
        %4377 = vmatpush1.bf16.msra.mxu0 %v3637
        %4378 = vmatprep.subr.bf16.mxu0 %v3634
        %4379 = vmatpush1.bf16.msra.mxu0 %v3633
        %4380 = vmatprep.subr.bf16.mxu0 %v3630
        %4381 = vmatpush1.bf16.msra.mxu0 %v3629
        %4382 = vmatprep.subr.bf16.mxu0 %v3626
        %4383 = vmatpush1.bf16.msra.mxu0 %v3625
        %4384 = vmatprep.subr.bf16.mxu0 %v3686
        %4385 = vmatpush2.bf16.msra.mxu0 %v3685
        %4386 = vmatprep.subr.bf16.mxu0 %v3682
        %4387 = vmatpush2.bf16.msra.mxu0 %v3681
        %4388 = vmatprep.subr.bf16.mxu0 %v3678
        %4389 = vmatpush2.bf16.msra.mxu0 %v3677
        %4390 = vmatprep.subr.bf16.mxu0 %v3674
        %4391 = vmatpush2.bf16.msra.mxu0 %v3673
        %4392 = vmatprep.subr.bf16.mxu0 %v3670
        %4393 = vmatpush2.bf16.msra.mxu0 %v3669
        %4394 = vmatprep.subr.bf16.mxu0 %v3666
        %4395 = vmatpush2.bf16.msra.mxu0 %v3665
        %4396 = vmatprep.subr.bf16.mxu0 %v3662
        %4397 = vmatpush2.bf16.msra.mxu0 %v3661
        %4398 = vmatprep.subr.bf16.mxu0 %v3658
        %4399 = vmatpush2.bf16.msra.mxu0 %v3657
        %4400 = vmatprep.mubr.bf16.mxu0 %v1953
        %4401 = vmatmul.mubr.bf16.gmra.mxu0 %v1952
        %v4402 = vpop.f32.mrf.mxu0
        %v4403 = vadd.f32 %v4362, %v4402
        %v4404 = vpop.f32.mrf.mxu0
        %v4405 = vadd.f32 %v4364, %v4404
        %v4406 = vpop.f32.mrf.mxu0
        %v4407 = vpop.f32.mrf.mxu0
        %4408 = vdwg.mxu0
        %4409 = vmatprep.subr.bf16.mxu0 %v3718
        %4410 = vmatpush1.bf16.msra.mxu0 %v3717
        %4411 = vmatprep.subr.bf16.mxu0 %v3714
        %4412 = vmatpush1.bf16.msra.mxu0 %v3713
        %4413 = vmatprep.subr.bf16.mxu0 %v3710
        %4414 = vmatpush1.bf16.msra.mxu0 %v3709
        %4415 = vmatprep.subr.bf16.mxu0 %v3706
        %4416 = vmatpush1.bf16.msra.mxu0 %v3705
        %4417 = vmatprep.subr.bf16.mxu0 %v3702
        %4418 = vmatpush1.bf16.msra.mxu0 %v3701
        %4419 = vmatprep.subr.bf16.mxu0 %v3698
        %4420 = vmatpush1.bf16.msra.mxu0 %v3697
        %4421 = vmatprep.subr.bf16.mxu0 %v3694
        %4422 = vmatpush1.bf16.msra.mxu0 %v3693
        %4423 = vmatprep.subr.bf16.mxu0 %v3690
        %4424 = vmatpush1.bf16.msra.mxu0 %v3689
        %4425 = vmatprep.subr.bf16.mxu0 %v3750
        %4426 = vmatpush2.bf16.msra.mxu0 %v3749
        %4427 = vmatprep.subr.bf16.mxu0 %v3746
        %4428 = vmatpush2.bf16.msra.mxu0 %v3745
        %4429 = vmatprep.subr.bf16.mxu0 %v3742
        %4430 = vmatpush2.bf16.msra.mxu0 %v3741
        %4431 = vmatprep.subr.bf16.mxu0 %v3738
        %4432 = vmatpush2.bf16.msra.mxu0 %v3737
        %4433 = vmatprep.subr.bf16.mxu0 %v3734
        %4434 = vmatpush2.bf16.msra.mxu0 %v3733
        %4435 = vmatprep.subr.bf16.mxu0 %v3730
        %4436 = vmatpush2.bf16.msra.mxu0 %v3729
        %4437 = vmatprep.subr.bf16.mxu0 %v3726
        %4438 = vmatpush2.bf16.msra.mxu0 %v3725
        %4439 = vmatprep.subr.bf16.mxu0 %v3722
        %4440 = vmatpush2.bf16.msra.mxu0 %v3721
        %4441 = vmatprep.mubr.bf16.mxu0 %v1955
        %4442 = vmatmul.mubr.bf16.gmra.mxu0 %v1954
        %v4443 = vpop.f32.mrf.mxu0
        %v4444 = vadd.f32 %v4403, %v4443
        %v4445 = vpop.f32.mrf.mxu0
        %v4446 = vadd.f32 %v4405, %v4445
        %v4447 = vpop.f32.mrf.mxu0
        %v4448 = vpop.f32.mrf.mxu0
        %4449 = vdwg.mxu0
        %4450 = vmatprep.subr.bf16.mxu0 %v3782
        %4451 = vmatpush1.bf16.msra.mxu0 %v3781
        %4452 = vmatprep.subr.bf16.mxu0 %v3778
        %4453 = vmatpush1.bf16.msra.mxu0 %v3777
        %4454 = vmatprep.subr.bf16.mxu0 %v3774
        %4455 = vmatpush1.bf16.msra.mxu0 %v3773
        %4456 = vmatprep.subr.bf16.mxu0 %v3770
        %4457 = vmatpush1.bf16.msra.mxu0 %v3769
        %4458 = vmatprep.subr.bf16.mxu0 %v3766
        %4459 = vmatpush1.bf16.msra.mxu0 %v3765
        %4460 = vmatprep.subr.bf16.mxu0 %v3762
        %4461 = vmatpush1.bf16.msra.mxu0 %v3761
        %4462 = vmatprep.subr.bf16.mxu0 %v3758
        %4463 = vmatpush1.bf16.msra.mxu0 %v3757
        %4464 = vmatprep.subr.bf16.mxu0 %v3754
        %4465 = vmatpush1.bf16.msra.mxu0 %v3753
        %4466 = vmatprep.subr.bf16.mxu0 %v3814
        %4467 = vmatpush2.bf16.msra.mxu0 %v3813
        %4468 = vmatprep.subr.bf16.mxu0 %v3810
        %4469 = vmatpush2.bf16.msra.mxu0 %v3809
        %4470 = vmatprep.subr.bf16.mxu0 %v3806
        %4471 = vmatpush2.bf16.msra.mxu0 %v3805
        %4472 = vmatprep.subr.bf16.mxu0 %v3802
        %4473 = vmatpush2.bf16.msra.mxu0 %v3801
        %4474 = vmatprep.subr.bf16.mxu0 %v3798
        %4475 = vmatpush2.bf16.msra.mxu0 %v3797
        %4476 = vmatprep.subr.bf16.mxu0 %v3794
        %4477 = vmatpush2.bf16.msra.mxu0 %v3793
        %4478 = vmatprep.subr.bf16.mxu0 %v3790
        %4479 = vmatpush2.bf16.msra.mxu0 %v3789
        %4480 = vmatprep.subr.bf16.mxu0 %v3786
        %4481 = vmatpush2.bf16.msra.mxu0 %v3785
        %4482 = vmatprep.mubr.bf16.mxu0 %v1957
        %4483 = vmatmul.mubr.bf16.gmra.mxu0 %v1956
        %v4484 = vpop.f32.mrf.mxu0
        %v4485 = vadd.f32 %v4444, %v4484
        %v4486 = vpop.f32.mrf.mxu0
        %v4487 = vadd.f32 %v4446, %v4486
        %v4488 = vpop.f32.mrf.mxu0
        %v4489 = vpop.f32.mrf.mxu0
        %4490 = vdwg.mxu0
        %4491 = vmatprep.subr.bf16.mxu0 %v3846
        %4492 = vmatpush1.bf16.msra.mxu0 %v3845
        %4493 = vmatprep.subr.bf16.mxu0 %v3842
        %4494 = vmatpush1.bf16.msra.mxu0 %v3841
        %4495 = vmatprep.subr.bf16.mxu0 %v3838
        %4496 = vmatpush1.bf16.msra.mxu0 %v3837
        %4497 = vmatprep.subr.bf16.mxu0 %v3834
        %4498 = vmatpush1.bf16.msra.mxu0 %v3833
        %4499 = vmatprep.subr.bf16.mxu0 %v3830
        %4500 = vmatpush1.bf16.msra.mxu0 %v3829
        %4501 = vmatprep.subr.bf16.mxu0 %v3826
        %4502 = vmatpush1.bf16.msra.mxu0 %v3825
        %4503 = vmatprep.subr.bf16.mxu0 %v3822
        %4504 = vmatpush1.bf16.msra.mxu0 %v3821
        %4505 = vmatprep.subr.bf16.mxu0 %v3818
        %4506 = vmatpush1.bf16.msra.mxu0 %v3817
        %4507 = vmatprep.subr.bf16.mxu0 %v3878
        %4508 = vmatpush2.bf16.msra.mxu0 %v3877
        %4509 = vmatprep.subr.bf16.mxu0 %v3874
        %4510 = vmatpush2.bf16.msra.mxu0 %v3873
        %4511 = vmatprep.subr.bf16.mxu0 %v3870
        %4512 = vmatpush2.bf16.msra.mxu0 %v3869
        %4513 = vmatprep.subr.bf16.mxu0 %v3866
        %4514 = vmatpush2.bf16.msra.mxu0 %v3865
        %4515 = vmatprep.subr.bf16.mxu0 %v3862
        %4516 = vmatpush2.bf16.msra.mxu0 %v3861
        %4517 = vmatprep.subr.bf16.mxu0 %v3858
        %4518 = vmatpush2.bf16.msra.mxu0 %v3857
        %4519 = vmatprep.subr.bf16.mxu0 %v3854
        %4520 = vmatpush2.bf16.msra.mxu0 %v3853
        %4521 = vmatprep.subr.bf16.mxu0 %v3850
        %4522 = vmatpush2.bf16.msra.mxu0 %v3849
        %4523 = vmatprep.mubr.bf16.mxu0 %v1959
        %4524 = vmatmul.mubr.bf16.gmra.mxu0 %v1958
        %v4525 = vpop.f32.mrf.mxu0
        %v4526 = vadd.f32 %v4485, %v4525
        %v4527 = vpop.f32.mrf.mxu0
        %v4528 = vadd.f32 %v4487, %v4527
        %v4529 = vpop.f32.mrf.mxu0
        %v4530 = vpop.f32.mrf.mxu0
        %4531 = vdwg.mxu0
        %4532 = vmatprep.subr.bf16.mxu0 %v3528
        %4533 = vmatpush1.bf16.msra.mxu0 %v3527
        %4534 = vmatprep.subr.bf16.mxu0 %v3524
        %4535 = vmatpush1.bf16.msra.mxu0 %v3523
        %4536 = vmatprep.subr.bf16.mxu0 %v3520
        %4537 = vmatpush1.bf16.msra.mxu0 %v3519
        %4538 = vmatprep.subr.bf16.mxu0 %v3516
        %4539 = vmatpush1.bf16.msra.mxu0 %v3515
        %4540 = vmatprep.subr.bf16.mxu0 %v3512
        %4541 = vmatpush1.bf16.msra.mxu0 %v3511
        %4542 = vmatprep.subr.bf16.mxu0 %v3508
        %4543 = vmatpush1.bf16.msra.mxu0 %v3507
        %4544 = vmatprep.subr.bf16.mxu0 %v3504
        %4545 = vmatpush1.bf16.msra.mxu0 %v3503
        %4546 = vmatprep.subr.bf16.mxu0 %v3500
        %4547 = vmatpush1.bf16.msra.mxu0 %v3499
        %4548 = vmatprep.subr.bf16.mxu0 %v3560
        %4549 = vmatpush2.bf16.msra.mxu0 %v3559
        %4550 = vmatprep.subr.bf16.mxu0 %v3556
        %4551 = vmatpush2.bf16.msra.mxu0 %v3555
        %4552 = vmatprep.subr.bf16.mxu0 %v3552
        %4553 = vmatpush2.bf16.msra.mxu0 %v3551
        %4554 = vmatprep.subr.bf16.mxu0 %v3548
        %4555 = vmatpush2.bf16.msra.mxu0 %v3547
        %4556 = vmatprep.subr.bf16.mxu0 %v3544
        %4557 = vmatpush2.bf16.msra.mxu0 %v3543
        %4558 = vmatprep.subr.bf16.mxu0 %v3540
        %4559 = vmatpush2.bf16.msra.mxu0 %v3539
        %4560 = vmatprep.subr.bf16.mxu0 %v3536
        %4561 = vmatpush2.bf16.msra.mxu0 %v3535
        %4562 = vmatprep.subr.bf16.mxu0 %v3532
        %4563 = vmatpush2.bf16.msra.mxu0 %v3531
        %4564 = vmatprep.mubr.bf16.mxu0 %v1949
        %4565 = vmatmul.mubr.bf16.gmra.mxu0 %v1948
        %v4566 = vpop.f32.mrf.mxu0
        %v4567 = vadd.f32 %v4277, %v4566
        %v4568 = vpop.f32.mrf.mxu0
        %v4569 = vadd.f32 %v4281, %v4568
        %v4570 = vpop.f32.mrf.mxu0
        %v4571 = vpop.f32.mrf.mxu0
        %4572 = vdwg.mxu0
        %4573 = vmatprep.subr.bf16.mxu0 %v3592
        %4574 = vmatpush1.bf16.msra.mxu0 %v3591
        %4575 = vmatprep.subr.bf16.mxu0 %v3588
        %4576 = vmatpush1.bf16.msra.mxu0 %v3587
        %4577 = vmatprep.subr.bf16.mxu0 %v3584
        %4578 = vmatpush1.bf16.msra.mxu0 %v3583
        %4579 = vmatprep.subr.bf16.mxu0 %v3580
        %4580 = vmatpush1.bf16.msra.mxu0 %v3579
        %4581 = vmatprep.subr.bf16.mxu0 %v3576
        %4582 = vmatpush1.bf16.msra.mxu0 %v3575
        %4583 = vmatprep.subr.bf16.mxu0 %v3572
        %4584 = vmatpush1.bf16.msra.mxu0 %v3571
        %4585 = vmatprep.subr.bf16.mxu0 %v3568
        %4586 = vmatpush1.bf16.msra.mxu0 %v3567
        %4587 = vmatprep.subr.bf16.mxu0 %v3564
        %4588 = vmatpush1.bf16.msra.mxu0 %v3563
        %4589 = vmatprep.subr.bf16.mxu0 %v3624
        %4590 = vmatpush2.bf16.msra.mxu0 %v3623
        %4591 = vmatprep.subr.bf16.mxu0 %v3620
        %4592 = vmatpush2.bf16.msra.mxu0 %v3619
        %4593 = vmatprep.subr.bf16.mxu0 %v3616
        %4594 = vmatpush2.bf16.msra.mxu0 %v3615
        %4595 = vmatprep.subr.bf16.mxu0 %v3612
        %4596 = vmatpush2.bf16.msra.mxu0 %v3611
        %4597 = vmatprep.subr.bf16.mxu0 %v3608
        %4598 = vmatpush2.bf16.msra.mxu0 %v3607
        %4599 = vmatprep.subr.bf16.mxu0 %v3604
        %4600 = vmatpush2.bf16.msra.mxu0 %v3603
        %4601 = vmatprep.subr.bf16.mxu0 %v3600
        %4602 = vmatpush2.bf16.msra.mxu0 %v3599
        %4603 = vmatprep.subr.bf16.mxu0 %v3596
        %4604 = vmatpush2.bf16.msra.mxu0 %v3595
        %4605 = vmatprep.mubr.bf16.mxu0 %v1951
        %4606 = vmatmul.mubr.bf16.gmra.mxu0 %v1950
        %v4607 = vpop.f32.mrf.mxu0
        %v4608 = vadd.f32 %v4567, %v4607
        %v4609 = vpop.f32.mrf.mxu0
        %v4610 = vadd.f32 %v4569, %v4609
        %v4611 = vpop.f32.mrf.mxu0
        %v4612 = vpop.f32.mrf.mxu0
        %4613 = vdwg.mxu0
        %4614 = vmatprep.subr.bf16.mxu0 %v3656
        %4615 = vmatpush1.bf16.msra.mxu0 %v3655
        %4616 = vmatprep.subr.bf16.mxu0 %v3652
        %4617 = vmatpush1.bf16.msra.mxu0 %v3651
        %4618 = vmatprep.subr.bf16.mxu0 %v3648
        %4619 = vmatpush1.bf16.msra.mxu0 %v3647
        %4620 = vmatprep.subr.bf16.mxu0 %v3644
        %4621 = vmatpush1.bf16.msra.mxu0 %v3643
        %4622 = vmatprep.subr.bf16.mxu0 %v3640
        %4623 = vmatpush1.bf16.msra.mxu0 %v3639
        %4624 = vmatprep.subr.bf16.mxu0 %v3636
        %4625 = vmatpush1.bf16.msra.mxu0 %v3635
        %4626 = vmatprep.subr.bf16.mxu0 %v3632
        %4627 = vmatpush1.bf16.msra.mxu0 %v3631
        %4628 = vmatprep.subr.bf16.mxu0 %v3628
        %4629 = vmatpush1.bf16.msra.mxu0 %v3627
        %4630 = vmatprep.subr.bf16.mxu0 %v3688
        %4631 = vmatpush2.bf16.msra.mxu0 %v3687
        %4632 = vmatprep.subr.bf16.mxu0 %v3684
        %4633 = vmatpush2.bf16.msra.mxu0 %v3683
        %4634 = vmatprep.subr.bf16.mxu0 %v3680
        %4635 = vmatpush2.bf16.msra.mxu0 %v3679
        %4636 = vmatprep.subr.bf16.mxu0 %v3676
        %4637 = vmatpush2.bf16.msra.mxu0 %v3675
        %4638 = vmatprep.subr.bf16.mxu0 %v3672
        %4639 = vmatpush2.bf16.msra.mxu0 %v3671
        %4640 = vmatprep.subr.bf16.mxu0 %v3668
        %4641 = vmatpush2.bf16.msra.mxu0 %v3667
        %4642 = vmatprep.subr.bf16.mxu0 %v3664
        %4643 = vmatpush2.bf16.msra.mxu0 %v3663
        %4644 = vmatprep.subr.bf16.mxu0 %v3660
        %4645 = vmatpush2.bf16.msra.mxu0 %v3659
        %4646 = vmatprep.mubr.bf16.mxu0 %v1953
        %4647 = vmatmul.mubr.bf16.gmra.mxu0 %v1952
        %v4648 = vpop.f32.mrf.mxu0
        %v4649 = vadd.f32 %v4608, %v4648
        %v4650 = vpop.f32.mrf.mxu0
        %v4651 = vadd.f32 %v4610, %v4650
        %v4652 = vpop.f32.mrf.mxu0
        %v4653 = vpop.f32.mrf.mxu0
        %4654 = vdwg.mxu0
        %4655 = vmatprep.subr.bf16.mxu0 %v3720
        %4656 = vmatpush1.bf16.msra.mxu0 %v3719
        %4657 = vmatprep.subr.bf16.mxu0 %v3716
        %4658 = vmatpush1.bf16.msra.mxu0 %v3715
        %4659 = vmatprep.subr.bf16.mxu0 %v3712
        %4660 = vmatpush1.bf16.msra.mxu0 %v3711
        %4661 = vmatprep.subr.bf16.mxu0 %v3708
        %4662 = vmatpush1.bf16.msra.mxu0 %v3707
        %4663 = vmatprep.subr.bf16.mxu0 %v3704
        %4664 = vmatpush1.bf16.msra.mxu0 %v3703
        %4665 = vmatprep.subr.bf16.mxu0 %v3700
        %4666 = vmatpush1.bf16.msra.mxu0 %v3699
        %4667 = vmatprep.subr.bf16.mxu0 %v3696
        %4668 = vmatpush1.bf16.msra.mxu0 %v3695
        %4669 = vmatprep.subr.bf16.mxu0 %v3692
        %4670 = vmatpush1.bf16.msra.mxu0 %v3691
        %4671 = vmatprep.subr.bf16.mxu0 %v3752
        %4672 = vmatpush2.bf16.msra.mxu0 %v3751
        %4673 = vmatprep.subr.bf16.mxu0 %v3748
        %4674 = vmatpush2.bf16.msra.mxu0 %v3747
        %4675 = vmatprep.subr.bf16.mxu0 %v3744
        %4676 = vmatpush2.bf16.msra.mxu0 %v3743
        %4677 = vmatprep.subr.bf16.mxu0 %v3740
        %4678 = vmatpush2.bf16.msra.mxu0 %v3739
        %4679 = vmatprep.subr.bf16.mxu0 %v3736
        %4680 = vmatpush2.bf16.msra.mxu0 %v3735
        %4681 = vmatprep.subr.bf16.mxu0 %v3732
        %4682 = vmatpush2.bf16.msra.mxu0 %v3731
        %4683 = vmatprep.subr.bf16.mxu0 %v3728
        %4684 = vmatpush2.bf16.msra.mxu0 %v3727
        %4685 = vmatprep.subr.bf16.mxu0 %v3724
        %4686 = vmatpush2.bf16.msra.mxu0 %v3723
        %4687 = vmatprep.mubr.bf16.mxu0 %v1955
        %4688 = vmatmul.mubr.bf16.gmra.mxu0 %v1954
        %v4689 = vpop.f32.mrf.mxu0
        %v4690 = vadd.f32 %v4649, %v4689
        %v4691 = vpop.f32.mrf.mxu0
        %v4692 = vadd.f32 %v4651, %v4691
        %v4693 = vpop.f32.mrf.mxu0
        %v4694 = vpop.f32.mrf.mxu0
        %4695 = vdwg.mxu0
        %4696 = vmatprep.subr.bf16.mxu0 %v3784
        %4697 = vmatpush1.bf16.msra.mxu0 %v3783
        %4698 = vmatprep.subr.bf16.mxu0 %v3780
        %4699 = vmatpush1.bf16.msra.mxu0 %v3779
        %4700 = vmatprep.subr.bf16.mxu0 %v3776
        %4701 = vmatpush1.bf16.msra.mxu0 %v3775
        %4702 = vmatprep.subr.bf16.mxu0 %v3772
        %4703 = vmatpush1.bf16.msra.mxu0 %v3771
        %4704 = vmatprep.subr.bf16.mxu0 %v3768
        %4705 = vmatpush1.bf16.msra.mxu0 %v3767
        %4706 = vmatprep.subr.bf16.mxu0 %v3764
        %4707 = vmatpush1.bf16.msra.mxu0 %v3763
        %4708 = vmatprep.subr.bf16.mxu0 %v3760
        %4709 = vmatpush1.bf16.msra.mxu0 %v3759
        %4710 = vmatprep.subr.bf16.mxu0 %v3756
        %4711 = vmatpush1.bf16.msra.mxu0 %v3755
        %4712 = vmatprep.subr.bf16.mxu0 %v3816
        %4713 = vmatpush2.bf16.msra.mxu0 %v3815
        %4714 = vmatprep.subr.bf16.mxu0 %v3812
        %4715 = vmatpush2.bf16.msra.mxu0 %v3811
        %4716 = vmatprep.subr.bf16.mxu0 %v3808
        %4717 = vmatpush2.bf16.msra.mxu0 %v3807
        %4718 = vmatprep.subr.bf16.mxu0 %v3804
        %4719 = vmatpush2.bf16.msra.mxu0 %v3803
        %4720 = vmatprep.subr.bf16.mxu0 %v3800
        %4721 = vmatpush2.bf16.msra.mxu0 %v3799
        %4722 = vmatprep.subr.bf16.mxu0 %v3796
        %4723 = vmatpush2.bf16.msra.mxu0 %v3795
        %4724 = vmatprep.subr.bf16.mxu0 %v3792
        %4725 = vmatpush2.bf16.msra.mxu0 %v3791
        %4726 = vmatprep.subr.bf16.mxu0 %v3788
        %4727 = vmatpush2.bf16.msra.mxu0 %v3787
        %4728 = vmatprep.mubr.bf16.mxu0 %v1957
        %4729 = vmatmul.mubr.bf16.gmra.mxu0 %v1956
        %v4730 = vpop.f32.mrf.mxu0
        %v4731 = vadd.f32 %v4690, %v4730
        %v4732 = vpop.f32.mrf.mxu0
        %v4733 = vadd.f32 %v4692, %v4732
        %v4734 = vpop.f32.mrf.mxu0
        %v4735 = vpop.f32.mrf.mxu0
        %4736 = vdwg.mxu0
        %4737 = vmatprep.subr.bf16.mxu0 %v3848
        %4738 = vmatpush1.bf16.msra.mxu0 %v3847
        %4739 = vmatprep.subr.bf16.mxu0 %v3844
        %4740 = vmatpush1.bf16.msra.mxu0 %v3843
        %4741 = vmatprep.subr.bf16.mxu0 %v3840
        %4742 = vmatpush1.bf16.msra.mxu0 %v3839
        %4743 = vmatprep.subr.bf16.mxu0 %v3836
        %4744 = vmatpush1.bf16.msra.mxu0 %v3835
        %4745 = vmatprep.subr.bf16.mxu0 %v3832
        %4746 = vmatpush1.bf16.msra.mxu0 %v3831
        %4747 = vmatprep.subr.bf16.mxu0 %v3828
        %4748 = vmatpush1.bf16.msra.mxu0 %v3827
        %4749 = vmatprep.subr.bf16.mxu0 %v3824
        %4750 = vmatpush1.bf16.msra.mxu0 %v3823
        %4751 = vmatprep.subr.bf16.mxu0 %v3820
        %4752 = vmatpush1.bf16.msra.mxu0 %v3819
        %4753 = vmatprep.subr.bf16.mxu0 %v3880
        %4754 = vmatpush2.bf16.msra.mxu0 %v3879
        %4755 = vmatprep.subr.bf16.mxu0 %v3876
        %4756 = vmatpush2.bf16.msra.mxu0 %v3875
        %4757 = vmatprep.subr.bf16.mxu0 %v3872
        %4758 = vmatpush2.bf16.msra.mxu0 %v3871
        %4759 = vmatprep.subr.bf16.mxu0 %v3868
        %4760 = vmatpush2.bf16.msra.mxu0 %v3867
        %4761 = vmatprep.subr.bf16.mxu0 %v3864
        %4762 = vmatpush2.bf16.msra.mxu0 %v3863
        %4763 = vmatprep.subr.bf16.mxu0 %v3860
        %4764 = vmatpush2.bf16.msra.mxu0 %v3859
        %4765 = vmatprep.subr.bf16.mxu0 %v3856
        %4766 = vmatpush2.bf16.msra.mxu0 %v3855
        %4767 = vmatprep.subr.bf16.mxu0 %v3852
        %4768 = vmatpush2.bf16.msra.mxu0 %v3851
        %4769 = vmatprep.mubr.bf16.mxu0 %v1959
        %4770 = vmatmul.mubr.bf16.gmra.mxu0 %v1958
        %v4771 = vpop.f32.mrf.mxu0
        %v4772 = vadd.f32 %v4731, %v4771
        %v4773 = vpop.f32.mrf.mxu0
        %v4774 = vadd.f32 %v4733, %v4773
        %v4775 = vpop.f32.mrf.mxu0
        %v4776 = vpop.f32.mrf.mxu0
        %4777 = vdwg.mxu0
        %v4778 = vmax.f32 %v4526, 0.0
        %v4779 = vmax.f32 %v4528, 0.0
        %v4780 = vmax.f32 %v4772, 0.0
        %v4781 = vmax.f32 %v4774, 0.0
        %v4782 = vpack.c.bf16 %v4778, %v4778
        %v4783 = vpack.c.bf16 %v4779, %v4779
        %v4784 = vpack.c.bf16 %v4780, %v4780
        %v4785 = vpack.c.bf16 %v4781, %v4781
        %v4786 = vld [vmem:[%s7] sm:$0xf]
        %v4787 = vld [vmem:[%s7 + $0x4] sm:$0xf]
        %v4788 = vld [vmem:[%s7 + $0x8] sm:$0xf]
        %v4789 = vld [vmem:[%s7 + $0xc] sm:$0xf]
        %v4790 = vld [vmem:[%s7 + $0x10] sm:$0xf]
        %v4791 = vld [vmem:[%s7 + $0x14] sm:$0xf]
        %v4792 = vld [vmem:[%s7 + $0x18] sm:$0xf]
        %v4793 = vld [vmem:[%s7 + $0x1c] sm:$0xf]
        %v4794 = vld [vmem:[%s7 + $0x20] sm:$0xf]
        %v4795 = vld [vmem:[%s7 + $0x24] sm:$0xf]
        %v4796 = vld [vmem:[%s7 + $0x28] sm:$0xf]
        %v4797 = vld [vmem:[%s7 + $0x2c] sm:$0xf]
        %v4798 = vld [vmem:[%s7 + $0x30] sm:$0xf]
        %v4799 = vld [vmem:[%s7 + $0x34] sm:$0xf]
        %v4800 = vld [vmem:[%s7 + $0x38] sm:$0xf]
        %v4801 = vld [vmem:[%s7 + $0x3c] sm:$0xf]
        %v4802 = vld [vmem:[%s7 + $0x40] sm:$0xf]
        %v4803 = vld [vmem:[%s7 + $0x44] sm:$0xf]
        %v4804 = vld [vmem:[%s7 + $0x48] sm:$0xf]
        %v4805 = vld [vmem:[%s7 + $0x4c] sm:$0xf]
        %v4806 = vld [vmem:[%s7 + $0x50] sm:$0xf]
        %v4807 = vld [vmem:[%s7 + $0x54] sm:$0xf]
        %v4808 = vld [vmem:[%s7 + $0x58] sm:$0xf]
        %v4809 = vld [vmem:[%s7 + $0x5c] sm:$0xf]
        %v4810 = vld [vmem:[%s7 + $0x60] sm:$0xf]
        %v4811 = vld [vmem:[%s7 + $0x64] sm:$0xf]
        %v4812 = vld [vmem:[%s7 + $0x68] sm:$0xf]
        %v4813 = vld [vmem:[%s7 + $0x6c] sm:$0xf]
        %v4814 = vld [vmem:[%s7 + $0x70] sm:$0xf]
        %v4815 = vld [vmem:[%s7 + $0x74] sm:$0xf]
        %v4816 = vld [vmem:[%s7 + $0x78] sm:$0xf]
        %v4817 = vld [vmem:[%s7 + $0x7c] sm:$0xf]
        %v4818 = vld [vmem:[%s7 + $0x80] sm:$0xf]
        %v4819 = vld [vmem:[%s7 + $0x84] sm:$0xf]
        %v4820 = vld [vmem:[%s7 + $0x88] sm:$0xf]
        %v4821 = vld [vmem:[%s7 + $0x8c] sm:$0xf]
        %v4822 = vld [vmem:[%s7 + $0x90] sm:$0xf]
        %v4823 = vld [vmem:[%s7 + $0x94] sm:$0xf]
        %v4824 = vld [vmem:[%s7 + $0x98] sm:$0xf]
        %v4825 = vld [vmem:[%s7 + $0x9c] sm:$0xf]
        %v4826 = vld [vmem:[%s7 + $0xa0] sm:$0xf]
        %v4827 = vld [vmem:[%s7 + $0xa4] sm:$0xf]
        %v4828 = vld [vmem:[%s7 + $0xa8] sm:$0xf]
        %v4829 = vld [vmem:[%s7 + $0xac] sm:$0xf]
        %v4830 = vld [vmem:[%s7 + $0xb0] sm:$0xf]
        %v4831 = vld [vmem:[%s7 + $0xb4] sm:$0xf]
        %v4832 = vld [vmem:[%s7 + $0xb8] sm:$0xf]
        %v4833 = vld [vmem:[%s7 + $0xbc] sm:$0xf]
        %v4834 = vld [vmem:[%s7 + $0xc0] sm:$0xf]
        %v4835 = vld [vmem:[%s7 + $0xc4] sm:$0xf]
        %v4836 = vld [vmem:[%s7 + $0xc8] sm:$0xf]
        %v4837 = vld [vmem:[%s7 + $0xcc] sm:$0xf]
        %v4838 = vld [vmem:[%s7 + $0xd0] sm:$0xf]
        %v4839 = vld [vmem:[%s7 + $0xd4] sm:$0xf]
        %v4840 = vld [vmem:[%s7 + $0xd8] sm:$0xf]
        %v4841 = vld [vmem:[%s7 + $0xdc] sm:$0xf]
        %v4842 = vld [vmem:[%s7 + $0xe0] sm:$0xf]
        %v4843 = vld [vmem:[%s7 + $0xe4] sm:$0xf]
        %v4844 = vld [vmem:[%s7 + $0xe8] sm:$0xf]
        %v4845 = vld [vmem:[%s7 + $0xec] sm:$0xf]
        %v4846 = vld [vmem:[%s7 + $0xf0] sm:$0xf]
        %v4847 = vld [vmem:[%s7 + $0xf4] sm:$0xf]
        %v4848 = vld [vmem:[%s7 + $0xf8] sm:$0xf]
        %v4849 = vld [vmem:[%s7 + $0xfc] sm:$0xf]
        %v4850 = vld [vmem:[%s8] sm:$0x1]
        %v4915 = vunpack.c.l.b16 %v4786
        %v4916 = vunpack.c.l.b16 %v4787
        %v4917 = vunpack.c.l.b16 %v4788
        %v4918 = vunpack.c.l.b16 %v4789
        %v4919 = vunpack.c.l.b16 %v4790
        %v4920 = vunpack.c.l.b16 %v4791
        %v4921 = vunpack.c.l.b16 %v4792
        %v4922 = vunpack.c.l.b16 %v4793
        %v4923 = vunpack.c.l.b16 %v4794
        %v4924 = vunpack.c.l.b16 %v4795
        %v4925 = vunpack.c.l.b16 %v4796
        %v4926 = vunpack.c.l.b16 %v4797
        %v4927 = vunpack.c.l.b16 %v4798
        %v4928 = vunpack.c.l.b16 %v4799
        %v4929 = vunpack.c.l.b16 %v4800
        %v4930 = vunpack.c.l.b16 %v4801
        %v4931 = vunpack.c.l.b16 %v4802
        %v4932 = vunpack.c.l.b16 %v4803
        %v4933 = vunpack.c.l.b16 %v4804
        %v4934 = vunpack.c.l.b16 %v4805
        %v4935 = vunpack.c.l.b16 %v4806
        %v4936 = vunpack.c.l.b16 %v4807
        %v4937 = vunpack.c.l.b16 %v4808
        %v4938 = vunpack.c.l.b16 %v4809
        %v4939 = vunpack.c.l.b16 %v4810
        %v4940 = vunpack.c.l.b16 %v4811
        %v4941 = vunpack.c.l.b16 %v4812
        %v4942 = vunpack.c.l.b16 %v4813
        %v4943 = vunpack.c.l.b16 %v4814
        %v4944 = vunpack.c.l.b16 %v4815
        %v4945 = vunpack.c.l.b16 %v4816
        %v4946 = vunpack.c.l.b16 %v4817
        %v4947 = vunpack.c.l.b16 %v4818
        %v4948 = vunpack.c.l.b16 %v4819
        %v4949 = vunpack.c.l.b16 %v4820
        %v4950 = vunpack.c.l.b16 %v4821
        %v4951 = vunpack.c.l.b16 %v4822
        %v4952 = vunpack.c.l.b16 %v4823
        %v4953 = vunpack.c.l.b16 %v4824
        %v4954 = vunpack.c.l.b16 %v4825
        %v4955 = vunpack.c.l.b16 %v4826
        %v4956 = vunpack.c.l.b16 %v4827
        %v4957 = vunpack.c.l.b16 %v4828
        %v4958 = vunpack.c.l.b16 %v4829
        %v4959 = vunpack.c.l.b16 %v4830
        %v4960 = vunpack.c.l.b16 %v4831
        %v4961 = vunpack.c.l.b16 %v4832
        %v4962 = vunpack.c.l.b16 %v4833
        %v4963 = vunpack.c.l.b16 %v4834
        %v4964 = vunpack.c.l.b16 %v4835
        %v4965 = vunpack.c.l.b16 %v4836
        %v4966 = vunpack.c.l.b16 %v4837
        %v4967 = vunpack.c.l.b16 %v4838
        %v4968 = vunpack.c.l.b16 %v4839
        %v4969 = vunpack.c.l.b16 %v4840
        %v4970 = vunpack.c.l.b16 %v4841
        %v4971 = vunpack.c.l.b16 %v4842
        %v4972 = vunpack.c.l.b16 %v4843
        %v4973 = vunpack.c.l.b16 %v4844
        %v4974 = vunpack.c.l.b16 %v4845
        %v4975 = vunpack.c.l.b16 %v4846
        %v4976 = vunpack.c.l.b16 %v4847
        %v4977 = vunpack.c.l.b16 %v4848
        %v4978 = vunpack.c.l.b16 %v4849
        %v4979 = vpack.c.b16 %v4916, %v4915
        %v4980 = vpack.c.b16 %v4918, %v4917
        %v4981 = vpack.c.b16 %v4920, %v4919
        %v4982 = vpack.c.b16 %v4922, %v4921
        %v4983 = vpack.c.b16 %v4924, %v4923
        %v4984 = vpack.c.b16 %v4926, %v4925
        %v4985 = vpack.c.b16 %v4928, %v4927
        %v4986 = vpack.c.b16 %v4930, %v4929
        %v4987 = vpack.c.b16 %v4932, %v4931
        %v4988 = vpack.c.b16 %v4934, %v4933
        %v4989 = vpack.c.b16 %v4936, %v4935
        %v4990 = vpack.c.b16 %v4938, %v4937
        %v4991 = vpack.c.b16 %v4940, %v4939
        %v4992 = vpack.c.b16 %v4942, %v4941
        %v4993 = vpack.c.b16 %v4944, %v4943
        %v4994 = vpack.c.b16 %v4946, %v4945
        %v4995 = vpack.c.b16 %v4948, %v4947
        %v4996 = vpack.c.b16 %v4950, %v4949
        %v4997 = vpack.c.b16 %v4952, %v4951
        %v4998 = vpack.c.b16 %v4954, %v4953
        %v4999 = vpack.c.b16 %v4956, %v4955
        %v5000 = vpack.c.b16 %v4958, %v4957
        %v5001 = vpack.c.b16 %v4960, %v4959
        %v5002 = vpack.c.b16 %v4962, %v4961
        %v5003 = vpack.c.b16 %v4964, %v4963
        %v5004 = vpack.c.b16 %v4966, %v4965
        %v5005 = vpack.c.b16 %v4968, %v4967
        %v5006 = vpack.c.b16 %v4970, %v4969
        %v5007 = vpack.c.b16 %v4972, %v4971
        %v5008 = vpack.c.b16 %v4974, %v4973
        %v5009 = vpack.c.b16 %v4976, %v4975
        %v5010 = vpack.c.b16 %v4978, %v4977
        %5043 = vmatprep.subr.bf16.mxu0 0
        %5044 = vmatpush1.bf16.msra.mxu0 %v4986
        %5045 = vmatprep.subr.bf16.mxu0 0
        %5046 = vmatpush1.bf16.msra.mxu0 %v4985
        %5047 = vmatprep.subr.bf16.mxu0 0
        %5048 = vmatpush1.bf16.msra.mxu0 %v4984
        %5049 = vmatprep.subr.bf16.mxu0 0
        %5050 = vmatpush1.bf16.msra.mxu0 %v4983
        %5051 = vmatprep.subr.bf16.mxu0 0
        %5052 = vmatpush1.bf16.msra.mxu0 %v4982
        %5053 = vmatprep.subr.bf16.mxu0 0
        %5054 = vmatpush1.bf16.msra.mxu0 %v4981
        %5055 = vmatprep.subr.bf16.mxu0 0
        %5056 = vmatpush1.bf16.msra.mxu0 %v4980
        %5057 = vmatprep.subr.bf16.mxu0 0
        %5058 = vmatpush1.bf16.msra.mxu0 %v4979
        %5059 = vmatprep.subr.bf16.mxu0 0
        %5060 = vmatpush2.bf16.msra.mxu0 %v4994
        %5061 = vmatprep.subr.bf16.mxu0 0
        %5062 = vmatpush2.bf16.msra.mxu0 %v4993
        %5063 = vmatprep.subr.bf16.mxu0 0
        %5064 = vmatpush2.bf16.msra.mxu0 %v4992
        %5065 = vmatprep.subr.bf16.mxu0 0
        %5066 = vmatpush2.bf16.msra.mxu0 %v4991
        %5067 = vmatprep.subr.bf16.mxu0 0
        %5068 = vmatpush2.bf16.msra.mxu0 %v4990
        %5069 = vmatprep.subr.bf16.mxu0 0
        %5070 = vmatpush2.bf16.msra.mxu0 %v4989
        %5071 = vmatprep.subr.bf16.mxu0 0
        %5072 = vmatpush2.bf16.msra.mxu0 %v4988
        %5073 = vmatprep.subr.bf16.mxu0 0
        %5074 = vmatpush2.bf16.msra.mxu0 %v4987
        %5075 = vmatprep.mubr.bf16.mxu0 %v4783
        %5076 = vmatmul.mubr.bf16.gmra.mxu0 %v4782
        %v5077 = vpop.f32.mrf.mxu0
        %v5078 = vadd.f32 %v4850, %v5077
        %v5079 = vpop.f32.mrf.mxu0
        %v5080 = vpop.f32.mrf.mxu0
        %v5081 = vpop.f32.mrf.mxu0
        %5082 = vdwg.mxu0
        %5083 = vmatprep.subr.bf16.mxu0 0
        %5084 = vmatpush1.bf16.msra.mxu0 %v5002
        %5085 = vmatprep.subr.bf16.mxu0 0
        %5086 = vmatpush1.bf16.msra.mxu0 %v5001
        %5087 = vmatprep.subr.bf16.mxu0 0
        %5088 = vmatpush1.bf16.msra.mxu0 %v5000
        %5089 = vmatprep.subr.bf16.mxu0 0
        %5090 = vmatpush1.bf16.msra.mxu0 %v4999
        %5091 = vmatprep.subr.bf16.mxu0 0
        %5092 = vmatpush1.bf16.msra.mxu0 %v4998
        %5093 = vmatprep.subr.bf16.mxu0 0
        %5094 = vmatpush1.bf16.msra.mxu0 %v4997
        %5095 = vmatprep.subr.bf16.mxu0 0
        %5096 = vmatpush1.bf16.msra.mxu0 %v4996
        %5097 = vmatprep.subr.bf16.mxu0 0
        %5098 = vmatpush1.bf16.msra.mxu0 %v4995
        %5099 = vmatprep.subr.bf16.mxu0 0
        %5100 = vmatpush2.bf16.msra.mxu0 %v5010
        %5101 = vmatprep.subr.bf16.mxu0 0
        %5102 = vmatpush2.bf16.msra.mxu0 %v5009
        %5103 = vmatprep.subr.bf16.mxu0 0
        %5104 = vmatpush2.bf16.msra.mxu0 %v5008
        %5105 = vmatprep.subr.bf16.mxu0 0
        %5106 = vmatpush2.bf16.msra.mxu0 %v5007
        %5107 = vmatprep.subr.bf16.mxu0 0
        %5108 = vmatpush2.bf16.msra.mxu0 %v5006
        %5109 = vmatprep.subr.bf16.mxu0 0
        %5110 = vmatpush2.bf16.msra.mxu0 %v5005
        %5111 = vmatprep.subr.bf16.mxu0 0
        %5112 = vmatpush2.bf16.msra.mxu0 %v5004
        %5113 = vmatprep.subr.bf16.mxu0 0
        %5114 = vmatpush2.bf16.msra.mxu0 %v5003
        %5115 = vmatprep.mubr.bf16.mxu0 %v4785
        %5116 = vmatmul.mubr.bf16.gmra.mxu0 %v4784
        %v5117 = vpop.f32.mrf.mxu0
        %v5118 = vadd.f32 %v5078, %v5117
        %v5119 = vpop.f32.mrf.mxu0
        %v5120 = vpop.f32.mrf.mxu0
        %v5121 = vpop.f32.mrf.mxu0
        %5122 = vdwg.mxu0
        %5123 = vst [vmem:[%s356] sm:$0x1] %v5118
      $region64: #{deepfake_detector_forward.1} parent=55 // pred_fallthru
        _
      %p5124 = scmp.lt.s32.totalorder %s24, 1
      %s5125 = scalar_select %p5124, %s24, 1
      %s5126 = scalar_lea.vmem %s9, %s5125
      // Predicated region
      $region65: #{deepfake_detector_forward.1} parent=55 // pred_check
        %p5127 = pneg %p246
      $region66: #{deepfake_detector_forward.1} parent=55 // pred_check_branch
        %5129 = sbr.rel (%p5127) target = $region68
      $region67: #{deepfake_detector_forward.1} parent=55 // pred_region
        _
      $region68: #{deepfake_detector_forward.1} parent=55 // pred_fallthru
        _
    $region56: #{deepfake_detector_forward.1} parent=5 // pred_fallthru
      _
    %p5130 = scmp.le.s32.totalorder 2, %s15
    // Predicated region
    $region69: #{deepfake_detector_forward.1} parent=5 // pred_check
      %p5131 = pneg %p5130
    $region70: #{deepfake_detector_forward.1} parent=5 // pred_check_branch
      %5133 = sbr.rel (%p5131) target = $region72
    $region71: #{deepfake_detector_forward.1} parent=5 // pred_region
      %s5134 = ssub.s32 %s15, 2
      // Predicated region
      $region73: #{deepfake_detector_forward.1} parent=71 // pred_check
        %p5135 = pneg %p252
      $region74: #{deepfake_detector_forward.1} parent=71 // pred_check_branch
        %5137 = sbr.rel (%p5135) target = $region76
      $region75: #{deepfake_detector_forward.1} parent=71 // pred_region
        %p5138 = scmp.lt.s32.totalorder %s26, 1
        %s5139 = scalar_select %p5138, %s26, 1
        %s5140 = scalar_lea.vmem %s9, %s5139
      $region76: #{deepfake_detector_forward.1} parent=71 // pred_fallthru
        _
    $region72: #{deepfake_detector_forward.1} parent=5 // pred_fallthru
      _
  $region6: #{deepfake_detector_forward.1} parent=0 // loop_footer
    %s19 = sadd.s32 1, %s15
  $region7: #{deepfake_detector_forward.1} parent=0 // loop_footer_branch
    %14 = sbr.rel target = $region3
  $region8: #{deepfake_detector_forward.1} parent=0 // loop_exit
    _

</llo_original>
